<compile_context>
chip_gen: v7x
topology: tpu7x:2x2x1
jax: 0.10.0
libtpu: 0.0.40
codegen_flags: <defaults>
</compile_context>

<pallas_src>
import functools

import numpy as np

import jax
import jax.numpy as jnp
from jax import lax
from jax.experimental import pallas as pl
from jax.experimental.pallas import tpu as pltpu


# --------------------------------------------------------------------------- #
# Fused Pallas kernel: LSTM -> GRU -> pooling -> output linear
# --------------------------------------------------------------------------- #
def _lstm_gru_kernel(
    emb_ref,                                            # (S*B, E) time-major
    wxl_f_ref, wxl_b_ref, bl_f_ref, bl_b_ref,           # LSTM input proj (E,4H)/(1,4H)
    whl_ref,                                            # LSTM hidden proj, block-diag (2H, 8H)
    wxg_f_ref, wxg_b_ref, bxg_f_ref, bxg_b_ref,         # GRU input proj (2H,3H)/(1,3H)
    whg_ref, bhg_ref,                                   # GRU hidden proj block-diag (2H,6H)/(1,6H)
    w_pool_ref, w_hn_a_ref, w_hn_b_ref, b_out_ref,      # fused output linear
    out_ref,                                            # (B, O)
    xg_f_ref, xg_b_ref,                                 # scratch (S*B, 4H)
    lstm_f_ref, lstm_b_ref,                             # scratch (S*B, H)
    gi_f_ref, gi_b_ref,                                 # scratch (S*B, 3H)
    *, S, B, H,
):
    f32 = jnp.float32
    H3, H4 = 3 * H, 4 * H
    unroll = True if S <= 16 else 2   # short demo loops fully unrolled for LLO

    # ---------------- stage 0: hoisted LSTM input projections ---------------- #
    # One big (S*B, E) @ (E, 4H) matmul per direction; biases folded in once.
    emb = emb_ref[...]
    xg_f_ref[...] = (
        jnp.dot(emb, wxl_f_ref[...], preferred_element_type=f32) + bl_f_ref[...]
    )
    xg_b_ref[...] = (
        jnp.dot(emb, wxl_b_ref[...], preferred_element_type=f32) + bl_b_ref[...]
    )

    # ---------------- stage 1: fused bidirectional LSTM recurrence ----------- #
    whl = whl_ref[...]                                  # (2H, 8H), hoisted read

    def lstm_cell(g, c):                                # g: (B, 4H), torch order i,f,g,o
        i_g = jax.nn.sigmoid(g[:, 0 * H:1 * H])
        f_g = jax.nn.sigmoid(g[:, 1 * H:2 * H])
        g_g = jnp.tanh(g[:, 2 * H:3 * H])
        o_g = jax.nn.sigmoid(g[:, 3 * H:4 * H])
        c = f_g * c + i_g * g_g
        return o_g * jnp.tanh(c), c

    def lstm_body(i, carry):
        h_f, c_f, h_b, c_b = carry
        t_f = i
        t_b = S - 1 - i
        # one recurrent matmul serves both directions (block-diagonal Wh)
        hh = jnp.dot(jnp.concatenate([h_f, h_b], axis=1), whl,
                     preferred_element_type=f32)        # (B, 8H)
        g_f = xg_f_ref[pl.ds(t_f * B, B), :] + hh[:, :H4]
        g_b = xg_b_ref[pl.ds(t_b * B, B), :] + hh[:, H4:]
        h_f, c_f = lstm_cell(g_f, c_f)
        h_b, c_b = lstm_cell(g_b, c_b)
        lstm_f_ref[pl.ds(t_f * B, B), :] = h_f
        lstm_b_ref[pl.ds(t_b * B, B), :] = h_b
        return h_f, c_f, h_b, c_b

    zero = jnp.zeros((B, H), f32)
    lax.fori_loop(0, S, lstm_body, (zero, zero, zero, zero), unroll=unroll)

    # ---------------- stage 2: hoisted GRU input projections ----------------- #
    lstm_cat = jnp.concatenate([lstm_f_ref[...], lstm_b_ref[...]], axis=1)  # (S*B, 2H)
    gi_f_ref[...] = (
        jnp.dot(lstm_cat, wxg_f_ref[...], preferred_element_type=f32) + bxg_f_ref[...]
    )
    gi_b_ref[...] = (
        jnp.dot(lstm_cat, wxg_b_ref[...], preferred_element_type=f32) + bxg_b_ref[...]
    )

    # ------------- stage 3: fused bidirectional GRU + time pooling ----------- #
    whg = whg_ref[...]                                  # (2H, 6H)
    bhg = jnp.broadcast_to(bhg_ref[...], (B, 6 * H))    # broadcast hoisted out of loop

    def gru_cell(gi, gh, h):                            # torch order r, z, n
        r = jax.nn.sigmoid(gi[:, 0 * H:1 * H] + gh[:, 0 * H:1 * H])
        z = jax.nn.sigmoid(gi[:, 1 * H:2 * H] + gh[:, 1 * H:2 * H])
        n = jnp.tanh(gi[:, 2 * H:3 * H] + r * gh[:, 2 * H:3 * H])
        return (1.0 - z) * n + z * h

    def gru_body(i, carry):
        h_f, h_b, s_f, s_b, m_f, m_b = carry
        t_f = i
        t_b = S - 1 - i
        gh = jnp.dot(jnp.concatenate([h_f, h_b], axis=1), whg,
                     preferred_element_type=f32) + bhg  # (B, 6H)
        h_f = gru_cell(gi_f_ref[pl.ds(t_f * B, B), :], gh[:, :H3], h_f)
        h_b = gru_cell(gi_b_ref[pl.ds(t_b * B, B), :], gh[:, H3:], h_b)
        return (h_f, h_b, s_f + h_f, s_b + h_b,
                jnp.maximum(m_f, h_f), jnp.maximum(m_b, h_b))

    neg = jnp.full((B, H), -jnp.inf, f32)
    h_f, h_b, s_f, s_b, m_f, m_b = lax.fori_loop(
        0, S, gru_body, (zero, zero, zero, zero, neg, neg), unroll=unroll)

    # ------------- stage 4: fused pooling + output linear epilogue ----------- #
    inv_s = 1.0 / S
    pooled = jnp.concatenate([s_f * inv_s, s_b * inv_s, m_f, m_b], axis=1)  # (B, 4H)
    out = jnp.dot(pooled, w_pool_ref[...], preferred_element_type=f32) + b_out_ref[...]

    # hn.view(-1, 2H) @ W_hn without an in-kernel lane reshape:
    # row k of the torch view is [hn_flat[2k] | hn_flat[2k+1]] with
    # hn_flat = [h_f; h_b] (2B, H), so the contribution is
    #   select_even @ (hn_flat @ W_hn[:H]) + select_odd @ (hn_flat @ W_hn[H:]).
    hn_flat = jnp.concatenate([h_f, h_b], axis=0)                           # (2B, H)
    part_a = jnp.dot(hn_flat, w_hn_a_ref[...], preferred_element_type=f32)  # (2B, O)
    part_b = jnp.dot(hn_flat, w_hn_b_ref[...], preferred_element_type=f32)  # (2B, O)
    rows = lax.broadcasted_iota(jnp.int32, (B, 2 * B), 0)
    cols = lax.broadcasted_iota(jnp.int32, (B, 2 * B), 1)
    sel_even = jnp.where(cols == 2 * rows, 1.0, 0.0).astype(f32)
    sel_odd = jnp.where(cols == 2 * rows + 1, 1.0, 0.0).astype(f32)
    out = (out
           + jnp.dot(sel_even, part_a, preferred_element_type=f32)
           + jnp.dot(sel_odd, part_b, preferred_element_type=f32))
    out_ref[...] = out


# --------------------------------------------------------------------------- #
# Wrapper
# --------------------------------------------------------------------------- #
def lstm_gru_forward(x_tokens, features, params):
    del features  # unused by the reference forward() (matches PyTorch code)
    emb_mat = params["embedding"]
    B, S = x_tokens.shape
    H = params["lstm_f_wh"].shape[0]
    O = params["w_cat"].shape[1]
    f32 = jnp.float32

    # Embedding gather directly in time-major (S*B, E) layout; no transpose of
    # the (much larger) embedded activations.  SpatialDropout == identity.
    tok_tm = jnp.reshape(jnp.transpose(x_tokens), (-1,))      # (S*B,)
    emb2d = jnp.take(emb_mat, tok_tm, axis=0)                 # (S*B, E)

    # --- pack weights for the fused kernel (tiny tensors, packed once by XLA) ---
    zl = jnp.zeros((H, 4 * H), f32)
    whl_bd = jnp.concatenate([
        jnp.concatenate([params["lstm_f_wh"], zl], axis=1),
        jnp.concatenate([zl, params["lstm_b_wh"]], axis=1)], axis=0)        # (2H, 8H)
    zg = jnp.zeros((H, 3 * H), f32)
    whg_bd = jnp.concatenate([
        jnp.concatenate([params["gru_f_wh"], zg], axis=1),
        jnp.concatenate([zg, params["gru_b_wh"]], axis=1)], axis=0)         # (2H, 6H)
    wxg_f = jnp.concatenate([params["gru_f_wxa"], params["gru_f_wxb"]], axis=0)  # (2H, 3H)
    wxg_b = jnp.concatenate([params["gru_b_wxa"], params["gru_b_wxb"]], axis=0)  # (2H, 3H)
    bhg = jnp.concatenate([params["gru_f_bh"], params["gru_b_bh"]], axis=1)      # (1, 6H)
    w_cat = params["w_cat"]                                                      # (6H, O)
    w_pool = jnp.concatenate([w_cat[:2 * H], w_cat[4 * H:]], axis=0)             # (4H, O)
    w_hn_a = w_cat[2 * H:3 * H]                                                  # (H, O)
    w_hn_b = w_cat[3 * H:4 * H]                                                  # (H, O)

    inputs = (
        emb2d,
        params["lstm_f_wx"], params["lstm_b_wx"], params["lstm_f_b"], params["lstm_b_b"],
        whl_bd,
        wxg_f, wxg_b, params["gru_f_bx"], params["gru_b_bx"],
        whg_bd, bhg,
        w_pool, w_hn_a, w_hn_b, params["b_cat"],
    )

    scratch = [
        pltpu.VMEM((S * B, 4 * H), f32),   # hoisted LSTM gates, fwd
        pltpu.VMEM((S * B, 4 * H), f32),   # hoisted LSTM gates, bwd
        pltpu.VMEM((S * B, H), f32),       # LSTM outputs, fwd
        pltpu.VMEM((S * B, H), f32),       # LSTM outputs, bwd
        pltpu.VMEM((S * B, 3 * H), f32),   # hoisted GRU gates, fwd
        pltpu.VMEM((S * B, 3 * H), f32),   # hoisted GRU gates, bwd
    ]

    # Explicit VMEM budget with headroom (capped at v7x's 64 MiB physical).
    in_bytes = sum(int(np.prod(a.shape)) * 4 for a in inputs)
    scratch_bytes = 16 * S * B * H * 4
    vmem_limit = int(min(64 * 1024 * 1024,
                         max(8 * 1024 * 1024,
                             2 * (in_bytes + scratch_bytes) + (1 << 20))))

    kernel = functools.partial(_lstm_gru_kernel, S=S, B=B, H=H)
    vmem = pl.BlockSpec(memory_space=pltpu.MemorySpace.VMEM)
    out = pl.pallas_call(
        kernel,
        out_shape=jax.ShapeDtypeStruct((B, O), f32),
        in_specs=[vmem] * len(inputs),
        out_specs=vmem,
        scratch_shapes=scratch,
        compiler_params=pltpu.CompilerParams(vmem_limit_bytes=vmem_limit),
    )(*inputs)
    return out                                               # (B, 1 + num_aux)


# --------------------------------------------------------------------------- #
# Deterministic parameter construction (PyTorch layouts, converted for kernel)
# --------------------------------------------------------------------------- #
def init_params(key, *, max_features, embed_size, lstm_units, features_size,
                num_aux_targets):
    H, E = lstm_units, embed_size
    dense_hidden_units = 6 * H - features_size  # forward implies linear in_dim == 6H
    keys = iter(jax.random.split(key, 24))

    def u(shape, scale):
        return jax.random.uniform(next(keys), shape, jnp.float32, -scale, scale)

    sH = 1.0 / (H ** 0.5)
    p = {"embedding": jax.random.normal(next(keys), (max_features, E), jnp.float32) * 0.1}

    # LSTM (torch: weight_ih (4H,E), weight_hh (4H,H), gate order i,f,g,o)
    for name in ("lstm_f", "lstm_b"):
        w_ih = u((4 * H, E), sH)
        w_hh = u((4 * H, H), sH)
        b_ih = u((4 * H,), sH)
        b_hh = u((4 * H,), sH)
        p[f"{name}_wx"] = w_ih.T                     # (E, 4H)
        p[f"{name}_wh"] = w_hh.T                     # (H, 4H)
        p[f"{name}_b"] = (b_ih + b_hh)[None, :]      # (1, 4H)

    # GRU (torch: weight_ih (3H,2H), weight_hh (3H,H), gate order r,z,n)
    for name in ("gru_f", "gru_b"):
        w_ih = u((3 * H, 2 * H), sH)
        w_hh = u((3 * H, H), sH)
        b_ih = u((3 * H,), sH)
        b_hh = u((3 * H,), sH)
        p[f"{name}_wxa"] = w_ih[:, :H].T             # (H, 3H) — acts on fwd-LSTM half
        p[f"{name}_wxb"] = w_ih[:, H:].T             # (H, 3H) — acts on bwd-LSTM half
        p[f"{name}_bx"] = b_ih[None, :]              # (1, 3H)
        p[f"{name}_wh"] = w_hh.T                     # (H, 3H)
        p[f"{name}_bh"] = b_hh[None, :]              # (1, 3H)

    d_in = dense_hidden_units + features_size        # == 6 * H
    sL = 1.0 / (d_in ** 0.5)
    w_out = u((1, d_in), sL)
    b_out = u((1,), sL)
    w_aux = u((num_aux_targets, d_in), sL)
    b_aux = u((num_aux_targets,), sL)
    p["w_cat"] = jnp.concatenate([w_out, w_aux], axis=0).T   # (6H, 1+num_aux)
    p["b_cat"] = jnp.concatenate([b_out, b_aux])[None, :]    # (1, 1+num_aux)
    return p


# --------------------------------------------------------------------------- #
# Pure-JAX reference (same math, no Pallas) for validation
# --------------------------------------------------------------------------- #
def _reference(x_tokens, params):
    emb = jnp.take(params["embedding"], x_tokens, axis=0)    # (B, S, E)
    B, S, _ = emb.shape
    H = params["lstm_f_wh"].shape[0]

    def lstm_dir(wx, wh, b, reverse):
        h = jnp.zeros((B, H)); c = jnp.zeros((B, H))
        outs = [None] * S
        order = range(S - 1, -1, -1) if reverse else range(S)
        for t in order:
            g = emb[:, t, :] @ wx + h @ wh + b
            i_g = jax.nn.sigmoid(g[:, :H]); f_g = jax.nn.sigmoid(g[:, H:2 * H])
            g_g = jnp.tanh(g[:, 2 * H:3 * H]); o_g = jax.nn.sigmoid(g[:, 3 * H:])
            c = f_g * c + i_g * g_g
            h = o_g * jnp.tanh(c)
            outs[t] = h
        return outs

    lf = lstm_dir(params["lstm_f_wx"], params["lstm_f_wh"], params["lstm_f_b"], False)
    lb = lstm_dir(params["lstm_b_wx"], params["lstm_b_wh"], params["lstm_b_b"], True)

    def gru_dir(wxa, wxb, bx, wh, bh, reverse):
        h = jnp.zeros((B, H))
        outs = [None] * S
        order = range(S - 1, -1, -1) if reverse else range(S)
        for t in order:
            gi = lf[t] @ wxa + lb[t] @ wxb + bx
            gh = h @ wh + bh
            r = jax.nn.sigmoid(gi[:, :H] + gh[:, :H])
            z = jax.nn.sigmoid(gi[:, H:2 * H] + gh[:, H:2 * H])
            n = jnp.tanh(gi[:, 2 * H:] + r * gh[:, 2 * H:])
            h = (1.0 - z) * n + z * h
            outs[t] = h
        return outs, h

    gf, hf = gru_dir(params["gru_f_wxa"], params["gru_f_wxb"], params["gru_f_bx"],
                     params["gru_f_wh"], params["gru_f_bh"], False)
    gb, hb = gru_dir(params["gru_b_wxa"], params["gru_b_wxb"], params["gru_b_bx"],
                     params["gru_b_wh"], params["gru_b_bh"], True)
    h_gru = jnp.stack(
        [jnp.concatenate([gf[t], gb[t]], axis=-1) for t in range(S)], axis=1)  # (B,S,2H)
    avg = h_gru.mean(axis=1)
    mx = h_gru.max(axis=1)
    hn = jnp.stack([hf, hb], axis=0).reshape(-1, 2 * H)      # same .view semantics
    h_conc = jnp.concatenate([avg, hn, mx], axis=1)
    return h_conc @ params["w_cat"] + params["b_cat"]


# --------------------------------------------------------------------------- #
if __name__ == "__main__":
    B, S = 2, 8
    cfg = dict(max_features=64, embed_size=32, lstm_units=32,
               features_size=8, num_aux_targets=6)

    key = jax.random.PRNGKey(0)
    k_tok, k_feat, k_par = jax.random.split(key, 3)
    x_tokens = jax.random.randint(k_tok, (B, S), 0, cfg["max_features"], dtype=jnp.int32)
    features = jax.random.normal(k_feat, (B, cfg["features_size"]), jnp.float32)
    params = init_params(k_par, **cfg)

    out = jax.jit(lstm_gru_forward)(x_tokens, features, params)
    out = jax.block_until_ready(out)

    assert out.shape == (B, 1 + cfg["num_aux_targets"])
    ref = _reference(x_tokens, params)
    np.testing.assert_allclose(np.asarray(out), np.asarray(ref), rtol=1e-2, atol=1e-2)

    print("KERNEL_OK")
</pallas_src>

<mosaic_0001>
module attributes {stable_mosaic.version = 11 : i64} {
  func.func @_lstm_gru_kernel(%arg0: memref<16x32xf32, #tpu.memory_space<vmem>>, %arg1: memref<32x128xf32, #tpu.memory_space<vmem>>, %arg2: memref<32x128xf32, #tpu.memory_space<vmem>>, %arg3: memref<1x128xf32, #tpu.memory_space<vmem>>, %arg4: memref<1x128xf32, #tpu.memory_space<vmem>>, %arg5: memref<64x256xf32, #tpu.memory_space<vmem>>, %arg6: memref<64x96xf32, #tpu.memory_space<vmem>>, %arg7: memref<64x96xf32, #tpu.memory_space<vmem>>, %arg8: memref<1x96xf32, #tpu.memory_space<vmem>>, %arg9: memref<1x96xf32, #tpu.memory_space<vmem>>, %arg10: memref<64x192xf32, #tpu.memory_space<vmem>>, %arg11: memref<1x192xf32, #tpu.memory_space<vmem>>, %arg12: memref<128x7xf32, #tpu.memory_space<vmem>>, %arg13: memref<32x7xf32, #tpu.memory_space<vmem>>, %arg14: memref<32x7xf32, #tpu.memory_space<vmem>>, %arg15: memref<1x7xf32, #tpu.memory_space<vmem>>, %arg16: memref<2x7xf32, #tpu.memory_space<vmem>>, %arg17: memref<16x128xf32, #tpu.memory_space<vmem>>, %arg18: memref<16x128xf32, #tpu.memory_space<vmem>>, %arg19: memref<16x32xf32, #tpu.memory_space<vmem>>, %arg20: memref<16x32xf32, #tpu.memory_space<vmem>>, %arg21: memref<16x96xf32, #tpu.memory_space<vmem>>, %arg22: memref<16x96xf32, #tpu.memory_space<vmem>>) attributes {dimension_semantics = [], scalar_prefetch = 0 : i64, scratch_operands = 6 : i64, tpu.core_type = #tpu.core_type<tc>} {
    %c0 = arith.constant 0 : index
    %c0_0 = arith.constant 0 : index
    %0 = vector.load %arg0[%c0, %c0_0] : memref<16x32xf32, #tpu.memory_space<vmem>>, vector<16x32xf32>
    %c0_1 = arith.constant 0 : index
    %c0_2 = arith.constant 0 : index
    %1 = vector.load %arg1[%c0_1, %c0_2] : memref<32x128xf32, #tpu.memory_space<vmem>>, vector<32x128xf32>
    %cst = arith.constant dense<0.000000e+00> : vector<16x128xf32>
    %2 = tpu.matmul %0, %1, %cst {dimension_numbers = #tpu.dot_dimension_numbers<[1], [0], [0], [1], [0, 0, 1, 1], [], []>} : vector<16x32xf32>, vector<32x128xf32>, vector<16x128xf32> -> vector<16x128xf32>
    %c0_3 = arith.constant 0 : index
    %c0_4 = arith.constant 0 : index
    %3 = vector.load %arg3[%c0_3, %c0_4] : memref<1x128xf32, #tpu.memory_space<vmem>>, vector<1x128xf32>
    %4 = vector.broadcast %3 : vector<1x128xf32> to vector<16x128xf32>
    %5 = arith.addf %2, %4 : vector<16x128xf32>
    %c0_5 = arith.constant 0 : index
    %c0_6 = arith.constant 0 : index
    %6 = vector.load %arg17[%c0_5, %c0_6] : memref<16x128xf32, #tpu.memory_space<vmem>>, vector<16x128xf32>
    tpu.vector_store %arg17[%c0_5, %c0_6], %5 {strides = array<i32>} : memref<16x128xf32, #tpu.memory_space<vmem>>, vector<16x128xf32>,
    %c0_7 = arith.constant 0 : index
    %c0_8 = arith.constant 0 : index
    %7 = vector.load %arg2[%c0_7, %c0_8] : memref<32x128xf32, #tpu.memory_space<vmem>>, vector<32x128xf32>
    %cst_9 = arith.constant dense<0.000000e+00> : vector<16x128xf32>
    %8 = tpu.matmul %0, %7, %cst_9 {dimension_numbers = #tpu.dot_dimension_numbers<[1], [0], [0], [1], [0, 0, 1, 1], [], []>} : vector<16x32xf32>, vector<32x128xf32>, vector<16x128xf32> -> vector<16x128xf32>
    %c0_10 = arith.constant 0 : index
    %c0_11 = arith.constant 0 : index
    %9 = vector.load %arg4[%c0_10, %c0_11] : memref<1x128xf32, #tpu.memory_space<vmem>>, vector<1x128xf32>
    %10 = vector.broadcast %9 : vector<1x128xf32> to vector<16x128xf32>
    %11 = arith.addf %8, %10 : vector<16x128xf32>
    %c0_12 = arith.constant 0 : index
    %c0_13 = arith.constant 0 : index
    %12 = vector.load %arg18[%c0_12, %c0_13] : memref<16x128xf32, #tpu.memory_space<vmem>>, vector<16x128xf32>
    tpu.vector_store %arg18[%c0_12, %c0_13], %11 {strides = array<i32>} : memref<16x128xf32, #tpu.memory_space<vmem>>, vector<16x128xf32>,
    %c0_14 = arith.constant 0 : index
    %c0_15 = arith.constant 0 : index
    %13 = vector.load %arg5[%c0_14, %c0_15] : memref<64x256xf32, #tpu.memory_space<vmem>>, vector<64x256xf32>
    %cst_16 = arith.constant 0.000000e+00 : f32
    %14 = vector.broadcast %cst_16 : f32 to vector<2x32xf32>
    %c0_i32 = arith.constant 0 : i32
    %c7_i32 = arith.constant 7 : i32
    %15 = arith.subi %c7_i32, %c0_i32 : i32
    %16 = tpu.concatenate %14, %14 in 1 : vector<2x32xf32>, vector<2x32xf32> -> vector<2x64xf32>
    %cst_17 = arith.constant dense<0.000000e+00> : vector<2x256xf32>
    %17 = tpu.matmul %16, %13, %cst_17 {dimension_numbers = #tpu.dot_dimension_numbers<[1], [0], [0], [1], [0, 0, 1, 1], [], []>} : vector<2x64xf32>, vector<64x256xf32>, vector<2x256xf32> -> vector<2x256xf32>
    %c2_i32 = arith.constant 2 : i32
    %18 = arith.muli %c0_i32, %c2_i32 : i32
    %19 = arith.index_cast %18 : i32 to index
    %c0_18 = arith.constant 0 : index
    %20 = vector.load %arg17[%19, %c0_18] : memref<16x128xf32, #tpu.memory_space<vmem>>, vector<2x128xf32>
    %21 = vector.extract_strided_slice %17 {offsets = [0, 0], sizes = [2, 128], strides = [1, 1]} : vector<2x256xf32> to vector<2x128xf32>
    %22 = arith.addf %20, %21 : vector<2x128xf32>
    %c2_i32_19 = arith.constant 2 : i32
    %23 = arith.muli %15, %c2_i32_19 : i32
    %24 = arith.index_cast %23 : i32 to index
    %c0_20 = arith.constant 0 : index
    %25 = vector.load %arg18[%24, %c0_20] : memref<16x128xf32, #tpu.memory_space<vmem>>, vector<2x128xf32>
    %26 = vector.extract_strided_slice %17 {offsets = [0, 128], sizes = [2, 128], strides = [1, 1]} : vector<2x256xf32> to vector<2x128xf32>
    %27 = arith.addf %25, %26 : vector<2x128xf32>
    %28 = vector.extract_strided_slice %22 {offsets = [0, 0], sizes = [2, 32], strides = [1, 1]} : vector<2x128xf32> to vector<2x32xf32>
    %29 = arith.negf %28 : vector<2x32xf32>
    %30 = math.exp %29 : vector<2x32xf32>
    %cst_21 = arith.constant 1.000000e+00 : f32
    %31 = vector.broadcast %cst_21 : f32 to vector<2x32xf32>
    %32 = arith.addf %31, %30 : vector<2x32xf32>
    %33 = arith.divf %31, %32 : vector<2x32xf32>
    %34 = vector.extract_strided_slice %22 {offsets = [0, 32], sizes = [2, 32], strides = [1, 1]} : vector<2x128xf32> to vector<2x32xf32>
    %35 = arith.negf %34 : vector<2x32xf32>
    %36 = math.exp %35 : vector<2x32xf32>
    %cst_22 = arith.constant 1.000000e+00 : f32
    %37 = vector.broadcast %cst_22 : f32 to vector<2x32xf32>
    %38 = arith.addf %37, %36 : vector<2x32xf32>
    %39 = arith.divf %37, %38 : vector<2x32xf32>
    %40 = vector.extract_strided_slice %22 {offsets = [0, 64], sizes = [2, 32], strides = [1, 1]} : vector<2x128xf32> to vector<2x32xf32>
    %41 = math.tanh %40 : vector<2x32xf32>
    %42 = vector.extract_strided_slice %22 {offsets = [0, 96], sizes = [2, 32], strides = [1, 1]} : vector<2x128xf32> to vector<2x32xf32>
    %43 = arith.negf %42 : vector<2x32xf32>
    %44 = math.exp %43 : vector<2x32xf32>
    %cst_23 = arith.constant 1.000000e+00 : f32
    %45 = vector.broadcast %cst_23 : f32 to vector<2x32xf32>
    %46 = arith.addf %45, %44 : vector<2x32xf32>
    %47 = arith.divf %45, %46 : vector<2x32xf32>
    %48 = arith.mulf %39, %14 : vector<2x32xf32>
    %49 = arith.mulf %33, %41 : vector<2x32xf32>
    %50 = arith.addf %48, %49 : vector<2x32xf32>
    %51 = math.tanh %50 : vector<2x32xf32>
    %52 = arith.mulf %47, %51 : vector<2x32xf32>
    %53 = vector.extract_strided_slice %27 {offsets = [0, 0], sizes = [2, 32], strides = [1, 1]} : vector<2x128xf32> to vector<2x32xf32>
    %54 = arith.negf %53 : vector<2x32xf32>
    %55 = math.exp %54 : vector<2x32xf32>
    %cst_24 = arith.constant 1.000000e+00 : f32
    %56 = vector.broadcast %cst_24 : f32 to vector<2x32xf32>
    %57 = arith.addf %56, %55 : vector<2x32xf32>
    %58 = arith.divf %56, %57 : vector<2x32xf32>
    %59 = vector.extract_strided_slice %27 {offsets = [0, 32], sizes = [2, 32], strides = [1, 1]} : vector<2x128xf32> to vector<2x32xf32>
    %60 = arith.negf %59 : vector<2x32xf32>
    %61 = math.exp %60 : vector<2x32xf32>
    %cst_25 = arith.constant 1.000000e+00 : f32
    %62 = vector.broadcast %cst_25 : f32 to vector<2x32xf32>
    %63 = arith.addf %62, %61 : vector<2x32xf32>
    %64 = arith.divf %62, %63 : vector<2x32xf32>
    %65 = vector.extract_strided_slice %27 {offsets = [0, 64], sizes = [2, 32], strides = [1, 1]} : vector<2x128xf32> to vector<2x32xf32>
    %66 = math.tanh %65 : vector<2x32xf32>
    %67 = vector.extract_strided_slice %27 {offsets = [0, 96], sizes = [2, 32], strides = [1, 1]} : vector<2x128xf32> to vector<2x32xf32>
    %68 = arith.negf %67 : vector<2x32xf32>
    %69 = math.exp %68 : vector<2x32xf32>
    %cst_26 = arith.constant 1.000000e+00 : f32
    %70 = vector.broadcast %cst_26 : f32 to vector<2x32xf32>
    %71 = arith.addf %70, %69 : vector<2x32xf32>
    %72 = arith.divf %70, %71 : vector<2x32xf32>
    %73 = arith.mulf %64, %14 : vector<2x32xf32>
    %74 = arith.mulf %58, %66 : vector<2x32xf32>
    %75 = arith.addf %73, %74 : vector<2x32xf32>
    %76 = math.tanh %75 : vector<2x32xf32>
    %77 = arith.mulf %72, %76 : vector<2x32xf32>
    %c2_i32_27 = arith.constant 2 : i32
    %78 = arith.muli %c0_i32, %c2_i32_27 : i32
    %79 = arith.index_cast %78 : i32 to index
    %c0_28 = arith.constant 0 : index
    %80 = vector.load %arg19[%79, %c0_28] : memref<16x32xf32, #tpu.memory_space<vmem>>, vector<2x32xf32>
    tpu.vector_store %arg19[%79, %c0_28], %52 {strides = array<i32>} : memref<16x32xf32, #tpu.memory_space<vmem>>, vector<2x32xf32>,
    %c2_i32_29 = arith.constant 2 : i32
    %81 = arith.muli %15, %c2_i32_29 : i32
    %82 = arith.index_cast %81 : i32 to index
    %c0_30 = arith.constant 0 : index
    %83 = vector.load %arg20[%82, %c0_30] : memref<16x32xf32, #tpu.memory_space<vmem>>, vector<2x32xf32>
    tpu.vector_store %arg20[%82, %c0_30], %77 {strides = array<i32>} : memref<16x32xf32, #tpu.memory_space<vmem>>, vector<2x32xf32>,
    %c1_i32 = arith.constant 1 : i32
    %c7_i32_31 = arith.constant 7 : i32
    %84 = arith.subi %c7_i32_31, %c1_i32 : i32
    %85 = tpu.concatenate %52, %77 in 1 : vector<2x32xf32>, vector<2x32xf32> -> vector<2x64xf32>
    %cst_32 = arith.constant dense<0.000000e+00> : vector<2x256xf32>
    %86 = tpu.matmul %85, %13, %cst_32 {dimension_numbers = #tpu.dot_dimension_numbers<[1], [0], [0], [1], [0, 0, 1, 1], [], []>} : vector<2x64xf32>, vector<64x256xf32>, vector<2x256xf32> -> vector<2x256xf32>
    %c2_i32_33 = arith.constant 2 : i32
    %87 = arith.muli %c1_i32, %c2_i32_33 : i32
    %88 = arith.index_cast %87 : i32 to index
    %c0_34 = arith.constant 0 : index
    %89 = vector.load %arg17[%88, %c0_34] : memref<16x128xf32, #tpu.memory_space<vmem>>, vector<2x128xf32>
    %90 = vector.extract_strided_slice %86 {offsets = [0, 0], sizes = [2, 128], strides = [1, 1]} : vector<2x256xf32> to vector<2x128xf32>
    %91 = arith.addf %89, %90 : vector<2x128xf32>
    %c2_i32_35 = arith.constant 2 : i32
    %92 = arith.muli %84, %c2_i32_35 : i32
    %93 = arith.index_cast %92 : i32 to index
    %c0_36 = arith.constant 0 : index
    %94 = vector.load %arg18[%93, %c0_36] : memref<16x128xf32, #tpu.memory_space<vmem>>, vector<2x128xf32>
    %95 = vector.extract_strided_slice %86 {offsets = [0, 128], sizes = [2, 128], strides = [1, 1]} : vector<2x256xf32> to vector<2x128xf32>
    %96 = arith.addf %94, %95 : vector<2x128xf32>
    %97 = vector.extract_strided_slice %91 {offsets = [0, 0], sizes = [2, 32], strides = [1, 1]} : vector<2x128xf32> to vector<2x32xf32>
    %98 = arith.negf %97 : vector<2x32xf32>
    %99 = math.exp %98 : vector<2x32xf32>
    %cst_37 = arith.constant 1.000000e+00 : f32
    %100 = vector.broadcast %cst_37 : f32 to vector<2x32xf32>
    %101 = arith.addf %100, %99 : vector<2x32xf32>
    %102 = arith.divf %100, %101 : vector<2x32xf32>
    %103 = vector.extract_strided_slice %91 {offsets = [0, 32], sizes = [2, 32], strides = [1, 1]} : vector<2x128xf32> to vector<2x32xf32>
    %104 = arith.negf %103 : vector<2x32xf32>
    %105 = math.exp %104 : vector<2x32xf32>
    %cst_38 = arith.constant 1.000000e+00 : f32
    %106 = vector.broadcast %cst_38 : f32 to vector<2x32xf32>
    %107 = arith.addf %106, %105 : vector<2x32xf32>
    %108 = arith.divf %106, %107 : vector<2x32xf32>
    %109 = vector.extract_strided_slice %91 {offsets = [0, 64], sizes = [2, 32], strides = [1, 1]} : vector<2x128xf32> to vector<2x32xf32>
    %110 = math.tanh %109 : vector<2x32xf32>
    %111 = vector.extract_strided_slice %91 {offsets = [0, 96], sizes = [2, 32], strides = [1, 1]} : vector<2x128xf32> to vector<2x32xf32>
    %112 = arith.negf %111 : vector<2x32xf32>
    %113 = math.exp %112 : vector<2x32xf32>
    %cst_39 = arith.constant 1.000000e+00 : f32
    %114 = vector.broadcast %cst_39 : f32 to vector<2x32xf32>
    %115 = arith.addf %114, %113 : vector<2x32xf32>
    %116 = arith.divf %114, %115 : vector<2x32xf32>
    %117 = arith.mulf %108, %50 : vector<2x32xf32>
    %118 = arith.mulf %102, %110 : vector<2x32xf32>
    %119 = arith.addf %117, %118 : vector<2x32xf32>
    %120 = math.tanh %119 : vector<2x32xf32>
    %121 = arith.mulf %116, %120 : vector<2x32xf32>
    %122 = vector.extract_strided_slice %96 {offsets = [0, 0], sizes = [2, 32], strides = [1, 1]} : vector<2x128xf32> to vector<2x32xf32>
    %123 = arith.negf %122 : vector<2x32xf32>
    %124 = math.exp %123 : vector<2x32xf32>
    %cst_40 = arith.constant 1.000000e+00 : f32
    %125 = vector.broadcast %cst_40 : f32 to vector<2x32xf32>
    %126 = arith.addf %125, %124 : vector<2x32xf32>
    %127 = arith.divf %125, %126 : vector<2x32xf32>
    %128 = vector.extract_strided_slice %96 {offsets = [0, 32], sizes = [2, 32], strides = [1, 1]} : vector<2x128xf32> to vector<2x32xf32>
    %129 = arith.negf %128 : vector<2x32xf32>
    %130 = math.exp %129 : vector<2x32xf32>
    %cst_41 = arith.constant 1.000000e+00 : f32
    %131 = vector.broadcast %cst_41 : f32 to vector<2x32xf32>
    %132 = arith.addf %131, %130 : vector<2x32xf32>
    %133 = arith.divf %131, %132 : vector<2x32xf32>
    %134 = vector.extract_strided_slice %96 {offsets = [0, 64], sizes = [2, 32], strides = [1, 1]} : vector<2x128xf32> to vector<2x32xf32>
    %135 = math.tanh %134 : vector<2x32xf32>
    %136 = vector.extract_strided_slice %96 {offsets = [0, 96], sizes = [2, 32], strides = [1, 1]} : vector<2x128xf32> to vector<2x32xf32>
    %137 = arith.negf %136 : vector<2x32xf32>
    %138 = math.exp %137 : vector<2x32xf32>
    %cst_42 = arith.constant 1.000000e+00 : f32
    %139 = vector.broadcast %cst_42 : f32 to vector<2x32xf32>
    %140 = arith.addf %139, %138 : vector<2x32xf32>
    %141 = arith.divf %139, %140 : vector<2x32xf32>
    %142 = arith.mulf %133, %75 : vector<2x32xf32>
    %143 = arith.mulf %127, %135 : vector<2x32xf32>
    %144 = arith.addf %142, %143 : vector<2x32xf32>
    %145 = math.tanh %144 : vector<2x32xf32>
    %146 = arith.mulf %141, %145 : vector<2x32xf32>
    %c2_i32_43 = arith.constant 2 : i32
    %147 = arith.muli %c1_i32, %c2_i32_43 : i32
    %148 = arith.index_cast %147 : i32 to index
    %c0_44 = arith.constant 0 : index
    %149 = vector.load %arg19[%148, %c0_44] : memref<16x32xf32, #tpu.memory_space<vmem>>, vector<2x32xf32>
    tpu.vector_store %arg19[%148, %c0_44], %121 {strides = array<i32>} : memref<16x32xf32, #tpu.memory_space<vmem>>, vector<2x32xf32>,
    %c2_i32_45 = arith.constant 2 : i32
    %150 = arith.muli %84, %c2_i32_45 : i32
    %151 = arith.index_cast %150 : i32 to index
    %c0_46 = arith.constant 0 : index
    %152 = vector.load %arg20[%151, %c0_46] : memref<16x32xf32, #tpu.memory_space<vmem>>, vector<2x32xf32>
    tpu.vector_store %arg20[%151, %c0_46], %146 {strides = array<i32>} : memref<16x32xf32, #tpu.memory_space<vmem>>, vector<2x32xf32>,
    %c2_i32_47 = arith.constant 2 : i32
    %c7_i32_48 = arith.constant 7 : i32
    %153 = arith.subi %c7_i32_48, %c2_i32_47 : i32
    %154 = tpu.concatenate %121, %146 in 1 : vector<2x32xf32>, vector<2x32xf32> -> vector<2x64xf32>
    %cst_49 = arith.constant dense<0.000000e+00> : vector<2x256xf32>
    %155 = tpu.matmul %154, %13, %cst_49 {dimension_numbers = #tpu.dot_dimension_numbers<[1], [0], [0], [1], [0, 0, 1, 1], [], []>} : vector<2x64xf32>, vector<64x256xf32>, vector<2x256xf32> -> vector<2x256xf32>
    %c2_i32_50 = arith.constant 2 : i32
    %156 = arith.muli %c2_i32_47, %c2_i32_50 : i32
    %157 = arith.index_cast %156 : i32 to index
    %c0_51 = arith.constant 0 : index
    %158 = vector.load %arg17[%157, %c0_51] : memref<16x128xf32, #tpu.memory_space<vmem>>, vector<2x128xf32>
    %159 = vector.extract_strided_slice %155 {offsets = [0, 0], sizes = [2, 128], strides = [1, 1]} : vector<2x256xf32> to vector<2x128xf32>
    %160 = arith.addf %158, %159 : vector<2x128xf32>
    %c2_i32_52 = arith.constant 2 : i32
    %161 = arith.muli %153, %c2_i32_52 : i32
    %162 = arith.index_cast %161 : i32 to index
    %c0_53 = arith.constant 0 : index
    %163 = vector.load %arg18[%162, %c0_53] : memref<16x128xf32, #tpu.memory_space<vmem>>, vector<2x128xf32>
    %164 = vector.extract_strided_slice %155 {offsets = [0, 128], sizes = [2, 128], strides = [1, 1]} : vector<2x256xf32> to vector<2x128xf32>
    %165 = arith.addf %163, %164 : vector<2x128xf32>
    %166 = vector.extract_strided_slice %160 {offsets = [0, 0], sizes = [2, 32], strides = [1, 1]} : vector<2x128xf32> to vector<2x32xf32>
    %167 = arith.negf %166 : vector<2x32xf32>
    %168 = math.exp %167 : vector<2x32xf32>
    %cst_54 = arith.constant 1.000000e+00 : f32
    %169 = vector.broadcast %cst_54 : f32 to vector<2x32xf32>
    %170 = arith.addf %169, %168 : vector<2x32xf32>
    %171 = arith.divf %169, %170 : vector<2x32xf32>
    %172 = vector.extract_strided_slice %160 {offsets = [0, 32], sizes = [2, 32], strides = [1, 1]} : vector<2x128xf32> to vector<2x32xf32>
    %173 = arith.negf %172 : vector<2x32xf32>
    %174 = math.exp %173 : vector<2x32xf32>
    %cst_55 = arith.constant 1.000000e+00 : f32
    %175 = vector.broadcast %cst_55 : f32 to vector<2x32xf32>
    %176 = arith.addf %175, %174 : vector<2x32xf32>
    %177 = arith.divf %175, %176 : vector<2x32xf32>
    %178 = vector.extract_strided_slice %160 {offsets = [0, 64], sizes = [2, 32], strides = [1, 1]} : vector<2x128xf32> to vector<2x32xf32>
    %179 = math.tanh %178 : vector<2x32xf32>
    %180 = vector.extract_strided_slice %160 {offsets = [0, 96], sizes = [2, 32], strides = [1, 1]} : vector<2x128xf32> to vector<2x32xf32>
    %181 = arith.negf %180 : vector<2x32xf32>
    %182 = math.exp %181 : vector<2x32xf32>
    %cst_56 = arith.constant 1.000000e+00 : f32
    %183 = vector.broadcast %cst_56 : f32 to vector<2x32xf32>
    %184 = arith.addf %183, %182 : vector<2x32xf32>
    %185 = arith.divf %183, %184 : vector<2x32xf32>
    %186 = arith.mulf %177, %119 : vector<2x32xf32>
    %187 = arith.mulf %171, %179 : vector<2x32xf32>
    %188 = arith.addf %186, %187 : vector<2x32xf32>
    %189 = math.tanh %188 : vector<2x32xf32>
    %190 = arith.mulf %185, %189 : vector<2x32xf32>
    %191 = vector.extract_strided_slice %165 {offsets = [0, 0], sizes = [2, 32], strides = [1, 1]} : vector<2x128xf32> to vector<2x32xf32>
    %192 = arith.negf %191 : vector<2x32xf32>
    %193 = math.exp %192 : vector<2x32xf32>
    %cst_57 = arith.constant 1.000000e+00 : f32
    %194 = vector.broadcast %cst_57 : f32 to vector<2x32xf32>
    %195 = arith.addf %194, %193 : vector<2x32xf32>
    %196 = arith.divf %194, %195 : vector<2x32xf32>
    %197 = vector.extract_strided_slice %165 {offsets = [0, 32], sizes = [2, 32], strides = [1, 1]} : vector<2x128xf32> to vector<2x32xf32>
    %198 = arith.negf %197 : vector<2x32xf32>
    %199 = math.exp %198 : vector<2x32xf32>
    %cst_58 = arith.constant 1.000000e+00 : f32
    %200 = vector.broadcast %cst_58 : f32 to vector<2x32xf32>
    %201 = arith.addf %200, %199 : vector<2x32xf32>
    %202 = arith.divf %200, %201 : vector<2x32xf32>
    %203 = vector.extract_strided_slice %165 {offsets = [0, 64], sizes = [2, 32], strides = [1, 1]} : vector<2x128xf32> to vector<2x32xf32>
    %204 = math.tanh %203 : vector<2x32xf32>
    %205 = vector.extract_strided_slice %165 {offsets = [0, 96], sizes = [2, 32], strides = [1, 1]} : vector<2x128xf32> to vector<2x32xf32>
    %206 = arith.negf %205 : vector<2x32xf32>
    %207 = math.exp %206 : vector<2x32xf32>
    %cst_59 = arith.constant 1.000000e+00 : f32
    %208 = vector.broadcast %cst_59 : f32 to vector<2x32xf32>
    %209 = arith.addf %208, %207 : vector<2x32xf32>
    %210 = arith.divf %208, %209 : vector<2x32xf32>
    %211 = arith.mulf %202, %144 : vector<2x32xf32>
    %212 = arith.mulf %196, %204 : vector<2x32xf32>
    %213 = arith.addf %211, %212 : vector<2x32xf32>
    %214 = math.tanh %213 : vector<2x32xf32>
    %215 = arith.mulf %210, %214 : vector<2x32xf32>
    %c2_i32_60 = arith.constant 2 : i32
    %216 = arith.muli %c2_i32_47, %c2_i32_60 : i32
    %217 = arith.index_cast %216 : i32 to index
    %c0_61 = arith.constant 0 : index
    %218 = vector.load %arg19[%217, %c0_61] : memref<16x32xf32, #tpu.memory_space<vmem>>, vector<2x32xf32>
    tpu.vector_store %arg19[%217, %c0_61], %190 {strides = array<i32>} : memref<16x32xf32, #tpu.memory_space<vmem>>, vector<2x32xf32>,
    %c2_i32_62 = arith.constant 2 : i32
    %219 = arith.muli %153, %c2_i32_62 : i32
    %220 = arith.index_cast %219 : i32 to index
    %c0_63 = arith.constant 0 : index
    %221 = vector.load %arg20[%220, %c0_63] : memref<16x32xf32, #tpu.memory_space<vmem>>, vector<2x32xf32>
    tpu.vector_store %arg20[%220, %c0_63], %215 {strides = array<i32>} : memref<16x32xf32, #tpu.memory_space<vmem>>, vector<2x32xf32>,
    %c3_i32 = arith.constant 3 : i32
    %c7_i32_64 = arith.constant 7 : i32
    %222 = arith.subi %c7_i32_64, %c3_i32 : i32
    %223 = tpu.concatenate %190, %215 in 1 : vector<2x32xf32>, vector<2x32xf32> -> vector<2x64xf32>
    %cst_65 = arith.constant dense<0.000000e+00> : vector<2x256xf32>
    %224 = tpu.matmul %223, %13, %cst_65 {dimension_numbers = #tpu.dot_dimension_numbers<[1], [0], [0], [1], [0, 0, 1, 1], [], []>} : vector<2x64xf32>, vector<64x256xf32>, vector<2x256xf32> -> vector<2x256xf32>
    %c2_i32_66 = arith.constant 2 : i32
    %225 = arith.muli %c3_i32, %c2_i32_66 : i32
    %226 = arith.index_cast %225 : i32 to index
    %c0_67 = arith.constant 0 : index
    %227 = vector.load %arg17[%226, %c0_67] : memref<16x128xf32, #tpu.memory_space<vmem>>, vector<2x128xf32>
    %228 = vector.extract_strided_slice %224 {offsets = [0, 0], sizes = [2, 128], strides = [1, 1]} : vector<2x256xf32> to vector<2x128xf32>
    %229 = arith.addf %227, %228 : vector<2x128xf32>
    %c2_i32_68 = arith.constant 2 : i32
    %230 = arith.muli %222, %c2_i32_68 : i32
    %231 = arith.index_cast %230 : i32 to index
    %c0_69 = arith.constant 0 : index
    %232 = vector.load %arg18[%231, %c0_69] : memref<16x128xf32, #tpu.memory_space<vmem>>, vector<2x128xf32>
    %233 = vector.extract_strided_slice %224 {offsets = [0, 128], sizes = [2, 128], strides = [1, 1]} : vector<2x256xf32> to vector<2x128xf32>
    %234 = arith.addf %232, %233 : vector<2x128xf32>
    %235 = vector.extract_strided_slice %229 {offsets = [0, 0], sizes = [2, 32], strides = [1, 1]} : vector<2x128xf32> to vector<2x32xf32>
    %236 = arith.negf %235 : vector<2x32xf32>
    %237 = math.exp %236 : vector<2x32xf32>
    %cst_70 = arith.constant 1.000000e+00 : f32
    %238 = vector.broadcast %cst_70 : f32 to vector<2x32xf32>
    %239 = arith.addf %238, %237 : vector<2x32xf32>
    %240 = arith.divf %238, %239 : vector<2x32xf32>
    %241 = vector.extract_strided_slice %229 {offsets = [0, 32], sizes = [2, 32], strides = [1, 1]} : vector<2x128xf32> to vector<2x32xf32>
    %242 = arith.negf %241 : vector<2x32xf32>
    %243 = math.exp %242 : vector<2x32xf32>
    %cst_71 = arith.constant 1.000000e+00 : f32
    %244 = vector.broadcast %cst_71 : f32 to vector<2x32xf32>
    %245 = arith.addf %244, %243 : vector<2x32xf32>
    %246 = arith.divf %244, %245 : vector<2x32xf32>
    %247 = vector.extract_strided_slice %229 {offsets = [0, 64], sizes = [2, 32], strides = [1, 1]} : vector<2x128xf32> to vector<2x32xf32>
    %248 = math.tanh %247 : vector<2x32xf32>
    %249 = vector.extract_strided_slice %229 {offsets = [0, 96], sizes = [2, 32], strides = [1, 1]} : vector<2x128xf32> to vector<2x32xf32>
    %250 = arith.negf %249 : vector<2x32xf32>
    %251 = math.exp %250 : vector<2x32xf32>
    %cst_72 = arith.constant 1.000000e+00 : f32
    %252 = vector.broadcast %cst_72 : f32 to vector<2x32xf32>
    %253 = arith.addf %252, %251 : vector<2x32xf32>
    %254 = arith.divf %252, %253 : vector<2x32xf32>
    %255 = arith.mulf %246, %188 : vector<2x32xf32>
    %256 = arith.mulf %240, %248 : vector<2x32xf32>
    %257 = arith.addf %255, %256 : vector<2x32xf32>
    %258 = math.tanh %257 : vector<2x32xf32>
    %259 = arith.mulf %254, %258 : vector<2x32xf32>
    %260 = vector.extract_strided_slice %234 {offsets = [0, 0], sizes = [2, 32], strides = [1, 1]} : vector<2x128xf32> to vector<2x32xf32>
    %261 = arith.negf %260 : vector<2x32xf32>
    %262 = math.exp %261 : vector<2x32xf32>
    %cst_73 = arith.constant 1.000000e+00 : f32
    %263 = vector.broadcast %cst_73 : f32 to vector<2x32xf32>
    %264 = arith.addf %263, %262 : vector<2x32xf32>
    %265 = arith.divf %263, %264 : vector<2x32xf32>
    %266 = vector.extract_strided_slice %234 {offsets = [0, 32], sizes = [2, 32], strides = [1, 1]} : vector<2x128xf32> to vector<2x32xf32>
    %267 = arith.negf %266 : vector<2x32xf32>
    %268 = math.exp %267 : vector<2x32xf32>
    %cst_74 = arith.constant 1.000000e+00 : f32
    %269 = vector.broadcast %cst_74 : f32 to vector<2x32xf32>
    %270 = arith.addf %269, %268 : vector<2x32xf32>
    %271 = arith.divf %269, %270 : vector<2x32xf32>
    %272 = vector.extract_strided_slice %234 {offsets = [0, 64], sizes = [2, 32], strides = [1, 1]} : vector<2x128xf32> to vector<2x32xf32>
    %273 = math.tanh %272 : vector<2x32xf32>
    %274 = vector.extract_strided_slice %234 {offsets = [0, 96], sizes = [2, 32], strides = [1, 1]} : vector<2x128xf32> to vector<2x32xf32>
    %275 = arith.negf %274 : vector<2x32xf32>
    %276 = math.exp %275 : vector<2x32xf32>
    %cst_75 = arith.constant 1.000000e+00 : f32
    %277 = vector.broadcast %cst_75 : f32 to vector<2x32xf32>
    %278 = arith.addf %277, %276 : vector<2x32xf32>
    %279 = arith.divf %277, %278 : vector<2x32xf32>
    %280 = arith.mulf %271, %213 : vector<2x32xf32>
    %281 = arith.mulf %265, %273 : vector<2x32xf32>
    %282 = arith.addf %280, %281 : vector<2x32xf32>
    %283 = math.tanh %282 : vector<2x32xf32>
    %284 = arith.mulf %279, %283 : vector<2x32xf32>
    %c2_i32_76 = arith.constant 2 : i32
    %285 = arith.muli %c3_i32, %c2_i32_76 : i32
    %286 = arith.index_cast %285 : i32 to index
    %c0_77 = arith.constant 0 : index
    %287 = vector.load %arg19[%286, %c0_77] : memref<16x32xf32, #tpu.memory_space<vmem>>, vector<2x32xf32>
    tpu.vector_store %arg19[%286, %c0_77], %259 {strides = array<i32>} : memref<16x32xf32, #tpu.memory_space<vmem>>, vector<2x32xf32>,
    %c2_i32_78 = arith.constant 2 : i32
    %288 = arith.muli %222, %c2_i32_78 : i32
    %289 = arith.index_cast %288 : i32 to index
    %c0_79 = arith.constant 0 : index
    %290 = vector.load %arg20[%289, %c0_79] : memref<16x32xf32, #tpu.memory_space<vmem>>, vector<2x32xf32>
    tpu.vector_store %arg20[%289, %c0_79], %284 {strides = array<i32>} : memref<16x32xf32, #tpu.memory_space<vmem>>, vector<2x32xf32>,
    %c4_i32 = arith.constant 4 : i32
    %c7_i32_80 = arith.constant 7 : i32
    %291 = arith.subi %c7_i32_80, %c4_i32 : i32
    %292 = tpu.concatenate %259, %284 in 1 : vector<2x32xf32>, vector<2x32xf32> -> vector<2x64xf32>
    %cst_81 = arith.constant dense<0.000000e+00> : vector<2x256xf32>
    %293 = tpu.matmul %292, %13, %cst_81 {dimension_numbers = #tpu.dot_dimension_numbers<[1], [0], [0], [1], [0, 0, 1, 1], [], []>} : vector<2x64xf32>, vector<64x256xf32>, vector<2x256xf32> -> vector<2x256xf32>
    %c2_i32_82 = arith.constant 2 : i32
    %294 = arith.muli %c4_i32, %c2_i32_82 : i32
    %295 = arith.index_cast %294 : i32 to index
    %c0_83 = arith.constant 0 : index
    %296 = vector.load %arg17[%295, %c0_83] : memref<16x128xf32, #tpu.memory_space<vmem>>, vector<2x128xf32>
    %297 = vector.extract_strided_slice %293 {offsets = [0, 0], sizes = [2, 128], strides = [1, 1]} : vector<2x256xf32> to vector<2x128xf32>
    %298 = arith.addf %296, %297 : vector<2x128xf32>
    %c2_i32_84 = arith.constant 2 : i32
    %299 = arith.muli %291, %c2_i32_84 : i32
    %300 = arith.index_cast %299 : i32 to index
    %c0_85 = arith.constant 0 : index
    %301 = vector.load %arg18[%300, %c0_85] : memref<16x128xf32, #tpu.memory_space<vmem>>, vector<2x128xf32>
    %302 = vector.extract_strided_slice %293 {offsets = [0, 128], sizes = [2, 128], strides = [1, 1]} : vector<2x256xf32> to vector<2x128xf32>
    %303 = arith.addf %301, %302 : vector<2x128xf32>
    %304 = vector.extract_strided_slice %298 {offsets = [0, 0], sizes = [2, 32], strides = [1, 1]} : vector<2x128xf32> to vector<2x32xf32>
    %305 = arith.negf %304 : vector<2x32xf32>
    %306 = math.exp %305 : vector<2x32xf32>
    %cst_86 = arith.constant 1.000000e+00 : f32
    %307 = vector.broadcast %cst_86 : f32 to vector<2x32xf32>
    %308 = arith.addf %307, %306 : vector<2x32xf32>
    %309 = arith.divf %307, %308 : vector<2x32xf32>
    %310 = vector.extract_strided_slice %298 {offsets = [0, 32], sizes = [2, 32], strides = [1, 1]} : vector<2x128xf32> to vector<2x32xf32>
    %311 = arith.negf %310 : vector<2x32xf32>
    %312 = math.exp %311 : vector<2x32xf32>
    %cst_87 = arith.constant 1.000000e+00 : f32
    %313 = vector.broadcast %cst_87 : f32 to vector<2x32xf32>
    %314 = arith.addf %313, %312 : vector<2x32xf32>
    %315 = arith.divf %313, %314 : vector<2x32xf32>
    %316 = vector.extract_strided_slice %298 {offsets = [0, 64], sizes = [2, 32], strides = [1, 1]} : vector<2x128xf32> to vector<2x32xf32>
    %317 = math.tanh %316 : vector<2x32xf32>
    %318 = vector.extract_strided_slice %298 {offsets = [0, 96], sizes = [2, 32], strides = [1, 1]} : vector<2x128xf32> to vector<2x32xf32>
    %319 = arith.negf %318 : vector<2x32xf32>
    %320 = math.exp %319 : vector<2x32xf32>
    %cst_88 = arith.constant 1.000000e+00 : f32
    %321 = vector.broadcast %cst_88 : f32 to vector<2x32xf32>
    %322 = arith.addf %321, %320 : vector<2x32xf32>
    %323 = arith.divf %321, %322 : vector<2x32xf32>
    %324 = arith.mulf %315, %257 : vector<2x32xf32>
    %325 = arith.mulf %309, %317 : vector<2x32xf32>
    %326 = arith.addf %324, %325 : vector<2x32xf32>
    %327 = math.tanh %326 : vector<2x32xf32>
    %328 = arith.mulf %323, %327 : vector<2x32xf32>
    %329 = vector.extract_strided_slice %303 {offsets = [0, 0], sizes = [2, 32], strides = [1, 1]} : vector<2x128xf32> to vector<2x32xf32>
    %330 = arith.negf %329 : vector<2x32xf32>
    %331 = math.exp %330 : vector<2x32xf32>
    %cst_89 = arith.constant 1.000000e+00 : f32
    %332 = vector.broadcast %cst_89 : f32 to vector<2x32xf32>
    %333 = arith.addf %332, %331 : vector<2x32xf32>
    %334 = arith.divf %332, %333 : vector<2x32xf32>
    %335 = vector.extract_strided_slice %303 {offsets = [0, 32], sizes = [2, 32], strides = [1, 1]} : vector<2x128xf32> to vector<2x32xf32>
    %336 = arith.negf %335 : vector<2x32xf32>
    %337 = math.exp %336 : vector<2x32xf32>
    %cst_90 = arith.constant 1.000000e+00 : f32
    %338 = vector.broadcast %cst_90 : f32 to vector<2x32xf32>
    %339 = arith.addf %338, %337 : vector<2x32xf32>
    %340 = arith.divf %338, %339 : vector<2x32xf32>
    %341 = vector.extract_strided_slice %303 {offsets = [0, 64], sizes = [2, 32], strides = [1, 1]} : vector<2x128xf32> to vector<2x32xf32>
    %342 = math.tanh %341 : vector<2x32xf32>
    %343 = vector.extract_strided_slice %303 {offsets = [0, 96], sizes = [2, 32], strides = [1, 1]} : vector<2x128xf32> to vector<2x32xf32>
    %344 = arith.negf %343 : vector<2x32xf32>
    %345 = math.exp %344 : vector<2x32xf32>
    %cst_91 = arith.constant 1.000000e+00 : f32
    %346 = vector.broadcast %cst_91 : f32 to vector<2x32xf32>
    %347 = arith.addf %346, %345 : vector<2x32xf32>
    %348 = arith.divf %346, %347 : vector<2x32xf32>
    %349 = arith.mulf %340, %282 : vector<2x32xf32>
    %350 = arith.mulf %334, %342 : vector<2x32xf32>
    %351 = arith.addf %349, %350 : vector<2x32xf32>
    %352 = math.tanh %351 : vector<2x32xf32>
    %353 = arith.mulf %348, %352 : vector<2x32xf32>
    %c2_i32_92 = arith.constant 2 : i32
    %354 = arith.muli %c4_i32, %c2_i32_92 : i32
    %355 = arith.index_cast %354 : i32 to index
    %c0_93 = arith.constant 0 : index
    %356 = vector.load %arg19[%355, %c0_93] : memref<16x32xf32, #tpu.memory_space<vmem>>, vector<2x32xf32>
    tpu.vector_store %arg19[%355, %c0_93], %328 {strides = array<i32>} : memref<16x32xf32, #tpu.memory_space<vmem>>, vector<2x32xf32>,
    %c2_i32_94 = arith.constant 2 : i32
    %357 = arith.muli %291, %c2_i32_94 : i32
    %358 = arith.index_cast %357 : i32 to index
    %c0_95 = arith.constant 0 : index
    %359 = vector.load %arg20[%358, %c0_95] : memref<16x32xf32, #tpu.memory_space<vmem>>, vector<2x32xf32>
    tpu.vector_store %arg20[%358, %c0_95], %353 {strides = array<i32>} : memref<16x32xf32, #tpu.memory_space<vmem>>, vector<2x32xf32>,
    %c5_i32 = arith.constant 5 : i32
    %c7_i32_96 = arith.constant 7 : i32
    %360 = arith.subi %c7_i32_96, %c5_i32 : i32
    %361 = tpu.concatenate %328, %353 in 1 : vector<2x32xf32>, vector<2x32xf32> -> vector<2x64xf32>
    %cst_97 = arith.constant dense<0.000000e+00> : vector<2x256xf32>
    %362 = tpu.matmul %361, %13, %cst_97 {dimension_numbers = #tpu.dot_dimension_numbers<[1], [0], [0], [1], [0, 0, 1, 1], [], []>} : vector<2x64xf32>, vector<64x256xf32>, vector<2x256xf32> -> vector<2x256xf32>
    %c2_i32_98 = arith.constant 2 : i32
    %363 = arith.muli %c5_i32, %c2_i32_98 : i32
    %364 = arith.index_cast %363 : i32 to index
    %c0_99 = arith.constant 0 : index
    %365 = vector.load %arg17[%364, %c0_99] : memref<16x128xf32, #tpu.memory_space<vmem>>, vector<2x128xf32>
    %366 = vector.extract_strided_slice %362 {offsets = [0, 0], sizes = [2, 128], strides = [1, 1]} : vector<2x256xf32> to vector<2x128xf32>
    %367 = arith.addf %365, %366 : vector<2x128xf32>
    %c2_i32_100 = arith.constant 2 : i32
    %368 = arith.muli %360, %c2_i32_100 : i32
    %369 = arith.index_cast %368 : i32 to index
    %c0_101 = arith.constant 0 : index
    %370 = vector.load %arg18[%369, %c0_101] : memref<16x128xf32, #tpu.memory_space<vmem>>, vector<2x128xf32>
    %371 = vector.extract_strided_slice %362 {offsets = [0, 128], sizes = [2, 128], strides = [1, 1]} : vector<2x256xf32> to vector<2x128xf32>
    %372 = arith.addf %370, %371 : vector<2x128xf32>
    %373 = vector.extract_strided_slice %367 {offsets = [0, 0], sizes = [2, 32], strides = [1, 1]} : vector<2x128xf32> to vector<2x32xf32>
    %374 = arith.negf %373 : vector<2x32xf32>
    %375 = math.exp %374 : vector<2x32xf32>
    %cst_102 = arith.constant 1.000000e+00 : f32
    %376 = vector.broadcast %cst_102 : f32 to vector<2x32xf32>
    %377 = arith.addf %376, %375 : vector<2x32xf32>
    %378 = arith.divf %376, %377 : vector<2x32xf32>
    %379 = vector.extract_strided_slice %367 {offsets = [0, 32], sizes = [2, 32], strides = [1, 1]} : vector<2x128xf32> to vector<2x32xf32>
    %380 = arith.negf %379 : vector<2x32xf32>
    %381 = math.exp %380 : vector<2x32xf32>
    %cst_103 = arith.constant 1.000000e+00 : f32
    %382 = vector.broadcast %cst_103 : f32 to vector<2x32xf32>
    %383 = arith.addf %382, %381 : vector<2x32xf32>
    %384 = arith.divf %382, %383 : vector<2x32xf32>
    %385 = vector.extract_strided_slice %367 {offsets = [0, 64], sizes = [2, 32], strides = [1, 1]} : vector<2x128xf32> to vector<2x32xf32>
    %386 = math.tanh %385 : vector<2x32xf32>
    %387 = vector.extract_strided_slice %367 {offsets = [0, 96], sizes = [2, 32], strides = [1, 1]} : vector<2x128xf32> to vector<2x32xf32>
    %388 = arith.negf %387 : vector<2x32xf32>
    %389 = math.exp %388 : vector<2x32xf32>
    %cst_104 = arith.constant 1.000000e+00 : f32
    %390 = vector.broadcast %cst_104 : f32 to vector<2x32xf32>
    %391 = arith.addf %390, %389 : vector<2x32xf32>
    %392 = arith.divf %390, %391 : vector<2x32xf32>
    %393 = arith.mulf %384, %326 : vector<2x32xf32>
    %394 = arith.mulf %378, %386 : vector<2x32xf32>
    %395 = arith.addf %393, %394 : vector<2x32xf32>
    %396 = math.tanh %395 : vector<2x32xf32>
    %397 = arith.mulf %392, %396 : vector<2x32xf32>
    %398 = vector.extract_strided_slice %372 {offsets = [0, 0], sizes = [2, 32], strides = [1, 1]} : vector<2x128xf32> to vector<2x32xf32>
    %399 = arith.negf %398 : vector<2x32xf32>
    %400 = math.exp %399 : vector<2x32xf32>
    %cst_105 = arith.constant 1.000000e+00 : f32
    %401 = vector.broadcast %cst_105 : f32 to vector<2x32xf32>
    %402 = arith.addf %401, %400 : vector<2x32xf32>
    %403 = arith.divf %401, %402 : vector<2x32xf32>
    %404 = vector.extract_strided_slice %372 {offsets = [0, 32], sizes = [2, 32], strides = [1, 1]} : vector<2x128xf32> to vector<2x32xf32>
    %405 = arith.negf %404 : vector<2x32xf32>
    %406 = math.exp %405 : vector<2x32xf32>
    %cst_106 = arith.constant 1.000000e+00 : f32
    %407 = vector.broadcast %cst_106 : f32 to vector<2x32xf32>
    %408 = arith.addf %407, %406 : vector<2x32xf32>
    %409 = arith.divf %407, %408 : vector<2x32xf32>
    %410 = vector.extract_strided_slice %372 {offsets = [0, 64], sizes = [2, 32], strides = [1, 1]} : vector<2x128xf32> to vector<2x32xf32>
    %411 = math.tanh %410 : vector<2x32xf32>
    %412 = vector.extract_strided_slice %372 {offsets = [0, 96], sizes = [2, 32], strides = [1, 1]} : vector<2x128xf32> to vector<2x32xf32>
    %413 = arith.negf %412 : vector<2x32xf32>
    %414 = math.exp %413 : vector<2x32xf32>
    %cst_107 = arith.constant 1.000000e+00 : f32
    %415 = vector.broadcast %cst_107 : f32 to vector<2x32xf32>
    %416 = arith.addf %415, %414 : vector<2x32xf32>
    %417 = arith.divf %415, %416 : vector<2x32xf32>
    %418 = arith.mulf %409, %351 : vector<2x32xf32>
    %419 = arith.mulf %403, %411 : vector<2x32xf32>
    %420 = arith.addf %418, %419 : vector<2x32xf32>
    %421 = math.tanh %420 : vector<2x32xf32>
    %422 = arith.mulf %417, %421 : vector<2x32xf32>
    %c2_i32_108 = arith.constant 2 : i32
    %423 = arith.muli %c5_i32, %c2_i32_108 : i32
    %424 = arith.index_cast %423 : i32 to index
    %c0_109 = arith.constant 0 : index
    %425 = vector.load %arg19[%424, %c0_109] : memref<16x32xf32, #tpu.memory_space<vmem>>, vector<2x32xf32>
    tpu.vector_store %arg19[%424, %c0_109], %397 {strides = array<i32>} : memref<16x32xf32, #tpu.memory_space<vmem>>, vector<2x32xf32>,
    %c2_i32_110 = arith.constant 2 : i32
    %426 = arith.muli %360, %c2_i32_110 : i32
    %427 = arith.index_cast %426 : i32 to index
    %c0_111 = arith.constant 0 : index
    %428 = vector.load %arg20[%427, %c0_111] : memref<16x32xf32, #tpu.memory_space<vmem>>, vector<2x32xf32>
    tpu.vector_store %arg20[%427, %c0_111], %422 {strides = array<i32>} : memref<16x32xf32, #tpu.memory_space<vmem>>, vector<2x32xf32>,
    %c6_i32 = arith.constant 6 : i32
    %c7_i32_112 = arith.constant 7 : i32
    %429 = arith.subi %c7_i32_112, %c6_i32 : i32
    %430 = tpu.concatenate %397, %422 in 1 : vector<2x32xf32>, vector<2x32xf32> -> vector<2x64xf32>
    %cst_113 = arith.constant dense<0.000000e+00> : vector<2x256xf32>
    %431 = tpu.matmul %430, %13, %cst_113 {dimension_numbers = #tpu.dot_dimension_numbers<[1], [0], [0], [1], [0, 0, 1, 1], [], []>} : vector<2x64xf32>, vector<64x256xf32>, vector<2x256xf32> -> vector<2x256xf32>
    %c2_i32_114 = arith.constant 2 : i32
    %432 = arith.muli %c6_i32, %c2_i32_114 : i32
    %433 = arith.index_cast %432 : i32 to index
    %c0_115 = arith.constant 0 : index
    %434 = vector.load %arg17[%433, %c0_115] : memref<16x128xf32, #tpu.memory_space<vmem>>, vector<2x128xf32>
    %435 = vector.extract_strided_slice %431 {offsets = [0, 0], sizes = [2, 128], strides = [1, 1]} : vector<2x256xf32> to vector<2x128xf32>
    %436 = arith.addf %434, %435 : vector<2x128xf32>
    %c2_i32_116 = arith.constant 2 : i32
    %437 = arith.muli %429, %c2_i32_116 : i32
    %438 = arith.index_cast %437 : i32 to index
    %c0_117 = arith.constant 0 : index
    %439 = vector.load %arg18[%438, %c0_117] : memref<16x128xf32, #tpu.memory_space<vmem>>, vector<2x128xf32>
    %440 = vector.extract_strided_slice %431 {offsets = [0, 128], sizes = [2, 128], strides = [1, 1]} : vector<2x256xf32> to vector<2x128xf32>
    %441 = arith.addf %439, %440 : vector<2x128xf32>
    %442 = vector.extract_strided_slice %436 {offsets = [0, 0], sizes = [2, 32], strides = [1, 1]} : vector<2x128xf32> to vector<2x32xf32>
    %443 = arith.negf %442 : vector<2x32xf32>
    %444 = math.exp %443 : vector<2x32xf32>
    %cst_118 = arith.constant 1.000000e+00 : f32
    %445 = vector.broadcast %cst_118 : f32 to vector<2x32xf32>
    %446 = arith.addf %445, %444 : vector<2x32xf32>
    %447 = arith.divf %445, %446 : vector<2x32xf32>
    %448 = vector.extract_strided_slice %436 {offsets = [0, 32], sizes = [2, 32], strides = [1, 1]} : vector<2x128xf32> to vector<2x32xf32>
    %449 = arith.negf %448 : vector<2x32xf32>
    %450 = math.exp %449 : vector<2x32xf32>
    %cst_119 = arith.constant 1.000000e+00 : f32
    %451 = vector.broadcast %cst_119 : f32 to vector<2x32xf32>
    %452 = arith.addf %451, %450 : vector<2x32xf32>
    %453 = arith.divf %451, %452 : vector<2x32xf32>
    %454 = vector.extract_strided_slice %436 {offsets = [0, 64], sizes = [2, 32], strides = [1, 1]} : vector<2x128xf32> to vector<2x32xf32>
    %455 = math.tanh %454 : vector<2x32xf32>
    %456 = vector.extract_strided_slice %436 {offsets = [0, 96], sizes = [2, 32], strides = [1, 1]} : vector<2x128xf32> to vector<2x32xf32>
    %457 = arith.negf %456 : vector<2x32xf32>
    %458 = math.exp %457 : vector<2x32xf32>
    %cst_120 = arith.constant 1.000000e+00 : f32
    %459 = vector.broadcast %cst_120 : f32 to vector<2x32xf32>
    %460 = arith.addf %459, %458 : vector<2x32xf32>
    %461 = arith.divf %459, %460 : vector<2x32xf32>
    %462 = arith.mulf %453, %395 : vector<2x32xf32>
    %463 = arith.mulf %447, %455 : vector<2x32xf32>
    %464 = arith.addf %462, %463 : vector<2x32xf32>
    %465 = math.tanh %464 : vector<2x32xf32>
    %466 = arith.mulf %461, %465 : vector<2x32xf32>
    %467 = vector.extract_strided_slice %441 {offsets = [0, 0], sizes = [2, 32], strides = [1, 1]} : vector<2x128xf32> to vector<2x32xf32>
    %468 = arith.negf %467 : vector<2x32xf32>
    %469 = math.exp %468 : vector<2x32xf32>
    %cst_121 = arith.constant 1.000000e+00 : f32
    %470 = vector.broadcast %cst_121 : f32 to vector<2x32xf32>
    %471 = arith.addf %470, %469 : vector<2x32xf32>
    %472 = arith.divf %470, %471 : vector<2x32xf32>
    %473 = vector.extract_strided_slice %441 {offsets = [0, 32], sizes = [2, 32], strides = [1, 1]} : vector<2x128xf32> to vector<2x32xf32>
    %474 = arith.negf %473 : vector<2x32xf32>
    %475 = math.exp %474 : vector<2x32xf32>
    %cst_122 = arith.constant 1.000000e+00 : f32
    %476 = vector.broadcast %cst_122 : f32 to vector<2x32xf32>
    %477 = arith.addf %476, %475 : vector<2x32xf32>
    %478 = arith.divf %476, %477 : vector<2x32xf32>
    %479 = vector.extract_strided_slice %441 {offsets = [0, 64], sizes = [2, 32], strides = [1, 1]} : vector<2x128xf32> to vector<2x32xf32>
    %480 = math.tanh %479 : vector<2x32xf32>
    %481 = vector.extract_strided_slice %441 {offsets = [0, 96], sizes = [2, 32], strides = [1, 1]} : vector<2x128xf32> to vector<2x32xf32>
    %482 = arith.negf %481 : vector<2x32xf32>
    %483 = math.exp %482 : vector<2x32xf32>
    %cst_123 = arith.constant 1.000000e+00 : f32
    %484 = vector.broadcast %cst_123 : f32 to vector<2x32xf32>
    %485 = arith.addf %484, %483 : vector<2x32xf32>
    %486 = arith.divf %484, %485 : vector<2x32xf32>
    %487 = arith.mulf %478, %420 : vector<2x32xf32>
    %488 = arith.mulf %472, %480 : vector<2x32xf32>
    %489 = arith.addf %487, %488 : vector<2x32xf32>
    %490 = math.tanh %489 : vector<2x32xf32>
    %491 = arith.mulf %486, %490 : vector<2x32xf32>
    %c2_i32_124 = arith.constant 2 : i32
    %492 = arith.muli %c6_i32, %c2_i32_124 : i32
    %493 = arith.index_cast %492 : i32 to index
    %c0_125 = arith.constant 0 : index
    %494 = vector.load %arg19[%493, %c0_125] : memref<16x32xf32, #tpu.memory_space<vmem>>, vector<2x32xf32>
    tpu.vector_store %arg19[%493, %c0_125], %466 {strides = array<i32>} : memref<16x32xf32, #tpu.memory_space<vmem>>, vector<2x32xf32>,
    %c2_i32_126 = arith.constant 2 : i32
    %495 = arith.muli %429, %c2_i32_126 : i32
    %496 = arith.index_cast %495 : i32 to index
    %c0_127 = arith.constant 0 : index
    %497 = vector.load %arg20[%496, %c0_127] : memref<16x32xf32, #tpu.memory_space<vmem>>, vector<2x32xf32>
    tpu.vector_store %arg20[%496, %c0_127], %491 {strides = array<i32>} : memref<16x32xf32, #tpu.memory_space<vmem>>, vector<2x32xf32>,
    %c7_i32_128 = arith.constant 7 : i32
    %c7_i32_129 = arith.constant 7 : i32
    %498 = arith.subi %c7_i32_129, %c7_i32_128 : i32
    %499 = tpu.concatenate %466, %491 in 1 : vector<2x32xf32>, vector<2x32xf32> -> vector<2x64xf32>
    %cst_130 = arith.constant dense<0.000000e+00> : vector<2x256xf32>
    %500 = tpu.matmul %499, %13, %cst_130 {dimension_numbers = #tpu.dot_dimension_numbers<[1], [0], [0], [1], [0, 0, 1, 1], [], []>} : vector<2x64xf32>, vector<64x256xf32>, vector<2x256xf32> -> vector<2x256xf32>
    %c2_i32_131 = arith.constant 2 : i32
    %501 = arith.muli %c7_i32_128, %c2_i32_131 : i32
    %502 = arith.index_cast %501 : i32 to index
    %c0_132 = arith.constant 0 : index
    %503 = vector.load %arg17[%502, %c0_132] : memref<16x128xf32, #tpu.memory_space<vmem>>, vector<2x128xf32>
    %504 = vector.extract_strided_slice %500 {offsets = [0, 0], sizes = [2, 128], strides = [1, 1]} : vector<2x256xf32> to vector<2x128xf32>
    %505 = arith.addf %503, %504 : vector<2x128xf32>
    %c2_i32_133 = arith.constant 2 : i32
    %506 = arith.muli %498, %c2_i32_133 : i32
    %507 = arith.index_cast %506 : i32 to index
    %c0_134 = arith.constant 0 : index
    %508 = vector.load %arg18[%507, %c0_134] : memref<16x128xf32, #tpu.memory_space<vmem>>, vector<2x128xf32>
    %509 = vector.extract_strided_slice %500 {offsets = [0, 128], sizes = [2, 128], strides = [1, 1]} : vector<2x256xf32> to vector<2x128xf32>
    %510 = arith.addf %508, %509 : vector<2x128xf32>
    %511 = vector.extract_strided_slice %505 {offsets = [0, 0], sizes = [2, 32], strides = [1, 1]} : vector<2x128xf32> to vector<2x32xf32>
    %512 = arith.negf %511 : vector<2x32xf32>
    %513 = math.exp %512 : vector<2x32xf32>
    %cst_135 = arith.constant 1.000000e+00 : f32
    %514 = vector.broadcast %cst_135 : f32 to vector<2x32xf32>
    %515 = arith.addf %514, %513 : vector<2x32xf32>
    %516 = arith.divf %514, %515 : vector<2x32xf32>
    %517 = vector.extract_strided_slice %505 {offsets = [0, 32], sizes = [2, 32], strides = [1, 1]} : vector<2x128xf32> to vector<2x32xf32>
    %518 = arith.negf %517 : vector<2x32xf32>
    %519 = math.exp %518 : vector<2x32xf32>
    %cst_136 = arith.constant 1.000000e+00 : f32
    %520 = vector.broadcast %cst_136 : f32 to vector<2x32xf32>
    %521 = arith.addf %520, %519 : vector<2x32xf32>
    %522 = arith.divf %520, %521 : vector<2x32xf32>
    %523 = vector.extract_strided_slice %505 {offsets = [0, 64], sizes = [2, 32], strides = [1, 1]} : vector<2x128xf32> to vector<2x32xf32>
    %524 = math.tanh %523 : vector<2x32xf32>
    %525 = vector.extract_strided_slice %505 {offsets = [0, 96], sizes = [2, 32], strides = [1, 1]} : vector<2x128xf32> to vector<2x32xf32>
    %526 = arith.negf %525 : vector<2x32xf32>
    %527 = math.exp %526 : vector<2x32xf32>
    %cst_137 = arith.constant 1.000000e+00 : f32
    %528 = vector.broadcast %cst_137 : f32 to vector<2x32xf32>
    %529 = arith.addf %528, %527 : vector<2x32xf32>
    %530 = arith.divf %528, %529 : vector<2x32xf32>
    %531 = arith.mulf %522, %464 : vector<2x32xf32>
    %532 = arith.mulf %516, %524 : vector<2x32xf32>
    %533 = arith.addf %531, %532 : vector<2x32xf32>
    %534 = math.tanh %533 : vector<2x32xf32>
    %535 = arith.mulf %530, %534 : vector<2x32xf32>
    %536 = vector.extract_strided_slice %510 {offsets = [0, 0], sizes = [2, 32], strides = [1, 1]} : vector<2x128xf32> to vector<2x32xf32>
    %537 = arith.negf %536 : vector<2x32xf32>
    %538 = math.exp %537 : vector<2x32xf32>
    %cst_138 = arith.constant 1.000000e+00 : f32
    %539 = vector.broadcast %cst_138 : f32 to vector<2x32xf32>
    %540 = arith.addf %539, %538 : vector<2x32xf32>
    %541 = arith.divf %539, %540 : vector<2x32xf32>
    %542 = vector.extract_strided_slice %510 {offsets = [0, 32], sizes = [2, 32], strides = [1, 1]} : vector<2x128xf32> to vector<2x32xf32>
    %543 = arith.negf %542 : vector<2x32xf32>
    %544 = math.exp %543 : vector<2x32xf32>
    %cst_139 = arith.constant 1.000000e+00 : f32
    %545 = vector.broadcast %cst_139 : f32 to vector<2x32xf32>
    %546 = arith.addf %545, %544 : vector<2x32xf32>
    %547 = arith.divf %545, %546 : vector<2x32xf32>
    %548 = vector.extract_strided_slice %510 {offsets = [0, 64], sizes = [2, 32], strides = [1, 1]} : vector<2x128xf32> to vector<2x32xf32>
    %549 = math.tanh %548 : vector<2x32xf32>
    %550 = vector.extract_strided_slice %510 {offsets = [0, 96], sizes = [2, 32], strides = [1, 1]} : vector<2x128xf32> to vector<2x32xf32>
    %551 = arith.negf %550 : vector<2x32xf32>
    %552 = math.exp %551 : vector<2x32xf32>
    %cst_140 = arith.constant 1.000000e+00 : f32
    %553 = vector.broadcast %cst_140 : f32 to vector<2x32xf32>
    %554 = arith.addf %553, %552 : vector<2x32xf32>
    %555 = arith.divf %553, %554 : vector<2x32xf32>
    %556 = arith.mulf %547, %489 : vector<2x32xf32>
    %557 = arith.mulf %541, %549 : vector<2x32xf32>
    %558 = arith.addf %556, %557 : vector<2x32xf32>
    %559 = math.tanh %558 : vector<2x32xf32>
    %560 = arith.mulf %555, %559 : vector<2x32xf32>
    %c2_i32_141 = arith.constant 2 : i32
    %561 = arith.muli %c7_i32_128, %c2_i32_141 : i32
    %562 = arith.index_cast %561 : i32 to index
    %c0_142 = arith.constant 0 : index
    %563 = vector.load %arg19[%562, %c0_142] : memref<16x32xf32, #tpu.memory_space<vmem>>, vector<2x32xf32>
    tpu.vector_store %arg19[%562, %c0_142], %535 {strides = array<i32>} : memref<16x32xf32, #tpu.memory_space<vmem>>, vector<2x32xf32>,
    %c2_i32_143 = arith.constant 2 : i32
    %564 = arith.muli %498, %c2_i32_143 : i32
    %565 = arith.index_cast %564 : i32 to index
    %c0_144 = arith.constant 0 : index
    %566 = vector.load %arg20[%565, %c0_144] : memref<16x32xf32, #tpu.memory_space<vmem>>, vector<2x32xf32>
    tpu.vector_store %arg20[%565, %c0_144], %560 {strides = array<i32>} : memref<16x32xf32, #tpu.memory_space<vmem>>, vector<2x32xf32>,
    %c8_i32 = arith.constant 8 : i32
    %c0_145 = arith.constant 0 : index
    %c0_146 = arith.constant 0 : index
    %567 = vector.load %arg19[%c0_145, %c0_146] : memref<16x32xf32, #tpu.memory_space<vmem>>, vector<16x32xf32>
    %c0_147 = arith.constant 0 : index
    %c0_148 = arith.constant 0 : index
    %568 = vector.load %arg20[%c0_147, %c0_148] : memref<16x32xf32, #tpu.memory_space<vmem>>, vector<16x32xf32>
    %569 = tpu.concatenate %567, %568 in 1 : vector<16x32xf32>, vector<16x32xf32> -> vector<16x64xf32>
    %c0_149 = arith.constant 0 : index
    %c0_150 = arith.constant 0 : index
    %570 = vector.load %arg6[%c0_149, %c0_150] : memref<64x96xf32, #tpu.memory_space<vmem>>, vector<64x96xf32>
    %cst_151 = arith.constant dense<0.000000e+00> : vector<16x96xf32>
    %571 = tpu.matmul %569, %570, %cst_151 {dimension_numbers = #tpu.dot_dimension_numbers<[1], [0], [0], [1], [0, 0, 1, 1], [], []>} : vector<16x64xf32>, vector<64x96xf32>, vector<16x96xf32> -> vector<16x96xf32>
    %c0_152 = arith.constant 0 : index
    %c0_153 = arith.constant 0 : index
    %572 = vector.load %arg8[%c0_152, %c0_153] : memref<1x96xf32, #tpu.memory_space<vmem>>, vector<1x96xf32>
    %573 = vector.broadcast %572 : vector<1x96xf32> to vector<16x96xf32>
    %574 = arith.addf %571, %573 : vector<16x96xf32>
    %c0_154 = arith.constant 0 : index
    %c0_155 = arith.constant 0 : index
    %575 = vector.load %arg21[%c0_154, %c0_155] : memref<16x96xf32, #tpu.memory_space<vmem>>, vector<16x96xf32>
    tpu.vector_store %arg21[%c0_154, %c0_155], %574 {strides = array<i32>} : memref<16x96xf32, #tpu.memory_space<vmem>>, vector<16x96xf32>,
    %c0_156 = arith.constant 0 : index
    %c0_157 = arith.constant 0 : index
    %576 = vector.load %arg7[%c0_156, %c0_157] : memref<64x96xf32, #tpu.memory_space<vmem>>, vector<64x96xf32>
    %cst_158 = arith.constant dense<0.000000e+00> : vector<16x96xf32>
    %577 = tpu.matmul %569, %576, %cst_158 {dimension_numbers = #tpu.dot_dimension_numbers<[1], [0], [0], [1], [0, 0, 1, 1], [], []>} : vector<16x64xf32>, vector<64x96xf32>, vector<16x96xf32> -> vector<16x96xf32>
    %c0_159 = arith.constant 0 : index
    %c0_160 = arith.constant 0 : index
    %578 = vector.load %arg9[%c0_159, %c0_160] : memref<1x96xf32, #tpu.memory_space<vmem>>, vector<1x96xf32>
    %579 = vector.broadcast %578 : vector<1x96xf32> to vector<16x96xf32>
    %580 = arith.addf %577, %579 : vector<16x96xf32>
    %c0_161 = arith.constant 0 : index
    %c0_162 = arith.constant 0 : index
    %581 = vector.load %arg22[%c0_161, %c0_162] : memref<16x96xf32, #tpu.memory_space<vmem>>, vector<16x96xf32>
    tpu.vector_store %arg22[%c0_161, %c0_162], %580 {strides = array<i32>} : memref<16x96xf32, #tpu.memory_space<vmem>>, vector<16x96xf32>,
    %c0_163 = arith.constant 0 : index
    %c0_164 = arith.constant 0 : index
    %582 = vector.load %arg10[%c0_163, %c0_164] : memref<64x192xf32, #tpu.memory_space<vmem>>, vector<64x192xf32>
    %c0_165 = arith.constant 0 : index
    %c0_166 = arith.constant 0 : index
    %583 = vector.load %arg11[%c0_165, %c0_166] : memref<1x192xf32, #tpu.memory_space<vmem>>, vector<1x192xf32>
    %584 = vector.shape_cast %583 : vector<1x192xf32> to vector<1x192xf32>
    %585 = vector.broadcast %584 : vector<1x192xf32> to vector<2x192xf32>
    %cst_167 = arith.constant 0xFF800000 : f32
    %586 = vector.broadcast %cst_167 : f32 to vector<2x32xf32>
    %c0_i32_168 = arith.constant 0 : i32
    %c7_i32_169 = arith.constant 7 : i32
    %587 = arith.subi %c7_i32_169, %c0_i32_168 : i32
    %588 = tpu.concatenate %14, %14 in 1 : vector<2x32xf32>, vector<2x32xf32> -> vector<2x64xf32>
    %cst_170 = arith.constant dense<0.000000e+00> : vector<2x192xf32>
    %589 = tpu.matmul %588, %582, %cst_170 {dimension_numbers = #tpu.dot_dimension_numbers<[1], [0], [0], [1], [0, 0, 1, 1], [], []>} : vector<2x64xf32>, vector<64x192xf32>, vector<2x192xf32> -> vector<2x192xf32>
    %590 = arith.addf %589, %585 : vector<2x192xf32>
    %c2_i32_171 = arith.constant 2 : i32
    %591 = arith.muli %c0_i32_168, %c2_i32_171 : i32
    %592 = arith.index_cast %591 : i32 to index
    %c0_172 = arith.constant 0 : index
    %593 = vector.load %arg21[%592, %c0_172] : memref<16x96xf32, #tpu.memory_space<vmem>>, vector<2x96xf32>
    %594 = vector.extract_strided_slice %590 {offsets = [0, 0], sizes = [2, 96], strides = [1, 1]} : vector<2x192xf32> to vector<2x96xf32>
    %595 = vector.extract_strided_slice %593 {offsets = [0, 0], sizes = [2, 32], strides = [1, 1]} : vector<2x96xf32> to vector<2x32xf32>
    %596 = vector.extract_strided_slice %594 {offsets = [0, 0], sizes = [2, 32], strides = [1, 1]} : vector<2x96xf32> to vector<2x32xf32>
    %597 = arith.addf %595, %596 : vector<2x32xf32>
    %598 = arith.negf %597 : vector<2x32xf32>
    %599 = math.exp %598 : vector<2x32xf32>
    %cst_173 = arith.constant 1.000000e+00 : f32
    %600 = vector.broadcast %cst_173 : f32 to vector<2x32xf32>
    %601 = arith.addf %600, %599 : vector<2x32xf32>
    %602 = arith.divf %600, %601 : vector<2x32xf32>
    %603 = vector.extract_strided_slice %593 {offsets = [0, 32], sizes = [2, 32], strides = [1, 1]} : vector<2x96xf32> to vector<2x32xf32>
    %604 = vector.extract_strided_slice %594 {offsets = [0, 32], sizes = [2, 32], strides = [1, 1]} : vector<2x96xf32> to vector<2x32xf32>
    %605 = arith.addf %603, %604 : vector<2x32xf32>
    %606 = arith.negf %605 : vector<2x32xf32>
    %607 = math.exp %606 : vector<2x32xf32>
    %cst_174 = arith.constant 1.000000e+00 : f32
    %608 = vector.broadcast %cst_174 : f32 to vector<2x32xf32>
    %609 = arith.addf %608, %607 : vector<2x32xf32>
    %610 = arith.divf %608, %609 : vector<2x32xf32>
    %611 = vector.extract_strided_slice %593 {offsets = [0, 64], sizes = [2, 32], strides = [1, 1]} : vector<2x96xf32> to vector<2x32xf32>
    %612 = vector.extract_strided_slice %594 {offsets = [0, 64], sizes = [2, 32], strides = [1, 1]} : vector<2x96xf32> to vector<2x32xf32>
    %613 = arith.mulf %602, %612 : vector<2x32xf32>
    %614 = arith.addf %611, %613 : vector<2x32xf32>
    %615 = math.tanh %614 : vector<2x32xf32>
    %cst_175 = arith.constant 1.000000e+00 : f32
    %616 = vector.broadcast %cst_175 : f32 to vector<2x32xf32>
    %617 = arith.subf %616, %610 : vector<2x32xf32>
    %618 = arith.mulf %617, %615 : vector<2x32xf32>
    %619 = arith.mulf %610, %14 : vector<2x32xf32>
    %620 = arith.addf %618, %619 : vector<2x32xf32>
    %c2_i32_176 = arith.constant 2 : i32
    %621 = arith.muli %587, %c2_i32_176 : i32
    %622 = arith.index_cast %621 : i32 to index
    %c0_177 = arith.constant 0 : index
    %623 = vector.load %arg22[%622, %c0_177] : memref<16x96xf32, #tpu.memory_space<vmem>>, vector<2x96xf32>
    %624 = vector.extract_strided_slice %590 {offsets = [0, 96], sizes = [2, 96], strides = [1, 1]} : vector<2x192xf32> to vector<2x96xf32>
    %625 = vector.extract_strided_slice %623 {offsets = [0, 0], sizes = [2, 32], strides = [1, 1]} : vector<2x96xf32> to vector<2x32xf32>
    %626 = vector.extract_strided_slice %624 {offsets = [0, 0], sizes = [2, 32], strides = [1, 1]} : vector<2x96xf32> to vector<2x32xf32>
    %627 = arith.addf %625, %626 : vector<2x32xf32>
    %628 = arith.negf %627 : vector<2x32xf32>
    %629 = math.exp %628 : vector<2x32xf32>
    %cst_178 = arith.constant 1.000000e+00 : f32
    %630 = vector.broadcast %cst_178 : f32 to vector<2x32xf32>
    %631 = arith.addf %630, %629 : vector<2x32xf32>
    %632 = arith.divf %630, %631 : vector<2x32xf32>
    %633 = vector.extract_strided_slice %623 {offsets = [0, 32], sizes = [2, 32], strides = [1, 1]} : vector<2x96xf32> to vector<2x32xf32>
    %634 = vector.extract_strided_slice %624 {offsets = [0, 32], sizes = [2, 32], strides = [1, 1]} : vector<2x96xf32> to vector<2x32xf32>
    %635 = arith.addf %633, %634 : vector<2x32xf32>
    %636 = arith.negf %635 : vector<2x32xf32>
    %637 = math.exp %636 : vector<2x32xf32>
    %cst_179 = arith.constant 1.000000e+00 : f32
    %638 = vector.broadcast %cst_179 : f32 to vector<2x32xf32>
    %639 = arith.addf %638, %637 : vector<2x32xf32>
    %640 = arith.divf %638, %639 : vector<2x32xf32>
    %641 = vector.extract_strided_slice %623 {offsets = [0, 64], sizes = [2, 32], strides = [1, 1]} : vector<2x96xf32> to vector<2x32xf32>
    %642 = vector.extract_strided_slice %624 {offsets = [0, 64], sizes = [2, 32], strides = [1, 1]} : vector<2x96xf32> to vector<2x32xf32>
    %643 = arith.mulf %632, %642 : vector<2x32xf32>
    %644 = arith.addf %641, %643 : vector<2x32xf32>
    %645 = math.tanh %644 : vector<2x32xf32>
    %cst_180 = arith.constant 1.000000e+00 : f32
    %646 = vector.broadcast %cst_180 : f32 to vector<2x32xf32>
    %647 = arith.subf %646, %640 : vector<2x32xf32>
    %648 = arith.mulf %647, %645 : vector<2x32xf32>
    %649 = arith.mulf %640, %14 : vector<2x32xf32>
    %650 = arith.addf %648, %649 : vector<2x32xf32>
    %651 = arith.addf %14, %620 : vector<2x32xf32>
    %652 = arith.addf %14, %650 : vector<2x32xf32>
    %653 = arith.maximumf %586, %620 : vector<2x32xf32>
    %654 = arith.maximumf %586, %650 : vector<2x32xf32>
    %c1_i32_181 = arith.constant 1 : i32
    %c7_i32_182 = arith.constant 7 : i32
    %655 = arith.subi %c7_i32_182, %c1_i32_181 : i32
    %656 = tpu.concatenate %620, %650 in 1 : vector<2x32xf32>, vector<2x32xf32> -> vector<2x64xf32>
    %cst_183 = arith.constant dense<0.000000e+00> : vector<2x192xf32>
    %657 = tpu.matmul %656, %582, %cst_183 {dimension_numbers = #tpu.dot_dimension_numbers<[1], [0], [0], [1], [0, 0, 1, 1], [], []>} : vector<2x64xf32>, vector<64x192xf32>, vector<2x192xf32> -> vector<2x192xf32>
    %658 = arith.addf %657, %585 : vector<2x192xf32>
    %c2_i32_184 = arith.constant 2 : i32
    %659 = arith.muli %c1_i32_181, %c2_i32_184 : i32
    %660 = arith.index_cast %659 : i32 to index
    %c0_185 = arith.constant 0 : index
    %661 = vector.load %arg21[%660, %c0_185] : memref<16x96xf32, #tpu.memory_space<vmem>>, vector<2x96xf32>
    %662 = vector.extract_strided_slice %658 {offsets = [0, 0], sizes = [2, 96], strides = [1, 1]} : vector<2x192xf32> to vector<2x96xf32>
    %663 = vector.extract_strided_slice %661 {offsets = [0, 0], sizes = [2, 32], strides = [1, 1]} : vector<2x96xf32> to vector<2x32xf32>
    %664 = vector.extract_strided_slice %662 {offsets = [0, 0], sizes = [2, 32], strides = [1, 1]} : vector<2x96xf32> to vector<2x32xf32>
    %665 = arith.addf %663, %664 : vector<2x32xf32>
    %666 = arith.negf %665 : vector<2x32xf32>
    %667 = math.exp %666 : vector<2x32xf32>
    %cst_186 = arith.constant 1.000000e+00 : f32
    %668 = vector.broadcast %cst_186 : f32 to vector<2x32xf32>
    %669 = arith.addf %668, %667 : vector<2x32xf32>
    %670 = arith.divf %668, %669 : vector<2x32xf32>
    %671 = vector.extract_strided_slice %661 {offsets = [0, 32], sizes = [2, 32], strides = [1, 1]} : vector<2x96xf32> to vector<2x32xf32>
    %672 = vector.extract_strided_slice %662 {offsets = [0, 32], sizes = [2, 32], strides = [1, 1]} : vector<2x96xf32> to vector<2x32xf32>
    %673 = arith.addf %671, %672 : vector<2x32xf32>
    %674 = arith.negf %673 : vector<2x32xf32>
    %675 = math.exp %674 : vector<2x32xf32>
    %cst_187 = arith.constant 1.000000e+00 : f32
    %676 = vector.broadcast %cst_187 : f32 to vector<2x32xf32>
    %677 = arith.addf %676, %675 : vector<2x32xf32>
    %678 = arith.divf %676, %677 : vector<2x32xf32>
    %679 = vector.extract_strided_slice %661 {offsets = [0, 64], sizes = [2, 32], strides = [1, 1]} : vector<2x96xf32> to vector<2x32xf32>
    %680 = vector.extract_strided_slice %662 {offsets = [0, 64], sizes = [2, 32], strides = [1, 1]} : vector<2x96xf32> to vector<2x32xf32>
    %681 = arith.mulf %670, %680 : vector<2x32xf32>
    %682 = arith.addf %679, %681 : vector<2x32xf32>
    %683 = math.tanh %682 : vector<2x32xf32>
    %cst_188 = arith.constant 1.000000e+00 : f32
    %684 = vector.broadcast %cst_188 : f32 to vector<2x32xf32>
    %685 = arith.subf %684, %678 : vector<2x32xf32>
    %686 = arith.mulf %685, %683 : vector<2x32xf32>
    %687 = arith.mulf %678, %620 : vector<2x32xf32>
    %688 = arith.addf %686, %687 : vector<2x32xf32>
    %c2_i32_189 = arith.constant 2 : i32
    %689 = arith.muli %655, %c2_i32_189 : i32
    %690 = arith.index_cast %689 : i32 to index
    %c0_190 = arith.constant 0 : index
    %691 = vector.load %arg22[%690, %c0_190] : memref<16x96xf32, #tpu.memory_space<vmem>>, vector<2x96xf32>
    %692 = vector.extract_strided_slice %658 {offsets = [0, 96], sizes = [2, 96], strides = [1, 1]} : vector<2x192xf32> to vector<2x96xf32>
    %693 = vector.extract_strided_slice %691 {offsets = [0, 0], sizes = [2, 32], strides = [1, 1]} : vector<2x96xf32> to vector<2x32xf32>
    %694 = vector.extract_strided_slice %692 {offsets = [0, 0], sizes = [2, 32], strides = [1, 1]} : vector<2x96xf32> to vector<2x32xf32>
    %695 = arith.addf %693, %694 : vector<2x32xf32>
    %696 = arith.negf %695 : vector<2x32xf32>
    %697 = math.exp %696 : vector<2x32xf32>
    %cst_191 = arith.constant 1.000000e+00 : f32
    %698 = vector.broadcast %cst_191 : f32 to vector<2x32xf32>
    %699 = arith.addf %698, %697 : vector<2x32xf32>
    %700 = arith.divf %698, %699 : vector<2x32xf32>
    %701 = vector.extract_strided_slice %691 {offsets = [0, 32], sizes = [2, 32], strides = [1, 1]} : vector<2x96xf32> to vector<2x32xf32>
    %702 = vector.extract_strided_slice %692 {offsets = [0, 32], sizes = [2, 32], strides = [1, 1]} : vector<2x96xf32> to vector<2x32xf32>
    %703 = arith.addf %701, %702 : vector<2x32xf32>
    %704 = arith.negf %703 : vector<2x32xf32>
    %705 = math.exp %704 : vector<2x32xf32>
    %cst_192 = arith.constant 1.000000e+00 : f32
    %706 = vector.broadcast %cst_192 : f32 to vector<2x32xf32>
    %707 = arith.addf %706, %705 : vector<2x32xf32>
    %708 = arith.divf %706, %707 : vector<2x32xf32>
    %709 = vector.extract_strided_slice %691 {offsets = [0, 64], sizes = [2, 32], strides = [1, 1]} : vector<2x96xf32> to vector<2x32xf32>
    %710 = vector.extract_strided_slice %692 {offsets = [0, 64], sizes = [2, 32], strides = [1, 1]} : vector<2x96xf32> to vector<2x32xf32>
    %711 = arith.mulf %700, %710 : vector<2x32xf32>
    %712 = arith.addf %709, %711 : vector<2x32xf32>
    %713 = math.tanh %712 : vector<2x32xf32>
    %cst_193 = arith.constant 1.000000e+00 : f32
    %714 = vector.broadcast %cst_193 : f32 to vector<2x32xf32>
    %715 = arith.subf %714, %708 : vector<2x32xf32>
    %716 = arith.mulf %715, %713 : vector<2x32xf32>
    %717 = arith.mulf %708, %650 : vector<2x32xf32>
    %718 = arith.addf %716, %717 : vector<2x32xf32>
    %719 = arith.addf %651, %688 : vector<2x32xf32>
    %720 = arith.addf %652, %718 : vector<2x32xf32>
    %721 = arith.maximumf %653, %688 : vector<2x32xf32>
    %722 = arith.maximumf %654, %718 : vector<2x32xf32>
    %c2_i32_194 = arith.constant 2 : i32
    %c7_i32_195 = arith.constant 7 : i32
    %723 = arith.subi %c7_i32_195, %c2_i32_194 : i32
    %724 = tpu.concatenate %688, %718 in 1 : vector<2x32xf32>, vector<2x32xf32> -> vector<2x64xf32>
    %cst_196 = arith.constant dense<0.000000e+00> : vector<2x192xf32>
    %725 = tpu.matmul %724, %582, %cst_196 {dimension_numbers = #tpu.dot_dimension_numbers<[1], [0], [0], [1], [0, 0, 1, 1], [], []>} : vector<2x64xf32>, vector<64x192xf32>, vector<2x192xf32> -> vector<2x192xf32>
    %726 = arith.addf %725, %585 : vector<2x192xf32>
    %c2_i32_197 = arith.constant 2 : i32
    %727 = arith.muli %c2_i32_194, %c2_i32_197 : i32
    %728 = arith.index_cast %727 : i32 to index
    %c0_198 = arith.constant 0 : index
    %729 = vector.load %arg21[%728, %c0_198] : memref<16x96xf32, #tpu.memory_space<vmem>>, vector<2x96xf32>
    %730 = vector.extract_strided_slice %726 {offsets = [0, 0], sizes = [2, 96], strides = [1, 1]} : vector<2x192xf32> to vector<2x96xf32>
    %731 = vector.extract_strided_slice %729 {offsets = [0, 0], sizes = [2, 32], strides = [1, 1]} : vector<2x96xf32> to vector<2x32xf32>
    %732 = vector.extract_strided_slice %730 {offsets = [0, 0], sizes = [2, 32], strides = [1, 1]} : vector<2x96xf32> to vector<2x32xf32>
    %733 = arith.addf %731, %732 : vector<2x32xf32>
    %734 = arith.negf %733 : vector<2x32xf32>
    %735 = math.exp %734 : vector<2x32xf32>
    %cst_199 = arith.constant 1.000000e+00 : f32
    %736 = vector.broadcast %cst_199 : f32 to vector<2x32xf32>
    %737 = arith.addf %736, %735 : vector<2x32xf32>
    %738 = arith.divf %736, %737 : vector<2x32xf32>
    %739 = vector.extract_strided_slice %729 {offsets = [0, 32], sizes = [2, 32], strides = [1, 1]} : vector<2x96xf32> to vector<2x32xf32>
    %740 = vector.extract_strided_slice %730 {offsets = [0, 32], sizes = [2, 32], strides = [1, 1]} : vector<2x96xf32> to vector<2x32xf32>
    %741 = arith.addf %739, %740 : vector<2x32xf32>
    %742 = arith.negf %741 : vector<2x32xf32>
    %743 = math.exp %742 : vector<2x32xf32>
    %cst_200 = arith.constant 1.000000e+00 : f32
    %744 = vector.broadcast %cst_200 : f32 to vector<2x32xf32>
    %745 = arith.addf %744, %743 : vector<2x32xf32>
    %746 = arith.divf %744, %745 : vector<2x32xf32>
    %747 = vector.extract_strided_slice %729 {offsets = [0, 64], sizes = [2, 32], strides = [1, 1]} : vector<2x96xf32> to vector<2x32xf32>
    %748 = vector.extract_strided_slice %730 {offsets = [0, 64], sizes = [2, 32], strides = [1, 1]} : vector<2x96xf32> to vector<2x32xf32>
    %749 = arith.mulf %738, %748 : vector<2x32xf32>
    %750 = arith.addf %747, %749 : vector<2x32xf32>
    %751 = math.tanh %750 : vector<2x32xf32>
    %cst_201 = arith.constant 1.000000e+00 : f32
    %752 = vector.broadcast %cst_201 : f32 to vector<2x32xf32>
    %753 = arith.subf %752, %746 : vector<2x32xf32>
    %754 = arith.mulf %753, %751 : vector<2x32xf32>
    %755 = arith.mulf %746, %688 : vector<2x32xf32>
    %756 = arith.addf %754, %755 : vector<2x32xf32>
    %c2_i32_202 = arith.constant 2 : i32
    %757 = arith.muli %723, %c2_i32_202 : i32
    %758 = arith.index_cast %757 : i32 to index
    %c0_203 = arith.constant 0 : index
    %759 = vector.load %arg22[%758, %c0_203] : memref<16x96xf32, #tpu.memory_space<vmem>>, vector<2x96xf32>
    %760 = vector.extract_strided_slice %726 {offsets = [0, 96], sizes = [2, 96], strides = [1, 1]} : vector<2x192xf32> to vector<2x96xf32>
    %761 = vector.extract_strided_slice %759 {offsets = [0, 0], sizes = [2, 32], strides = [1, 1]} : vector<2x96xf32> to vector<2x32xf32>
    %762 = vector.extract_strided_slice %760 {offsets = [0, 0], sizes = [2, 32], strides = [1, 1]} : vector<2x96xf32> to vector<2x32xf32>
    %763 = arith.addf %761, %762 : vector<2x32xf32>
    %764 = arith.negf %763 : vector<2x32xf32>
    %765 = math.exp %764 : vector<2x32xf32>
    %cst_204 = arith.constant 1.000000e+00 : f32
    %766 = vector.broadcast %cst_204 : f32 to vector<2x32xf32>
    %767 = arith.addf %766, %765 : vector<2x32xf32>
    %768 = arith.divf %766, %767 : vector<2x32xf32>
    %769 = vector.extract_strided_slice %759 {offsets = [0, 32], sizes = [2, 32], strides = [1, 1]} : vector<2x96xf32> to vector<2x32xf32>
    %770 = vector.extract_strided_slice %760 {offsets = [0, 32], sizes = [2, 32], strides = [1, 1]} : vector<2x96xf32> to vector<2x32xf32>
    %771 = arith.addf %769, %770 : vector<2x32xf32>
    %772 = arith.negf %771 : vector<2x32xf32>
    %773 = math.exp %772 : vector<2x32xf32>
    %cst_205 = arith.constant 1.000000e+00 : f32
    %774 = vector.broadcast %cst_205 : f32 to vector<2x32xf32>
    %775 = arith.addf %774, %773 : vector<2x32xf32>
    %776 = arith.divf %774, %775 : vector<2x32xf32>
    %777 = vector.extract_strided_slice %759 {offsets = [0, 64], sizes = [2, 32], strides = [1, 1]} : vector<2x96xf32> to vector<2x32xf32>
    %778 = vector.extract_strided_slice %760 {offsets = [0, 64], sizes = [2, 32], strides = [1, 1]} : vector<2x96xf32> to vector<2x32xf32>
    %779 = arith.mulf %768, %778 : vector<2x32xf32>
    %780 = arith.addf %777, %779 : vector<2x32xf32>
    %781 = math.tanh %780 : vector<2x32xf32>
    %cst_206 = arith.constant 1.000000e+00 : f32
    %782 = vector.broadcast %cst_206 : f32 to vector<2x32xf32>
    %783 = arith.subf %782, %776 : vector<2x32xf32>
    %784 = arith.mulf %783, %781 : vector<2x32xf32>
    %785 = arith.mulf %776, %718 : vector<2x32xf32>
    %786 = arith.addf %784, %785 : vector<2x32xf32>
    %787 = arith.addf %719, %756 : vector<2x32xf32>
    %788 = arith.addf %720, %786 : vector<2x32xf32>
    %789 = arith.maximumf %721, %756 : vector<2x32xf32>
    %790 = arith.maximumf %722, %786 : vector<2x32xf32>
    %c3_i32_207 = arith.constant 3 : i32
    %c7_i32_208 = arith.constant 7 : i32
    %791 = arith.subi %c7_i32_208, %c3_i32_207 : i32
    %792 = tpu.concatenate %756, %786 in 1 : vector<2x32xf32>, vector<2x32xf32> -> vector<2x64xf32>
    %cst_209 = arith.constant dense<0.000000e+00> : vector<2x192xf32>
    %793 = tpu.matmul %792, %582, %cst_209 {dimension_numbers = #tpu.dot_dimension_numbers<[1], [0], [0], [1], [0, 0, 1, 1], [], []>} : vector<2x64xf32>, vector<64x192xf32>, vector<2x192xf32> -> vector<2x192xf32>
    %794 = arith.addf %793, %585 : vector<2x192xf32>
    %c2_i32_210 = arith.constant 2 : i32
    %795 = arith.muli %c3_i32_207, %c2_i32_210 : i32
    %796 = arith.index_cast %795 : i32 to index
    %c0_211 = arith.constant 0 : index
    %797 = vector.load %arg21[%796, %c0_211] : memref<16x96xf32, #tpu.memory_space<vmem>>, vector<2x96xf32>
    %798 = vector.extract_strided_slice %794 {offsets = [0, 0], sizes = [2, 96], strides = [1, 1]} : vector<2x192xf32> to vector<2x96xf32>
    %799 = vector.extract_strided_slice %797 {offsets = [0, 0], sizes = [2, 32], strides = [1, 1]} : vector<2x96xf32> to vector<2x32xf32>
    %800 = vector.extract_strided_slice %798 {offsets = [0, 0], sizes = [2, 32], strides = [1, 1]} : vector<2x96xf32> to vector<2x32xf32>
    %801 = arith.addf %799, %800 : vector<2x32xf32>
    %802 = arith.negf %801 : vector<2x32xf32>
    %803 = math.exp %802 : vector<2x32xf32>
    %cst_212 = arith.constant 1.000000e+00 : f32
    %804 = vector.broadcast %cst_212 : f32 to vector<2x32xf32>
    %805 = arith.addf %804, %803 : vector<2x32xf32>
    %806 = arith.divf %804, %805 : vector<2x32xf32>
    %807 = vector.extract_strided_slice %797 {offsets = [0, 32], sizes = [2, 32], strides = [1, 1]} : vector<2x96xf32> to vector<2x32xf32>
    %808 = vector.extract_strided_slice %798 {offsets = [0, 32], sizes = [2, 32], strides = [1, 1]} : vector<2x96xf32> to vector<2x32xf32>
    %809 = arith.addf %807, %808 : vector<2x32xf32>
    %810 = arith.negf %809 : vector<2x32xf32>
    %811 = math.exp %810 : vector<2x32xf32>
    %cst_213 = arith.constant 1.000000e+00 : f32
    %812 = vector.broadcast %cst_213 : f32 to vector<2x32xf32>
    %813 = arith.addf %812, %811 : vector<2x32xf32>
    %814 = arith.divf %812, %813 : vector<2x32xf32>
    %815 = vector.extract_strided_slice %797 {offsets = [0, 64], sizes = [2, 32], strides = [1, 1]} : vector<2x96xf32> to vector<2x32xf32>
    %816 = vector.extract_strided_slice %798 {offsets = [0, 64], sizes = [2, 32], strides = [1, 1]} : vector<2x96xf32> to vector<2x32xf32>
    %817 = arith.mulf %806, %816 : vector<2x32xf32>
    %818 = arith.addf %815, %817 : vector<2x32xf32>
    %819 = math.tanh %818 : vector<2x32xf32>
    %cst_214 = arith.constant 1.000000e+00 : f32
    %820 = vector.broadcast %cst_214 : f32 to vector<2x32xf32>
    %821 = arith.subf %820, %814 : vector<2x32xf32>
    %822 = arith.mulf %821, %819 : vector<2x32xf32>
    %823 = arith.mulf %814, %756 : vector<2x32xf32>
    %824 = arith.addf %822, %823 : vector<2x32xf32>
    %c2_i32_215 = arith.constant 2 : i32
    %825 = arith.muli %791, %c2_i32_215 : i32
    %826 = arith.index_cast %825 : i32 to index
    %c0_216 = arith.constant 0 : index
    %827 = vector.load %arg22[%826, %c0_216] : memref<16x96xf32, #tpu.memory_space<vmem>>, vector<2x96xf32>
    %828 = vector.extract_strided_slice %794 {offsets = [0, 96], sizes = [2, 96], strides = [1, 1]} : vector<2x192xf32> to vector<2x96xf32>
    %829 = vector.extract_strided_slice %827 {offsets = [0, 0], sizes = [2, 32], strides = [1, 1]} : vector<2x96xf32> to vector<2x32xf32>
    %830 = vector.extract_strided_slice %828 {offsets = [0, 0], sizes = [2, 32], strides = [1, 1]} : vector<2x96xf32> to vector<2x32xf32>
    %831 = arith.addf %829, %830 : vector<2x32xf32>
    %832 = arith.negf %831 : vector<2x32xf32>
    %833 = math.exp %832 : vector<2x32xf32>
    %cst_217 = arith.constant 1.000000e+00 : f32
    %834 = vector.broadcast %cst_217 : f32 to vector<2x32xf32>
    %835 = arith.addf %834, %833 : vector<2x32xf32>
    %836 = arith.divf %834, %835 : vector<2x32xf32>
    %837 = vector.extract_strided_slice %827 {offsets = [0, 32], sizes = [2, 32], strides = [1, 1]} : vector<2x96xf32> to vector<2x32xf32>
    %838 = vector.extract_strided_slice %828 {offsets = [0, 32], sizes = [2, 32], strides = [1, 1]} : vector<2x96xf32> to vector<2x32xf32>
    %839 = arith.addf %837, %838 : vector<2x32xf32>
    %840 = arith.negf %839 : vector<2x32xf32>
    %841 = math.exp %840 : vector<2x32xf32>
    %cst_218 = arith.constant 1.000000e+00 : f32
    %842 = vector.broadcast %cst_218 : f32 to vector<2x32xf32>
    %843 = arith.addf %842, %841 : vector<2x32xf32>
    %844 = arith.divf %842, %843 : vector<2x32xf32>
    %845 = vector.extract_strided_slice %827 {offsets = [0, 64], sizes = [2, 32], strides = [1, 1]} : vector<2x96xf32> to vector<2x32xf32>
    %846 = vector.extract_strided_slice %828 {offsets = [0, 64], sizes = [2, 32], strides = [1, 1]} : vector<2x96xf32> to vector<2x32xf32>
    %847 = arith.mulf %836, %846 : vector<2x32xf32>
    %848 = arith.addf %845, %847 : vector<2x32xf32>
    %849 = math.tanh %848 : vector<2x32xf32>
    %cst_219 = arith.constant 1.000000e+00 : f32
    %850 = vector.broadcast %cst_219 : f32 to vector<2x32xf32>
    %851 = arith.subf %850, %844 : vector<2x32xf32>
    %852 = arith.mulf %851, %849 : vector<2x32xf32>
    %853 = arith.mulf %844, %786 : vector<2x32xf32>
    %854 = arith.addf %852, %853 : vector<2x32xf32>
    %855 = arith.addf %787, %824 : vector<2x32xf32>
    %856 = arith.addf %788, %854 : vector<2x32xf32>
    %857 = arith.maximumf %789, %824 : vector<2x32xf32>
    %858 = arith.maximumf %790, %854 : vector<2x32xf32>
    %c4_i32_220 = arith.constant 4 : i32
    %c7_i32_221 = arith.constant 7 : i32
    %859 = arith.subi %c7_i32_221, %c4_i32_220 : i32
    %860 = tpu.concatenate %824, %854 in 1 : vector<2x32xf32>, vector<2x32xf32> -> vector<2x64xf32>
    %cst_222 = arith.constant dense<0.000000e+00> : vector<2x192xf32>
    %861 = tpu.matmul %860, %582, %cst_222 {dimension_numbers = #tpu.dot_dimension_numbers<[1], [0], [0], [1], [0, 0, 1, 1], [], []>} : vector<2x64xf32>, vector<64x192xf32>, vector<2x192xf32> -> vector<2x192xf32>
    %862 = arith.addf %861, %585 : vector<2x192xf32>
    %c2_i32_223 = arith.constant 2 : i32
    %863 = arith.muli %c4_i32_220, %c2_i32_223 : i32
    %864 = arith.index_cast %863 : i32 to index
    %c0_224 = arith.constant 0 : index
    %865 = vector.load %arg21[%864, %c0_224] : memref<16x96xf32, #tpu.memory_space<vmem>>, vector<2x96xf32>
    %866 = vector.extract_strided_slice %862 {offsets = [0, 0], sizes = [2, 96], strides = [1, 1]} : vector<2x192xf32> to vector<2x96xf32>
    %867 = vector.extract_strided_slice %865 {offsets = [0, 0], sizes = [2, 32], strides = [1, 1]} : vector<2x96xf32> to vector<2x32xf32>
    %868 = vector.extract_strided_slice %866 {offsets = [0, 0], sizes = [2, 32], strides = [1, 1]} : vector<2x96xf32> to vector<2x32xf32>
    %869 = arith.addf %867, %868 : vector<2x32xf32>
    %870 = arith.negf %869 : vector<2x32xf32>
    %871 = math.exp %870 : vector<2x32xf32>
    %cst_225 = arith.constant 1.000000e+00 : f32
    %872 = vector.broadcast %cst_225 : f32 to vector<2x32xf32>
    %873 = arith.addf %872, %871 : vector<2x32xf32>
    %874 = arith.divf %872, %873 : vector<2x32xf32>
    %875 = vector.extract_strided_slice %865 {offsets = [0, 32], sizes = [2, 32], strides = [1, 1]} : vector<2x96xf32> to vector<2x32xf32>
    %876 = vector.extract_strided_slice %866 {offsets = [0, 32], sizes = [2, 32], strides = [1, 1]} : vector<2x96xf32> to vector<2x32xf32>
    %877 = arith.addf %875, %876 : vector<2x32xf32>
    %878 = arith.negf %877 : vector<2x32xf32>
    %879 = math.exp %878 : vector<2x32xf32>
    %cst_226 = arith.constant 1.000000e+00 : f32
    %880 = vector.broadcast %cst_226 : f32 to vector<2x32xf32>
    %881 = arith.addf %880, %879 : vector<2x32xf32>
    %882 = arith.divf %880, %881 : vector<2x32xf32>
    %883 = vector.extract_strided_slice %865 {offsets = [0, 64], sizes = [2, 32], strides = [1, 1]} : vector<2x96xf32> to vector<2x32xf32>
    %884 = vector.extract_strided_slice %866 {offsets = [0, 64], sizes = [2, 32], strides = [1, 1]} : vector<2x96xf32> to vector<2x32xf32>
    %885 = arith.mulf %874, %884 : vector<2x32xf32>
    %886 = arith.addf %883, %885 : vector<2x32xf32>
    %887 = math.tanh %886 : vector<2x32xf32>
    %cst_227 = arith.constant 1.000000e+00 : f32
    %888 = vector.broadcast %cst_227 : f32 to vector<2x32xf32>
    %889 = arith.subf %888, %882 : vector<2x32xf32>
    %890 = arith.mulf %889, %887 : vector<2x32xf32>
    %891 = arith.mulf %882, %824 : vector<2x32xf32>
    %892 = arith.addf %890, %891 : vector<2x32xf32>
    %c2_i32_228 = arith.constant 2 : i32
    %893 = arith.muli %859, %c2_i32_228 : i32
    %894 = arith.index_cast %893 : i32 to index
    %c0_229 = arith.constant 0 : index
    %895 = vector.load %arg22[%894, %c0_229] : memref<16x96xf32, #tpu.memory_space<vmem>>, vector<2x96xf32>
    %896 = vector.extract_strided_slice %862 {offsets = [0, 96], sizes = [2, 96], strides = [1, 1]} : vector<2x192xf32> to vector<2x96xf32>
    %897 = vector.extract_strided_slice %895 {offsets = [0, 0], sizes = [2, 32], strides = [1, 1]} : vector<2x96xf32> to vector<2x32xf32>
    %898 = vector.extract_strided_slice %896 {offsets = [0, 0], sizes = [2, 32], strides = [1, 1]} : vector<2x96xf32> to vector<2x32xf32>
    %899 = arith.addf %897, %898 : vector<2x32xf32>
    %900 = arith.negf %899 : vector<2x32xf32>
    %901 = math.exp %900 : vector<2x32xf32>
    %cst_230 = arith.constant 1.000000e+00 : f32
    %902 = vector.broadcast %cst_230 : f32 to vector<2x32xf32>
    %903 = arith.addf %902, %901 : vector<2x32xf32>
    %904 = arith.divf %902, %903 : vector<2x32xf32>
    %905 = vector.extract_strided_slice %895 {offsets = [0, 32], sizes = [2, 32], strides = [1, 1]} : vector<2x96xf32> to vector<2x32xf32>
    %906 = vector.extract_strided_slice %896 {offsets = [0, 32], sizes = [2, 32], strides = [1, 1]} : vector<2x96xf32> to vector<2x32xf32>
    %907 = arith.addf %905, %906 : vector<2x32xf32>
    %908 = arith.negf %907 : vector<2x32xf32>
    %909 = math.exp %908 : vector<2x32xf32>
    %cst_231 = arith.constant 1.000000e+00 : f32
    %910 = vector.broadcast %cst_231 : f32 to vector<2x32xf32>
    %911 = arith.addf %910, %909 : vector<2x32xf32>
    %912 = arith.divf %910, %911 : vector<2x32xf32>
    %913 = vector.extract_strided_slice %895 {offsets = [0, 64], sizes = [2, 32], strides = [1, 1]} : vector<2x96xf32> to vector<2x32xf32>
    %914 = vector.extract_strided_slice %896 {offsets = [0, 64], sizes = [2, 32], strides = [1, 1]} : vector<2x96xf32> to vector<2x32xf32>
    %915 = arith.mulf %904, %914 : vector<2x32xf32>
    %916 = arith.addf %913, %915 : vector<2x32xf32>
    %917 = math.tanh %916 : vector<2x32xf32>
    %cst_232 = arith.constant 1.000000e+00 : f32
    %918 = vector.broadcast %cst_232 : f32 to vector<2x32xf32>
    %919 = arith.subf %918, %912 : vector<2x32xf32>
    %920 = arith.mulf %919, %917 : vector<2x32xf32>
    %921 = arith.mulf %912, %854 : vector<2x32xf32>
    %922 = arith.addf %920, %921 : vector<2x32xf32>
    %923 = arith.addf %855, %892 : vector<2x32xf32>
    %924 = arith.addf %856, %922 : vector<2x32xf32>
    %925 = arith.maximumf %857, %892 : vector<2x32xf32>
    %926 = arith.maximumf %858, %922 : vector<2x32xf32>
    %c5_i32_233 = arith.constant 5 : i32
    %c7_i32_234 = arith.constant 7 : i32
    %927 = arith.subi %c7_i32_234, %c5_i32_233 : i32
    %928 = tpu.concatenate %892, %922 in 1 : vector<2x32xf32>, vector<2x32xf32> -> vector<2x64xf32>
    %cst_235 = arith.constant dense<0.000000e+00> : vector<2x192xf32>
    %929 = tpu.matmul %928, %582, %cst_235 {dimension_numbers = #tpu.dot_dimension_numbers<[1], [0], [0], [1], [0, 0, 1, 1], [], []>} : vector<2x64xf32>, vector<64x192xf32>, vector<2x192xf32> -> vector<2x192xf32>
    %930 = arith.addf %929, %585 : vector<2x192xf32>
    %c2_i32_236 = arith.constant 2 : i32
    %931 = arith.muli %c5_i32_233, %c2_i32_236 : i32
    %932 = arith.index_cast %931 : i32 to index
    %c0_237 = arith.constant 0 : index
    %933 = vector.load %arg21[%932, %c0_237] : memref<16x96xf32, #tpu.memory_space<vmem>>, vector<2x96xf32>
    %934 = vector.extract_strided_slice %930 {offsets = [0, 0], sizes = [2, 96], strides = [1, 1]} : vector<2x192xf32> to vector<2x96xf32>
    %935 = vector.extract_strided_slice %933 {offsets = [0, 0], sizes = [2, 32], strides = [1, 1]} : vector<2x96xf32> to vector<2x32xf32>
    %936 = vector.extract_strided_slice %934 {offsets = [0, 0], sizes = [2, 32], strides = [1, 1]} : vector<2x96xf32> to vector<2x32xf32>
    %937 = arith.addf %935, %936 : vector<2x32xf32>
    %938 = arith.negf %937 : vector<2x32xf32>
    %939 = math.exp %938 : vector<2x32xf32>
    %cst_238 = arith.constant 1.000000e+00 : f32
    %940 = vector.broadcast %cst_238 : f32 to vector<2x32xf32>
    %941 = arith.addf %940, %939 : vector<2x32xf32>
    %942 = arith.divf %940, %941 : vector<2x32xf32>
    %943 = vector.extract_strided_slice %933 {offsets = [0, 32], sizes = [2, 32], strides = [1, 1]} : vector<2x96xf32> to vector<2x32xf32>
    %944 = vector.extract_strided_slice %934 {offsets = [0, 32], sizes = [2, 32], strides = [1, 1]} : vector<2x96xf32> to vector<2x32xf32>
    %945 = arith.addf %943, %944 : vector<2x32xf32>
    %946 = arith.negf %945 : vector<2x32xf32>
    %947 = math.exp %946 : vector<2x32xf32>
    %cst_239 = arith.constant 1.000000e+00 : f32
    %948 = vector.broadcast %cst_239 : f32 to vector<2x32xf32>
    %949 = arith.addf %948, %947 : vector<2x32xf32>
    %950 = arith.divf %948, %949 : vector<2x32xf32>
    %951 = vector.extract_strided_slice %933 {offsets = [0, 64], sizes = [2, 32], strides = [1, 1]} : vector<2x96xf32> to vector<2x32xf32>
    %952 = vector.extract_strided_slice %934 {offsets = [0, 64], sizes = [2, 32], strides = [1, 1]} : vector<2x96xf32> to vector<2x32xf32>
    %953 = arith.mulf %942, %952 : vector<2x32xf32>
    %954 = arith.addf %951, %953 : vector<2x32xf32>
    %955 = math.tanh %954 : vector<2x32xf32>
    %cst_240 = arith.constant 1.000000e+00 : f32
    %956 = vector.broadcast %cst_240 : f32 to vector<2x32xf32>
    %957 = arith.subf %956, %950 : vector<2x32xf32>
    %958 = arith.mulf %957, %955 : vector<2x32xf32>
    %959 = arith.mulf %950, %892 : vector<2x32xf32>
    %960 = arith.addf %958, %959 : vector<2x32xf32>
    %c2_i32_241 = arith.constant 2 : i32
    %961 = arith.muli %927, %c2_i32_241 : i32
    %962 = arith.index_cast %961 : i32 to index
    %c0_242 = arith.constant 0 : index
    %963 = vector.load %arg22[%962, %c0_242] : memref<16x96xf32, #tpu.memory_space<vmem>>, vector<2x96xf32>
    %964 = vector.extract_strided_slice %930 {offsets = [0, 96], sizes = [2, 96], strides = [1, 1]} : vector<2x192xf32> to vector<2x96xf32>
    %965 = vector.extract_strided_slice %963 {offsets = [0, 0], sizes = [2, 32], strides = [1, 1]} : vector<2x96xf32> to vector<2x32xf32>
    %966 = vector.extract_strided_slice %964 {offsets = [0, 0], sizes = [2, 32], strides = [1, 1]} : vector<2x96xf32> to vector<2x32xf32>
    %967 = arith.addf %965, %966 : vector<2x32xf32>
    %968 = arith.negf %967 : vector<2x32xf32>
    %969 = math.exp %968 : vector<2x32xf32>
    %cst_243 = arith.constant 1.000000e+00 : f32
    %970 = vector.broadcast %cst_243 : f32 to vector<2x32xf32>
    %971 = arith.addf %970, %969 : vector<2x32xf32>
    %972 = arith.divf %970, %971 : vector<2x32xf32>
    %973 = vector.extract_strided_slice %963 {offsets = [0, 32], sizes = [2, 32], strides = [1, 1]} : vector<2x96xf32> to vector<2x32xf32>
    %974 = vector.extract_strided_slice %964 {offsets = [0, 32], sizes = [2, 32], strides = [1, 1]} : vector<2x96xf32> to vector<2x32xf32>
    %975 = arith.addf %973, %974 : vector<2x32xf32>
    %976 = arith.negf %975 : vector<2x32xf32>
    %977 = math.exp %976 : vector<2x32xf32>
    %cst_244 = arith.constant 1.000000e+00 : f32
    %978 = vector.broadcast %cst_244 : f32 to vector<2x32xf32>
    %979 = arith.addf %978, %977 : vector<2x32xf32>
    %980 = arith.divf %978, %979 : vector<2x32xf32>
    %981 = vector.extract_strided_slice %963 {offsets = [0, 64], sizes = [2, 32], strides = [1, 1]} : vector<2x96xf32> to vector<2x32xf32>
    %982 = vector.extract_strided_slice %964 {offsets = [0, 64], sizes = [2, 32], strides = [1, 1]} : vector<2x96xf32> to vector<2x32xf32>
    %983 = arith.mulf %972, %982 : vector<2x32xf32>
    %984 = arith.addf %981, %983 : vector<2x32xf32>
    %985 = math.tanh %984 : vector<2x32xf32>
    %cst_245 = arith.constant 1.000000e+00 : f32
    %986 = vector.broadcast %cst_245 : f32 to vector<2x32xf32>
    %987 = arith.subf %986, %980 : vector<2x32xf32>
    %988 = arith.mulf %987, %985 : vector<2x32xf32>
    %989 = arith.mulf %980, %922 : vector<2x32xf32>
    %990 = arith.addf %988, %989 : vector<2x32xf32>
    %991 = arith.addf %923, %960 : vector<2x32xf32>
    %992 = arith.addf %924, %990 : vector<2x32xf32>
    %993 = arith.maximumf %925, %960 : vector<2x32xf32>
    %994 = arith.maximumf %926, %990 : vector<2x32xf32>
    %c6_i32_246 = arith.constant 6 : i32
    %c7_i32_247 = arith.constant 7 : i32
    %995 = arith.subi %c7_i32_247, %c6_i32_246 : i32
    %996 = tpu.concatenate %960, %990 in 1 : vector<2x32xf32>, vector<2x32xf32> -> vector<2x64xf32>
    %cst_248 = arith.constant dense<0.000000e+00> : vector<2x192xf32>
    %997 = tpu.matmul %996, %582, %cst_248 {dimension_numbers = #tpu.dot_dimension_numbers<[1], [0], [0], [1], [0, 0, 1, 1], [], []>} : vector<2x64xf32>, vector<64x192xf32>, vector<2x192xf32> -> vector<2x192xf32>
    %998 = arith.addf %997, %585 : vector<2x192xf32>
    %c2_i32_249 = arith.constant 2 : i32
    %999 = arith.muli %c6_i32_246, %c2_i32_249 : i32
    %1000 = arith.index_cast %999 : i32 to index
    %c0_250 = arith.constant 0 : index
    %1001 = vector.load %arg21[%1000, %c0_250] : memref<16x96xf32, #tpu.memory_space<vmem>>, vector<2x96xf32>
    %1002 = vector.extract_strided_slice %998 {offsets = [0, 0], sizes = [2, 96], strides = [1, 1]} : vector<2x192xf32> to vector<2x96xf32>
    %1003 = vector.extract_strided_slice %1001 {offsets = [0, 0], sizes = [2, 32], strides = [1, 1]} : vector<2x96xf32> to vector<2x32xf32>
    %1004 = vector.extract_strided_slice %1002 {offsets = [0, 0], sizes = [2, 32], strides = [1, 1]} : vector<2x96xf32> to vector<2x32xf32>
    %1005 = arith.addf %1003, %1004 : vector<2x32xf32>
    %1006 = arith.negf %1005 : vector<2x32xf32>
    %1007 = math.exp %1006 : vector<2x32xf32>
    %cst_251 = arith.constant 1.000000e+00 : f32
    %1008 = vector.broadcast %cst_251 : f32 to vector<2x32xf32>
    %1009 = arith.addf %1008, %1007 : vector<2x32xf32>
    %1010 = arith.divf %1008, %1009 : vector<2x32xf32>
    %1011 = vector.extract_strided_slice %1001 {offsets = [0, 32], sizes = [2, 32], strides = [1, 1]} : vector<2x96xf32> to vector<2x32xf32>
    %1012 = vector.extract_strided_slice %1002 {offsets = [0, 32], sizes = [2, 32], strides = [1, 1]} : vector<2x96xf32> to vector<2x32xf32>
    %1013 = arith.addf %1011, %1012 : vector<2x32xf32>
    %1014 = arith.negf %1013 : vector<2x32xf32>
    %1015 = math.exp %1014 : vector<2x32xf32>
    %cst_252 = arith.constant 1.000000e+00 : f32
    %1016 = vector.broadcast %cst_252 : f32 to vector<2x32xf32>
    %1017 = arith.addf %1016, %1015 : vector<2x32xf32>
    %1018 = arith.divf %1016, %1017 : vector<2x32xf32>
    %1019 = vector.extract_strided_slice %1001 {offsets = [0, 64], sizes = [2, 32], strides = [1, 1]} : vector<2x96xf32> to vector<2x32xf32>
    %1020 = vector.extract_strided_slice %1002 {offsets = [0, 64], sizes = [2, 32], strides = [1, 1]} : vector<2x96xf32> to vector<2x32xf32>
    %1021 = arith.mulf %1010, %1020 : vector<2x32xf32>
    %1022 = arith.addf %1019, %1021 : vector<2x32xf32>
    %1023 = math.tanh %1022 : vector<2x32xf32>
    %cst_253 = arith.constant 1.000000e+00 : f32
    %1024 = vector.broadcast %cst_253 : f32 to vector<2x32xf32>
    %1025 = arith.subf %1024, %1018 : vector<2x32xf32>
    %1026 = arith.mulf %1025, %1023 : vector<2x32xf32>
    %1027 = arith.mulf %1018, %960 : vector<2x32xf32>
    %1028 = arith.addf %1026, %1027 : vector<2x32xf32>
    %c2_i32_254 = arith.constant 2 : i32
    %1029 = arith.muli %995, %c2_i32_254 : i32
    %1030 = arith.index_cast %1029 : i32 to index
    %c0_255 = arith.constant 0 : index
    %1031 = vector.load %arg22[%1030, %c0_255] : memref<16x96xf32, #tpu.memory_space<vmem>>, vector<2x96xf32>
    %1032 = vector.extract_strided_slice %998 {offsets = [0, 96], sizes = [2, 96], strides = [1, 1]} : vector<2x192xf32> to vector<2x96xf32>
    %1033 = vector.extract_strided_slice %1031 {offsets = [0, 0], sizes = [2, 32], strides = [1, 1]} : vector<2x96xf32> to vector<2x32xf32>
    %1034 = vector.extract_strided_slice %1032 {offsets = [0, 0], sizes = [2, 32], strides = [1, 1]} : vector<2x96xf32> to vector<2x32xf32>
    %1035 = arith.addf %1033, %1034 : vector<2x32xf32>
    %1036 = arith.negf %1035 : vector<2x32xf32>
    %1037 = math.exp %1036 : vector<2x32xf32>
    %cst_256 = arith.constant 1.000000e+00 : f32
    %1038 = vector.broadcast %cst_256 : f32 to vector<2x32xf32>
    %1039 = arith.addf %1038, %1037 : vector<2x32xf32>
    %1040 = arith.divf %1038, %1039 : vector<2x32xf32>
    %1041 = vector.extract_strided_slice %1031 {offsets = [0, 32], sizes = [2, 32], strides = [1, 1]} : vector<2x96xf32> to vector<2x32xf32>
    %1042 = vector.extract_strided_slice %1032 {offsets = [0, 32], sizes = [2, 32], strides = [1, 1]} : vector<2x96xf32> to vector<2x32xf32>
    %1043 = arith.addf %1041, %1042 : vector<2x32xf32>
    %1044 = arith.negf %1043 : vector<2x32xf32>
    %1045 = math.exp %1044 : vector<2x32xf32>
    %cst_257 = arith.constant 1.000000e+00 : f32
    %1046 = vector.broadcast %cst_257 : f32 to vector<2x32xf32>
    %1047 = arith.addf %1046, %1045 : vector<2x32xf32>
    %1048 = arith.divf %1046, %1047 : vector<2x32xf32>
    %1049 = vector.extract_strided_slice %1031 {offsets = [0, 64], sizes = [2, 32], strides = [1, 1]} : vector<2x96xf32> to vector<2x32xf32>
    %1050 = vector.extract_strided_slice %1032 {offsets = [0, 64], sizes = [2, 32], strides = [1, 1]} : vector<2x96xf32> to vector<2x32xf32>
    %1051 = arith.mulf %1040, %1050 : vector<2x32xf32>
    %1052 = arith.addf %1049, %1051 : vector<2x32xf32>
    %1053 = math.tanh %1052 : vector<2x32xf32>
    %cst_258 = arith.constant 1.000000e+00 : f32
    %1054 = vector.broadcast %cst_258 : f32 to vector<2x32xf32>
    %1055 = arith.subf %1054, %1048 : vector<2x32xf32>
    %1056 = arith.mulf %1055, %1053 : vector<2x32xf32>
    %1057 = arith.mulf %1048, %990 : vector<2x32xf32>
    %1058 = arith.addf %1056, %1057 : vector<2x32xf32>
    %1059 = arith.addf %991, %1028 : vector<2x32xf32>
    %1060 = arith.addf %992, %1058 : vector<2x32xf32>
    %1061 = arith.maximumf %993, %1028 : vector<2x32xf32>
    %1062 = arith.maximumf %994, %1058 : vector<2x32xf32>
    %c7_i32_259 = arith.constant 7 : i32
    %c7_i32_260 = arith.constant 7 : i32
    %1063 = arith.subi %c7_i32_260, %c7_i32_259 : i32
    %1064 = tpu.concatenate %1028, %1058 in 1 : vector<2x32xf32>, vector<2x32xf32> -> vector<2x64xf32>
    %cst_261 = arith.constant dense<0.000000e+00> : vector<2x192xf32>
    %1065 = tpu.matmul %1064, %582, %cst_261 {dimension_numbers = #tpu.dot_dimension_numbers<[1], [0], [0], [1], [0, 0, 1, 1], [], []>} : vector<2x64xf32>, vector<64x192xf32>, vector<2x192xf32> -> vector<2x192xf32>
    %1066 = arith.addf %1065, %585 : vector<2x192xf32>
    %c2_i32_262 = arith.constant 2 : i32
    %1067 = arith.muli %c7_i32_259, %c2_i32_262 : i32
    %1068 = arith.index_cast %1067 : i32 to index
    %c0_263 = arith.constant 0 : index
    %1069 = vector.load %arg21[%1068, %c0_263] : memref<16x96xf32, #tpu.memory_space<vmem>>, vector<2x96xf32>
    %1070 = vector.extract_strided_slice %1066 {offsets = [0, 0], sizes = [2, 96], strides = [1, 1]} : vector<2x192xf32> to vector<2x96xf32>
    %1071 = vector.extract_strided_slice %1069 {offsets = [0, 0], sizes = [2, 32], strides = [1, 1]} : vector<2x96xf32> to vector<2x32xf32>
    %1072 = vector.extract_strided_slice %1070 {offsets = [0, 0], sizes = [2, 32], strides = [1, 1]} : vector<2x96xf32> to vector<2x32xf32>
    %1073 = arith.addf %1071, %1072 : vector<2x32xf32>
    %1074 = arith.negf %1073 : vector<2x32xf32>
    %1075 = math.exp %1074 : vector<2x32xf32>
    %cst_264 = arith.constant 1.000000e+00 : f32
    %1076 = vector.broadcast %cst_264 : f32 to vector<2x32xf32>
    %1077 = arith.addf %1076, %1075 : vector<2x32xf32>
    %1078 = arith.divf %1076, %1077 : vector<2x32xf32>
    %1079 = vector.extract_strided_slice %1069 {offsets = [0, 32], sizes = [2, 32], strides = [1, 1]} : vector<2x96xf32> to vector<2x32xf32>
    %1080 = vector.extract_strided_slice %1070 {offsets = [0, 32], sizes = [2, 32], strides = [1, 1]} : vector<2x96xf32> to vector<2x32xf32>
    %1081 = arith.addf %1079, %1080 : vector<2x32xf32>
    %1082 = arith.negf %1081 : vector<2x32xf32>
    %1083 = math.exp %1082 : vector<2x32xf32>
    %cst_265 = arith.constant 1.000000e+00 : f32
    %1084 = vector.broadcast %cst_265 : f32 to vector<2x32xf32>
    %1085 = arith.addf %1084, %1083 : vector<2x32xf32>
    %1086 = arith.divf %1084, %1085 : vector<2x32xf32>
    %1087 = vector.extract_strided_slice %1069 {offsets = [0, 64], sizes = [2, 32], strides = [1, 1]} : vector<2x96xf32> to vector<2x32xf32>
    %1088 = vector.extract_strided_slice %1070 {offsets = [0, 64], sizes = [2, 32], strides = [1, 1]} : vector<2x96xf32> to vector<2x32xf32>
    %1089 = arith.mulf %1078, %1088 : vector<2x32xf32>
    %1090 = arith.addf %1087, %1089 : vector<2x32xf32>
    %1091 = math.tanh %1090 : vector<2x32xf32>
    %cst_266 = arith.constant 1.000000e+00 : f32
    %1092 = vector.broadcast %cst_266 : f32 to vector<2x32xf32>
    %1093 = arith.subf %1092, %1086 : vector<2x32xf32>
    %1094 = arith.mulf %1093, %1091 : vector<2x32xf32>
    %1095 = arith.mulf %1086, %1028 : vector<2x32xf32>
    %1096 = arith.addf %1094, %1095 : vector<2x32xf32>
    %c2_i32_267 = arith.constant 2 : i32
    %1097 = arith.muli %1063, %c2_i32_267 : i32
    %1098 = arith.index_cast %1097 : i32 to index
    %c0_268 = arith.constant 0 : index
    %1099 = vector.load %arg22[%1098, %c0_268] : memref<16x96xf32, #tpu.memory_space<vmem>>, vector<2x96xf32>
    %1100 = vector.extract_strided_slice %1066 {offsets = [0, 96], sizes = [2, 96], strides = [1, 1]} : vector<2x192xf32> to vector<2x96xf32>
    %1101 = vector.extract_strided_slice %1099 {offsets = [0, 0], sizes = [2, 32], strides = [1, 1]} : vector<2x96xf32> to vector<2x32xf32>
    %1102 = vector.extract_strided_slice %1100 {offsets = [0, 0], sizes = [2, 32], strides = [1, 1]} : vector<2x96xf32> to vector<2x32xf32>
    %1103 = arith.addf %1101, %1102 : vector<2x32xf32>
    %1104 = arith.negf %1103 : vector<2x32xf32>
    %1105 = math.exp %1104 : vector<2x32xf32>
    %cst_269 = arith.constant 1.000000e+00 : f32
    %1106 = vector.broadcast %cst_269 : f32 to vector<2x32xf32>
    %1107 = arith.addf %1106, %1105 : vector<2x32xf32>
    %1108 = arith.divf %1106, %1107 : vector<2x32xf32>
    %1109 = vector.extract_strided_slice %1099 {offsets = [0, 32], sizes = [2, 32], strides = [1, 1]} : vector<2x96xf32> to vector<2x32xf32>
    %1110 = vector.extract_strided_slice %1100 {offsets = [0, 32], sizes = [2, 32], strides = [1, 1]} : vector<2x96xf32> to vector<2x32xf32>
    %1111 = arith.addf %1109, %1110 : vector<2x32xf32>
    %1112 = arith.negf %1111 : vector<2x32xf32>
    %1113 = math.exp %1112 : vector<2x32xf32>
    %cst_270 = arith.constant 1.000000e+00 : f32
    %1114 = vector.broadcast %cst_270 : f32 to vector<2x32xf32>
    %1115 = arith.addf %1114, %1113 : vector<2x32xf32>
    %1116 = arith.divf %1114, %1115 : vector<2x32xf32>
    %1117 = vector.extract_strided_slice %1099 {offsets = [0, 64], sizes = [2, 32], strides = [1, 1]} : vector<2x96xf32> to vector<2x32xf32>
    %1118 = vector.extract_strided_slice %1100 {offsets = [0, 64], sizes = [2, 32], strides = [1, 1]} : vector<2x96xf32> to vector<2x32xf32>
    %1119 = arith.mulf %1108, %1118 : vector<2x32xf32>
    %1120 = arith.addf %1117, %1119 : vector<2x32xf32>
    %1121 = math.tanh %1120 : vector<2x32xf32>
    %cst_271 = arith.constant 1.000000e+00 : f32
    %1122 = vector.broadcast %cst_271 : f32 to vector<2x32xf32>
    %1123 = arith.subf %1122, %1116 : vector<2x32xf32>
    %1124 = arith.mulf %1123, %1121 : vector<2x32xf32>
    %1125 = arith.mulf %1116, %1058 : vector<2x32xf32>
    %1126 = arith.addf %1124, %1125 : vector<2x32xf32>
    %1127 = arith.addf %1059, %1096 : vector<2x32xf32>
    %1128 = arith.addf %1060, %1126 : vector<2x32xf32>
    %1129 = arith.maximumf %1061, %1096 : vector<2x32xf32>
    %1130 = arith.maximumf %1062, %1126 : vector<2x32xf32>
    %c8_i32_272 = arith.constant 8 : i32
    %cst_273 = arith.constant 1.250000e-01 : f32
    %1131 = vector.broadcast %cst_273 : f32 to vector<2x32xf32>
    %1132 = arith.mulf %1127, %1131 : vector<2x32xf32>
    %cst_274 = arith.constant 1.250000e-01 : f32
    %1133 = vector.broadcast %cst_274 : f32 to vector<2x32xf32>
    %1134 = arith.mulf %1128, %1133 : vector<2x32xf32>
    %1135 = tpu.concatenate %1132, %1134, %1129, %1130 in 1 : vector<2x32xf32>, vector<2x32xf32>, vector<2x32xf32>, vector<2x32xf32> -> vector<2x128xf32>
    %c0_275 = arith.constant 0 : index
    %c0_276 = arith.constant 0 : index
    %1136 = vector.load %arg12[%c0_275, %c0_276] : memref<128x7xf32, #tpu.memory_space<vmem>>, vector<128x7xf32>
    %cst_277 = arith.constant dense<0.000000e+00> : vector<2x7xf32>
    %1137 = tpu.matmul %1135, %1136, %cst_277 {dimension_numbers = #tpu.dot_dimension_numbers<[1], [0], [0], [1], [0, 0, 1, 1], [], []>} : vector<2x128xf32>, vector<128x7xf32>, vector<2x7xf32> -> vector<2x7xf32>
    %c0_278 = arith.constant 0 : index
    %c0_279 = arith.constant 0 : index
    %1138 = vector.load %arg15[%c0_278, %c0_279] : memref<1x7xf32, #tpu.memory_space<vmem>>, vector<1x7xf32>
    %1139 = vector.broadcast %1138 : vector<1x7xf32> to vector<2x7xf32>
    %1140 = arith.addf %1137, %1139 : vector<2x7xf32>
    %1141 = tpu.concatenate %1096, %1126 in 0 : vector<2x32xf32>, vector<2x32xf32> -> vector<4x32xf32>
    %c0_280 = arith.constant 0 : index
    %c0_281 = arith.constant 0 : index
    %1142 = vector.load %arg13[%c0_280, %c0_281] : memref<32x7xf32, #tpu.memory_space<vmem>>, vector<32x7xf32>
    %cst_282 = arith.constant dense<0.000000e+00> : vector<4x7xf32>
    %1143 = tpu.matmul %1141, %1142, %cst_282 {dimension_numbers = #tpu.dot_dimension_numbers<[1], [0], [0], [1], [0, 0, 1, 1], [], []>} : vector<4x32xf32>, vector<32x7xf32>, vector<4x7xf32> -> vector<4x7xf32>
    %c0_283 = arith.constant 0 : index
    %c0_284 = arith.constant 0 : index
    %1144 = vector.load %arg14[%c0_283, %c0_284] : memref<32x7xf32, #tpu.memory_space<vmem>>, vector<32x7xf32>
    %cst_285 = arith.constant dense<0.000000e+00> : vector<4x7xf32>
    %1145 = tpu.matmul %1141, %1144, %cst_285 {dimension_numbers = #tpu.dot_dimension_numbers<[1], [0], [0], [1], [0, 0, 1, 1], [], []>} : vector<4x32xf32>, vector<32x7xf32>, vector<4x7xf32> -> vector<4x7xf32>
    %1146 = tpu.iota {dimensions = array<i32: 0>} : vector<2x4xi32>
    %1147 = tpu.iota {dimensions = array<i32: 1>} : vector<2x4xi32>
    %c2_i32_286 = arith.constant 2 : i32
    %1148 = vector.broadcast %c2_i32_286 : i32 to vector<2x4xi32>
    %1149 = arith.muli %1148, %1146 : vector<2x4xi32>
    %1150 = arith.cmpi eq, %1147, %1149 : vector<2x4xi32>
    %cst_287 = arith.constant 1.000000e+00 : f32
    %cst_288 = arith.constant 0.000000e+00 : f32
    %1151 = vector.broadcast %cst_287 : f32 to vector<2x4xf32>
    %1152 = vector.broadcast %cst_288 : f32 to vector<2x4xf32>
    %1153 = arith.select %1150, %1151, %1152 : vector<2x4xi1>, vector<2x4xf32>
    %c2_i32_289 = arith.constant 2 : i32
    %1154 = vector.broadcast %c2_i32_289 : i32 to vector<2x4xi32>
    %1155 = arith.muli %1154, %1146 : vector<2x4xi32>
    %c1_i32_290 = arith.constant 1 : i32
    %1156 = vector.broadcast %c1_i32_290 : i32 to vector<2x4xi32>
    %1157 = arith.addi %1155, %1156 : vector<2x4xi32>
    %1158 = arith.cmpi eq, %1147, %1157 : vector<2x4xi32>
    %cst_291 = arith.constant 1.000000e+00 : f32
    %cst_292 = arith.constant 0.000000e+00 : f32
    %1159 = vector.broadcast %cst_291 : f32 to vector<2x4xf32>
    %1160 = vector.broadcast %cst_292 : f32 to vector<2x4xf32>
    %1161 = arith.select %1158, %1159, %1160 : vector<2x4xi1>, vector<2x4xf32>
    %cst_293 = arith.constant dense<0.000000e+00> : vector<2x7xf32>
    %1162 = tpu.matmul %1153, %1143, %cst_293 {dimension_numbers = #tpu.dot_dimension_numbers<[1], [0], [0], [1], [0, 0, 1, 1], [], []>} : vector<2x4xf32>, vector<4x7xf32>, vector<2x7xf32> -> vector<2x7xf32>
    %1163 = arith.addf %1140, %1162 : vector<2x7xf32>
    %cst_294 = arith.constant dense<0.000000e+00> : vector<2x7xf32>
    %1164 = tpu.matmul %1161, %1145, %cst_294 {dimension_numbers = #tpu.dot_dimension_numbers<[1], [0], [0], [1], [0, 0, 1, 1], [], []>} : vector<2x4xf32>, vector<4x7xf32>, vector<2x7xf32> -> vector<2x7xf32>
    %1165 = arith.addf %1163, %1164 : vector<2x7xf32>
    %c0_295 = arith.constant 0 : index
    %c0_296 = arith.constant 0 : index
    %1166 = vector.load %arg16[%c0_295, %c0_296] : memref<2x7xf32, #tpu.memory_space<vmem>>, vector<2x7xf32>
    tpu.vector_store %arg16[%c0_295, %c0_296], %1165 {strides = array<i32>} : memref<2x7xf32, #tpu.memory_space<vmem>>, vector<2x7xf32>,
    return
  }
}

</mosaic_0001>

<llo_original>
// kernel: lstm_gru_forward.1
$region0: #{lstm_gru_forward.1}
  #allocation0 [shape = 'u32[]', space=smem, size = 0x4, offset = 0x4, fixed_abs, tag = 'smem constant byte address 0x4 - core index']
  #allocation1 [shape = 'u32[144,128]{1,0:T(1,128)}', space=vmem, size = 0x12000, scoped, tag = 'internal scratch']
  #allocation2 [shape = 'f32[16,128]{1,0:T(8,128)}', space=vmem, size = 0x2000, scoped, tag = 'scratch operand']
  #allocation3 [shape = 'f32[16,128]{1,0:T(8,128)}', space=vmem, size = 0x2000, scoped, tag = 'scratch operand']
  #allocation4 [shape = 'f32[16,32]{1,0:T(8,128)}', space=vmem, size = 0x2000, scoped, tag = 'scratch operand']
  #allocation5 [shape = 'f32[16,32]{1,0:T(8,128)}', space=vmem, size = 0x2000, scoped, tag = 'scratch operand']
  #allocation6 [shape = 'f32[16,96]{1,0:T(8,128)}', space=vmem, size = 0x2000, scoped, tag = 'scratch operand']
  #allocation7 [shape = 'f32[16,96]{1,0:T(8,128)}', space=vmem, size = 0x2000, scoped, tag = 'scratch operand']
  %s0 = inlined_call_operand.vmem [shape: f32[16,32], index: 0, kind: input, shape index: {}]
  %s1 = inlined_call_operand.vmem [shape: f32[32,128], index: 1, kind: input, shape index: {}]
  %s2 = inlined_call_operand.vmem [shape: f32[32,128], index: 2, kind: input, shape index: {}]
  %s3 = inlined_call_operand.vmem [shape: f32[1,128], index: 3, kind: input, shape index: {}]
  %s4 = inlined_call_operand.vmem [shape: f32[1,128], index: 4, kind: input, shape index: {}]
  %s5 = inlined_call_operand.vmem [shape: f32[64,256], index: 5, kind: input, shape index: {}]
  %s6 = inlined_call_operand.vmem [shape: f32[64,96], index: 6, kind: input, shape index: {}]
  %s7 = inlined_call_operand.vmem [shape: f32[64,96], index: 7, kind: input, shape index: {}]
  %s8 = inlined_call_operand.vmem [shape: f32[1,96], index: 8, kind: input, shape index: {}]
  %s9 = inlined_call_operand.vmem [shape: f32[1,96], index: 9, kind: input, shape index: {}]
  %s10 = inlined_call_operand.vmem [shape: f32[64,192], index: 10, kind: input, shape index: {}]
  %s11 = inlined_call_operand.vmem [shape: f32[1,192], index: 11, kind: input, shape index: {}]
  %s12 = inlined_call_operand.vmem [shape: f32[128,7], index: 12, kind: input, shape index: {}]
  %s13 = inlined_call_operand.vmem [shape: f32[32,7], index: 13, kind: input, shape index: {}]
  %s14 = inlined_call_operand.vmem [shape: f32[32,7], index: 14, kind: input, shape index: {}]
  %s15 = inlined_call_operand.vmem [shape: f32[1,7], index: 15, kind: input, shape index: {}]
  %s16 = inlined_call_operand.hbm [shape: f32[2,7], index: 16, kind: output, shape index: {}]
  %s17 = sld [smem:[#allocation0]]
  $region74: #{lstm_gru_forward.1} parent=0
    _
  %s19 = ssub.s32 1, %s17
  %s20 = scalar_select 0, %s19, %s17
  $region1: #{lstm_gru_forward.1} parent=0
    #allocation8 [shape = 'u8[1024]{0}', space=vmem, size = 0x400, scoped, tag = 'output window, operand 0, single buffered']
    #allocation9 [shape = 's32[1]{0}', space=sflag, size = 0x4, scoped, tag = 'scoped memory for lstm_gru_forward.1']
    %21 = vsyncpa [#allocation9], 0
    // Predicated region
    $region2: #{lstm_gru_forward.1} parent=1 // pred_check
      _
    $region3: #{lstm_gru_forward.1} parent=1 // pred_check_branch
      %23 = sbr.rel (0) target = $region5
    $region4: #{lstm_gru_forward.1} parent=1 // pred_region
      _
    $region5: #{lstm_gru_forward.1} parent=1 // pred_fallthru
      _
    // Predicated region
    $region6: #{lstm_gru_forward.1} parent=1 // pred_check
      _
    $region7: #{lstm_gru_forward.1} parent=1 // pred_check_branch
      %25 = sbr.rel (0) target = $region9
    $region8: #{lstm_gru_forward.1} parent=1 // pred_region
      _
    $region9: #{lstm_gru_forward.1} parent=1 // pred_fallthru
      _
    // Predicated region
    $region10: #{lstm_gru_forward.1} parent=1 // pred_check
      _
    $region11: #{lstm_gru_forward.1} parent=1 // pred_check_branch
      %27 = sbr.rel (0) target = $region13
    $region12: #{lstm_gru_forward.1} parent=1 // pred_region
      _
    $region13: #{lstm_gru_forward.1} parent=1 // pred_fallthru
      _
    // Predicated region
    $region14: #{lstm_gru_forward.1} parent=1 // pred_check
      _
    $region15: #{lstm_gru_forward.1} parent=1 // pred_check_branch
      %29 = sbr.rel (0) target = $region17
    $region16: #{lstm_gru_forward.1} parent=1 // pred_region
      _
    $region17: #{lstm_gru_forward.1} parent=1 // pred_fallthru
      _
    // Predicated region
    $region18: #{lstm_gru_forward.1} parent=1 // pred_check
      _
    $region19: #{lstm_gru_forward.1} parent=1 // pred_check_branch
      %31 = sbr.rel (0) target = $region21
    $region20: #{lstm_gru_forward.1} parent=1 // pred_region
      _
    $region21: #{lstm_gru_forward.1} parent=1 // pred_fallthru
      _
    // Predicated region
    $region22: #{lstm_gru_forward.1} parent=1 // pred_check
      _
    $region23: #{lstm_gru_forward.1} parent=1 // pred_check_branch
      %33 = sbr.rel (0) target = $region25
    $region24: #{lstm_gru_forward.1} parent=1 // pred_region
      _
    $region25: #{lstm_gru_forward.1} parent=1 // pred_fallthru
      _
    // Predicated region
    $region26: #{lstm_gru_forward.1} parent=1 // pred_check
      _
    $region27: #{lstm_gru_forward.1} parent=1 // pred_check_branch
      %35 = sbr.rel (0) target = $region29
    $region28: #{lstm_gru_forward.1} parent=1 // pred_region
      _
    $region29: #{lstm_gru_forward.1} parent=1 // pred_fallthru
      _
    // Predicated region
    $region30: #{lstm_gru_forward.1} parent=1 // pred_check
      _
    $region31: #{lstm_gru_forward.1} parent=1 // pred_check_branch
      %37 = sbr.rel (0) target = $region33
    $region32: #{lstm_gru_forward.1} parent=1 // pred_region
      _
    $region33: #{lstm_gru_forward.1} parent=1 // pred_fallthru
      _
    // Predicated region
    $region34: #{lstm_gru_forward.1} parent=1 // pred_check
      _
    $region35: #{lstm_gru_forward.1} parent=1 // pred_check_branch
      %39 = sbr.rel (0) target = $region37
    $region36: #{lstm_gru_forward.1} parent=1 // pred_region
      _
    $region37: #{lstm_gru_forward.1} parent=1 // pred_fallthru
      _
    // Predicated region
    $region38: #{lstm_gru_forward.1} parent=1 // pred_check
      _
    $region39: #{lstm_gru_forward.1} parent=1 // pred_check_branch
      %41 = sbr.rel (0) target = $region41
    $region40: #{lstm_gru_forward.1} parent=1 // pred_region
      _
    $region41: #{lstm_gru_forward.1} parent=1 // pred_fallthru
      _
    // Predicated region
    $region42: #{lstm_gru_forward.1} parent=1 // pred_check
      _
    $region43: #{lstm_gru_forward.1} parent=1 // pred_check_branch
      %43 = sbr.rel (0) target = $region45
    $region44: #{lstm_gru_forward.1} parent=1 // pred_region
      _
    $region45: #{lstm_gru_forward.1} parent=1 // pred_fallthru
      _
    // Predicated region
    $region46: #{lstm_gru_forward.1} parent=1 // pred_check
      _
    $region47: #{lstm_gru_forward.1} parent=1 // pred_check_branch
      %45 = sbr.rel (0) target = $region49
    $region48: #{lstm_gru_forward.1} parent=1 // pred_region
      _
    $region49: #{lstm_gru_forward.1} parent=1 // pred_fallthru
      _
    // Predicated region
    $region50: #{lstm_gru_forward.1} parent=1 // pred_check
      _
    $region51: #{lstm_gru_forward.1} parent=1 // pred_check_branch
      %47 = sbr.rel (0) target = $region53
    $region52: #{lstm_gru_forward.1} parent=1 // pred_region
      _
    $region53: #{lstm_gru_forward.1} parent=1 // pred_fallthru
      _
    // Predicated region
    $region54: #{lstm_gru_forward.1} parent=1 // pred_check
      _
    $region55: #{lstm_gru_forward.1} parent=1 // pred_check_branch
      %49 = sbr.rel (0) target = $region57
    $region56: #{lstm_gru_forward.1} parent=1 // pred_region
      _
    $region57: #{lstm_gru_forward.1} parent=1 // pred_fallthru
      _
    // Predicated region
    $region58: #{lstm_gru_forward.1} parent=1 // pred_check
      _
    $region59: #{lstm_gru_forward.1} parent=1 // pred_check_branch
      %51 = sbr.rel (0) target = $region61
    $region60: #{lstm_gru_forward.1} parent=1 // pred_region
      _
    $region61: #{lstm_gru_forward.1} parent=1 // pred_fallthru
      _
    // Predicated region
    $region62: #{lstm_gru_forward.1} parent=1 // pred_check
      _
    $region63: #{lstm_gru_forward.1} parent=1 // pred_check_branch
      %53 = sbr.rel (0) target = $region65
    $region64: #{lstm_gru_forward.1} parent=1 // pred_region
      _
    $region65: #{lstm_gru_forward.1} parent=1 // pred_fallthru
      _
    %v54 = vld [vmem:[%s0] sm:$0xff]
    %v55 = vld [vmem:[%s0 + $0x8] sm:$0xff]
    %v56 = vld [vmem:[%s1] sm:$0xff]
    %v57 = vld [vmem:[%s1 + $0x8] sm:$0xff]
    %v58 = vld [vmem:[%s1 + $0x10] sm:$0xff]
    %v59 = vld [vmem:[%s1 + $0x18] sm:$0xff]
    %v60 = vld [vmem:[%s3] sm:$0x1]
    %v62 = vlaneseq
    %v63 = vshrl.u32 %v62, 7
    %v64 = vsub.s32 0, %v63
    %v65 = vrot.slane %v60, %v64
    %vm67 = vcmask 261120
    %v69 = vsel %vm67, %v54, 0
    %v72 = vsel %vm67, %v55, 0
    %74 = vmatprep.subr.mxu0 0.0
    %75 = vmatpush1.msra.mxu0 %v56
    %76 = vmatprep.subr.mxu0 0.0
    %77 = vmatpush1.msra.mxu0 %v57
    %78 = vmatprep.subr.mxu0 0.0
    %79 = vmatpush1.msra.mxu0 %v58
    %80 = vmatprep.subr.mxu0 0.0
    %81 = vmatpush1.msra.mxu0 %v59
    %82 = vmatprep.subr.mxu0 0.0
    %83 = vmatpush1.msra.mxu0 0.0
    %84 = vmatprep.subr.mxu0 0.0
    %85 = vmatpush1.msra.mxu0 0.0
    %86 = vmatprep.subr.mxu0 0.0
    %87 = vmatpush1.msra.mxu0 0.0
    %88 = vmatprep.subr.mxu0 0.0
    %89 = vmatpush1.msra.mxu0 0.0
    %90 = vmatprep.subr.mxu0 0.0
    %91 = vmatpush1.msra.mxu0 0.0
    %92 = vmatprep.subr.mxu0 0.0
    %93 = vmatpush1.msra.mxu0 0.0
    %94 = vmatprep.subr.mxu0 0.0
    %95 = vmatpush1.msra.mxu0 0.0
    %96 = vmatprep.subr.mxu0 0.0
    %97 = vmatpush1.msra.mxu0 0.0
    %98 = vmatprep.subr.mxu0 0.0
    %99 = vmatpush1.msra.mxu0 0.0
    %100 = vmatprep.subr.mxu0 0.0
    %101 = vmatpush1.msra.mxu0 0.0
    %102 = vmatprep.subr.mxu0 0.0
    %103 = vmatpush1.msra.mxu0 0.0
    %104 = vmatprep.subr.mxu0 0.0
    %105 = vmatpush1.msra.mxu0 0.0
    %106 = vmatprep.subr.mxu0 0.0
    %107 = vmatpush1.msra.mxu0 0.0
    %108 = vmatprep.subr.mxu0 0.0
    %109 = vmatpush1.msra.mxu0 0.0
    %110 = vmatprep.subr.mxu0 0.0
    %111 = vmatpush1.msra.mxu0 0.0
    %112 = vmatprep.subr.mxu0 0.0
    %113 = vmatpush1.msra.mxu0 0.0
    %114 = vmatprep.subr.mxu0 0.0
    %115 = vmatpush1.msra.mxu0 0.0
    %116 = vmatprep.subr.mxu0 0.0
    %117 = vmatpush1.msra.mxu0 0.0
    %118 = vmatprep.subr.mxu0 0.0
    %119 = vmatpush1.msra.mxu0 0.0
    %120 = vmatprep.subr.mxu0 0.0
    %121 = vmatpush1.msra.mxu0 0.0
    %122 = vmatprep.subr.mxu0 0.0
    %123 = vmatpush1.msra.mxu0 0.0
    %124 = vmatprep.subr.mxu0 0.0
    %125 = vmatpush1.msra.mxu0 0.0
    %126 = vmatprep.subr.mxu0 0.0
    %127 = vmatpush1.msra.mxu0 0.0
    %128 = vmatprep.subr.mxu0 0.0
    %129 = vmatpush1.msra.mxu0 0.0
    %130 = vmatprep.subr.mxu0 0.0
    %131 = vmatpush1.msra.mxu0 0.0
    %132 = vmatprep.subr.mxu0 0.0
    %133 = vmatpush1.msra.mxu0 0.0
    %134 = vmatprep.subr.mxu0 0.0
    %135 = vmatpush1.msra.mxu0 0.0
    %136 = vmatprep.subr.mxu0 0.0
    %137 = vmatpush1.msra.mxu0 0.0
    %138 = vmatprep.mubr.f32.mxu0 0.0
    %139 = vmatmul.mubr.f32.gmra.mrb[0].mxu0 %v69
    %v140 = vpop.f32.mrb[0].mxu0
    %v141 = vadd.f32 %v65, %v140
    %v142 = vpop.f32.mrb[0].mxu0
    %143 = vmatprep.mubr.f32.mxu0 0.0
    %144 = vmatmul.mubr.f32.gmra.mrb[0].mxu0 %v72
    %v145 = vpop.f32.mrb[0].mxu0
    %v146 = vadd.f32 %v65, %v145
    %v147 = vpop.f32.mrb[0].mxu0
    %148 = vdwg.mxu0
    %149 = vst [vmem:[#allocation2] sm:$0xff] %v141
    %150 = vst [vmem:[#allocation2 + $0x8] sm:$0xff] %v146
    %v151 = vld [vmem:[%s2] sm:$0xff]
    %v152 = vld [vmem:[%s2 + $0x8] sm:$0xff]
    %v153 = vld [vmem:[%s2 + $0x10] sm:$0xff]
    %v154 = vld [vmem:[%s2 + $0x18] sm:$0xff]
    %v155 = vld [vmem:[%s4] sm:$0x1]
    %v157 = vlaneseq
    %v158 = vshrl.u32 %v157, 7
    %v159 = vsub.s32 0, %v158
    %v160 = vrot.slane %v155, %v159
    %162 = vmatprep.subr.mxu0 0.0
    %163 = vmatpush1.msra.mxu0 %v151
    %164 = vmatprep.subr.mxu0 0.0
    %165 = vmatpush1.msra.mxu0 %v152
    %166 = vmatprep.subr.mxu0 0.0
    %167 = vmatpush1.msra.mxu0 %v153
    %168 = vmatprep.subr.mxu0 0.0
    %169 = vmatpush1.msra.mxu0 %v154
    %170 = vmatprep.subr.mxu0 0.0
    %171 = vmatpush1.msra.mxu0 0.0
    %172 = vmatprep.subr.mxu0 0.0
    %173 = vmatpush1.msra.mxu0 0.0
    %174 = vmatprep.subr.mxu0 0.0
    %175 = vmatpush1.msra.mxu0 0.0
    %176 = vmatprep.subr.mxu0 0.0
    %177 = vmatpush1.msra.mxu0 0.0
    %178 = vmatprep.subr.mxu0 0.0
    %179 = vmatpush1.msra.mxu0 0.0
    %180 = vmatprep.subr.mxu0 0.0
    %181 = vmatpush1.msra.mxu0 0.0
    %182 = vmatprep.subr.mxu0 0.0
    %183 = vmatpush1.msra.mxu0 0.0
    %184 = vmatprep.subr.mxu0 0.0
    %185 = vmatpush1.msra.mxu0 0.0
    %186 = vmatprep.subr.mxu0 0.0
    %187 = vmatpush1.msra.mxu0 0.0
    %188 = vmatprep.subr.mxu0 0.0
    %189 = vmatpush1.msra.mxu0 0.0
    %190 = vmatprep.subr.mxu0 0.0
    %191 = vmatpush1.msra.mxu0 0.0
    %192 = vmatprep.subr.mxu0 0.0
    %193 = vmatpush1.msra.mxu0 0.0
    %194 = vmatprep.subr.mxu0 0.0
    %195 = vmatpush1.msra.mxu0 0.0
    %196 = vmatprep.subr.mxu0 0.0
    %197 = vmatpush1.msra.mxu0 0.0
    %198 = vmatprep.subr.mxu0 0.0
    %199 = vmatpush1.msra.mxu0 0.0
    %200 = vmatprep.subr.mxu0 0.0
    %201 = vmatpush1.msra.mxu0 0.0
    %202 = vmatprep.subr.mxu0 0.0
    %203 = vmatpush1.msra.mxu0 0.0
    %204 = vmatprep.subr.mxu0 0.0
    %205 = vmatpush1.msra.mxu0 0.0
    %206 = vmatprep.subr.mxu0 0.0
    %207 = vmatpush1.msra.mxu0 0.0
    %208 = vmatprep.subr.mxu0 0.0
    %209 = vmatpush1.msra.mxu0 0.0
    %210 = vmatprep.subr.mxu0 0.0
    %211 = vmatpush1.msra.mxu0 0.0
    %212 = vmatprep.subr.mxu0 0.0
    %213 = vmatpush1.msra.mxu0 0.0
    %214 = vmatprep.subr.mxu0 0.0
    %215 = vmatpush1.msra.mxu0 0.0
    %216 = vmatprep.subr.mxu0 0.0
    %217 = vmatpush1.msra.mxu0 0.0
    %218 = vmatprep.subr.mxu0 0.0
    %219 = vmatpush1.msra.mxu0 0.0
    %220 = vmatprep.subr.mxu0 0.0
    %221 = vmatpush1.msra.mxu0 0.0
    %222 = vmatprep.subr.mxu0 0.0
    %223 = vmatpush1.msra.mxu0 0.0
    %224 = vmatprep.subr.mxu0 0.0
    %225 = vmatpush1.msra.mxu0 0.0
    %226 = vmatprep.mubr.f32.mxu0 0.0
    %227 = vmatmul.mubr.f32.gmra.mrb[0].mxu0 %v69
    %v228 = vpop.f32.mrb[0].mxu0
    %v229 = vadd.f32 %v160, %v228
    %v230 = vpop.f32.mrb[0].mxu0
    %231 = vmatprep.mubr.f32.mxu0 0.0
    %232 = vmatmul.mubr.f32.gmra.mrb[0].mxu0 %v72
    %v233 = vpop.f32.mrb[0].mxu0
    %v234 = vadd.f32 %v160, %v233
    %v235 = vpop.f32.mrb[0].mxu0
    %236 = vdwg.mxu0
    %237 = vst [vmem:[#allocation3] sm:$0xff] %v229
    %238 = vst [vmem:[#allocation3 + $0x8] sm:$0xff] %v234
    %v239 = vld [vmem:[%s5] sm:$0xff]
    %v240 = vld [vmem:[%s5 + $0x8] sm:$0xff]
    %v241 = vld [vmem:[%s5 + $0x10] sm:$0xff]
    %v242 = vld [vmem:[%s5 + $0x18] sm:$0xff]
    %v243 = vld [vmem:[%s5 + $0x20] sm:$0xff]
    %v244 = vld [vmem:[%s5 + $0x28] sm:$0xff]
    %v245 = vld [vmem:[%s5 + $0x30] sm:$0xff]
    %v246 = vld [vmem:[%s5 + $0x38] sm:$0xff]
    %v247 = vld [vmem:[%s5 + $0x40] sm:$0xff]
    %v248 = vld [vmem:[%s5 + $0x48] sm:$0xff]
    %v249 = vld [vmem:[%s5 + $0x50] sm:$0xff]
    %v250 = vld [vmem:[%s5 + $0x58] sm:$0xff]
    %v251 = vld [vmem:[%s5 + $0x60] sm:$0xff]
    %v252 = vld [vmem:[%s5 + $0x68] sm:$0xff]
    %v253 = vld [vmem:[%s5 + $0x70] sm:$0xff]
    %v254 = vld [vmem:[%s5 + $0x78] sm:$0xff]
    %vm255 = vcmask 523264
    %v257 = vsel %vm255, 0.0, 0
    %259 = vmatprep.subr.mxu0 %v240
    %260 = vmatpush1.msra.mxu0 %v239
    %261 = vmatprep.subr.mxu0 %v242
    %262 = vmatpush1.msra.mxu0 %v241
    %263 = vmatprep.subr.mxu0 %v244
    %264 = vmatpush1.msra.mxu0 %v243
    %265 = vmatprep.subr.mxu0 %v246
    %266 = vmatpush1.msra.mxu0 %v245
    %267 = vmatprep.subr.mxu0 %v248
    %268 = vmatpush1.msra.mxu0 %v247
    %269 = vmatprep.subr.mxu0 %v250
    %270 = vmatpush1.msra.mxu0 %v249
    %271 = vmatprep.subr.mxu0 %v252
    %272 = vmatpush1.msra.mxu0 %v251
    %273 = vmatprep.subr.mxu0 %v254
    %274 = vmatpush1.msra.mxu0 %v253
    %275 = vmatprep.subr.mxu0 0.0
    %276 = vmatpush1.msra.mxu0 0.0
    %277 = vmatprep.subr.mxu0 0.0
    %278 = vmatpush1.msra.mxu0 0.0
    %279 = vmatprep.subr.mxu0 0.0
    %280 = vmatpush1.msra.mxu0 0.0
    %281 = vmatprep.subr.mxu0 0.0
    %282 = vmatpush1.msra.mxu0 0.0
    %283 = vmatprep.subr.mxu0 0.0
    %284 = vmatpush1.msra.mxu0 0.0
    %285 = vmatprep.subr.mxu0 0.0
    %286 = vmatpush1.msra.mxu0 0.0
    %287 = vmatprep.subr.mxu0 0.0
    %288 = vmatpush1.msra.mxu0 0.0
    %289 = vmatprep.subr.mxu0 0.0
    %290 = vmatpush1.msra.mxu0 0.0
    %291 = vmatprep.subr.mxu0 0.0
    %292 = vmatpush1.msra.mxu0 0.0
    %293 = vmatprep.subr.mxu0 0.0
    %294 = vmatpush1.msra.mxu0 0.0
    %295 = vmatprep.subr.mxu0 0.0
    %296 = vmatpush1.msra.mxu0 0.0
    %297 = vmatprep.subr.mxu0 0.0
    %298 = vmatpush1.msra.mxu0 0.0
    %299 = vmatprep.subr.mxu0 0.0
    %300 = vmatpush1.msra.mxu0 0.0
    %301 = vmatprep.subr.mxu0 0.0
    %302 = vmatpush1.msra.mxu0 0.0
    %303 = vmatprep.subr.mxu0 0.0
    %304 = vmatpush1.msra.mxu0 0.0
    %305 = vmatprep.subr.mxu0 0.0
    %306 = vmatpush1.msra.mxu0 0.0
    %307 = vmatprep.subr.mxu0 0.0
    %308 = vmatpush1.msra.mxu0 0.0
    %309 = vmatprep.subr.mxu0 0.0
    %310 = vmatpush1.msra.mxu0 0.0
    %311 = vmatprep.subr.mxu0 0.0
    %312 = vmatpush1.msra.mxu0 0.0
    %313 = vmatprep.subr.mxu0 0.0
    %314 = vmatpush1.msra.mxu0 0.0
    %315 = vmatprep.subr.mxu0 0.0
    %316 = vmatpush1.msra.mxu0 0.0
    %317 = vmatprep.subr.mxu0 0.0
    %318 = vmatpush1.msra.mxu0 0.0
    %319 = vmatprep.subr.mxu0 0.0
    %320 = vmatpush1.msra.mxu0 0.0
    %321 = vmatprep.subr.mxu0 0.0
    %322 = vmatpush1.msra.mxu0 0.0
    %323 = vmatprep.mubr.f32.mxu0 0.0
    %324 = vmatmul.mubr.f32.gmra.mrb[0].mxu0 %v257
    %v325 = vpop.f32.mrb[0].mxu0
    %v326 = vadd.f32 0.0, %v325
    %v327 = vpop.f32.mrb[0].mxu0
    %v328 = vadd.f32 0.0, %v327
    %329 = vdwg.mxu0
    %v330 = vld [vmem:[#allocation2] sm:$0x3]
    %v331 = vadd.f32 %v330, %v326
    %v332 = vld [vmem:[#allocation3 + $0xe] sm:$0x3]
    %v333 = vadd.f32 %v332, %v328
    %v334 = vxor.u32 %v331, 2147483648
    %v335 = vmul.f32 %v334, 1.442695
    %v336 = vpow.pop %v335
    %v337 = vadd.f32 %v336, 1.0
    %v338 = vrcp.pop %v337
    %v339 = vmul.f32 1.0, %v338
    %v340 = vtanh.pop %v331
    %v341 = vmul.f32 %v339, 0.0
    %343 = vrot.lane.b32.xlu0 %v340, 64
    %v344 = vpop.permute.xlu0 %343
    %v346 = vmul.f32 %v339, %v344
    %348 = vrot.lane.b32.xlu0 %v346, 32
    %v349 = vpop.permute.xlu0 %348
    %v351 = vadd.f32 %v341, %v349
    %v352 = vtanh.pop %v351
    %354 = vrot.lane.b32.xlu0 %v352, 64
    %v355 = vpop.permute.xlu0 %354
    %v357 = vmul.f32 %v339, %v355
    %v358 = vxor.u32 %v333, 2147483648
    %v359 = vmul.f32 %v358, 1.442695
    %v360 = vpow.pop %v359
    %v361 = vadd.f32 %v360, 1.0
    %v362 = vrcp.pop %v361
    %v363 = vmul.f32 1.0, %v362
    %v364 = vtanh.pop %v333
    %v365 = vmul.f32 %v363, 0.0
    %367 = vrot.lane.b32.xlu0 %v364, 64
    %v368 = vpop.permute.xlu0 %367
    %v370 = vmul.f32 %v363, %v368
    %372 = vrot.lane.b32.xlu0 %v370, 32
    %v373 = vpop.permute.xlu0 %372
    %v375 = vadd.f32 %v365, %v373
    %v376 = vtanh.pop %v375
    %378 = vrot.lane.b32.xlu0 %v376, 64
    %v379 = vpop.permute.xlu0 %378
    %v381 = vmul.f32 %v363, %v379
    %383 = vrot.lane.b32.xlu0 %v357, 32
    %v384 = vpop.permute.xlu0 %383
    %vm386 = vcmask 254976
    %387 = vst.msk [vmem:[#allocation4] sm:$0x3] %vm386, %v384
    %389 = vrot.lane.b32.xlu0 %v381, 32
    %v390 = vpop.permute.xlu0 %389
    %392 = vst.msk [vmem:[#allocation5 + $0xe] sm:$0x3] %vm386, %v390
    %393 = vrot.lane.b32.xlu0 %v381, 64
    %v394 = vpop.permute.xlu0 %393
    %v396 = vsel %vm67, %v384, %v394
    %v398 = vsel %vm255, %v396, 0
    %400 = vmatprep.subr.mxu0 %v240
    %401 = vmatpush1.msra.mxu0 %v239
    %402 = vmatprep.subr.mxu0 %v242
    %403 = vmatpush1.msra.mxu0 %v241
    %404 = vmatprep.subr.mxu0 %v244
    %405 = vmatpush1.msra.mxu0 %v243
    %406 = vmatprep.subr.mxu0 %v246
    %407 = vmatpush1.msra.mxu0 %v245
    %408 = vmatprep.subr.mxu0 %v248
    %409 = vmatpush1.msra.mxu0 %v247
    %410 = vmatprep.subr.mxu0 %v250
    %411 = vmatpush1.msra.mxu0 %v249
    %412 = vmatprep.subr.mxu0 %v252
    %413 = vmatpush1.msra.mxu0 %v251
    %414 = vmatprep.subr.mxu0 %v254
    %415 = vmatpush1.msra.mxu0 %v253
    %416 = vmatprep.subr.mxu0 0.0
    %417 = vmatpush1.msra.mxu0 0.0
    %418 = vmatprep.subr.mxu0 0.0
    %419 = vmatpush1.msra.mxu0 0.0
    %420 = vmatprep.subr.mxu0 0.0
    %421 = vmatpush1.msra.mxu0 0.0
    %422 = vmatprep.subr.mxu0 0.0
    %423 = vmatpush1.msra.mxu0 0.0
    %424 = vmatprep.subr.mxu0 0.0
    %425 = vmatpush1.msra.mxu0 0.0
    %426 = vmatprep.subr.mxu0 0.0
    %427 = vmatpush1.msra.mxu0 0.0
    %428 = vmatprep.subr.mxu0 0.0
    %429 = vmatpush1.msra.mxu0 0.0
    %430 = vmatprep.subr.mxu0 0.0
    %431 = vmatpush1.msra.mxu0 0.0
    %432 = vmatprep.subr.mxu0 0.0
    %433 = vmatpush1.msra.mxu0 0.0
    %434 = vmatprep.subr.mxu0 0.0
    %435 = vmatpush1.msra.mxu0 0.0
    %436 = vmatprep.subr.mxu0 0.0
    %437 = vmatpush1.msra.mxu0 0.0
    %438 = vmatprep.subr.mxu0 0.0
    %439 = vmatpush1.msra.mxu0 0.0
    %440 = vmatprep.subr.mxu0 0.0
    %441 = vmatpush1.msra.mxu0 0.0
    %442 = vmatprep.subr.mxu0 0.0
    %443 = vmatpush1.msra.mxu0 0.0
    %444 = vmatprep.subr.mxu0 0.0
    %445 = vmatpush1.msra.mxu0 0.0
    %446 = vmatprep.subr.mxu0 0.0
    %447 = vmatpush1.msra.mxu0 0.0
    %448 = vmatprep.subr.mxu0 0.0
    %449 = vmatpush1.msra.mxu0 0.0
    %450 = vmatprep.subr.mxu0 0.0
    %451 = vmatpush1.msra.mxu0 0.0
    %452 = vmatprep.subr.mxu0 0.0
    %453 = vmatpush1.msra.mxu0 0.0
    %454 = vmatprep.subr.mxu0 0.0
    %455 = vmatpush1.msra.mxu0 0.0
    %456 = vmatprep.subr.mxu0 0.0
    %457 = vmatpush1.msra.mxu0 0.0
    %458 = vmatprep.subr.mxu0 0.0
    %459 = vmatpush1.msra.mxu0 0.0
    %460 = vmatprep.subr.mxu0 0.0
    %461 = vmatpush1.msra.mxu0 0.0
    %462 = vmatprep.subr.mxu0 0.0
    %463 = vmatpush1.msra.mxu0 0.0
    %464 = vmatprep.mubr.f32.mxu0 0.0
    %465 = vmatmul.mubr.f32.gmra.mrb[0].mxu0 %v398
    %v466 = vpop.f32.mrb[0].mxu0
    %v467 = vadd.f32 0.0, %v466
    %v468 = vpop.f32.mrb[0].mxu0
    %v469 = vadd.f32 0.0, %v468
    %470 = vdwg.mxu0
    %v471 = vld [vmem:[#allocation2 + $0x2] sm:$0x3]
    %v472 = vadd.f32 %v471, %v467
    %v473 = vld [vmem:[#allocation3 + $0xc] sm:$0x3]
    %v474 = vadd.f32 %v473, %v469
    %v475 = vxor.u32 %v472, 2147483648
    %v476 = vmul.f32 %v475, 1.442695
    %v477 = vpow.pop %v476
    %v478 = vadd.f32 %v477, 1.0
    %v479 = vrcp.pop %v478
    %v480 = vmul.f32 1.0, %v479
    %v481 = vtanh.pop %v472
    %v482 = vmul.f32 %v480, %v351
    %484 = vrot.lane.b32.xlu0 %v481, 64
    %v485 = vpop.permute.xlu0 %484
    %v487 = vmul.f32 %v480, %v485
    %489 = vrot.lane.b32.xlu0 %v487, 32
    %v490 = vpop.permute.xlu0 %489
    %v492 = vadd.f32 %v482, %v490
    %v493 = vtanh.pop %v492
    %495 = vrot.lane.b32.xlu0 %v493, 64
    %v496 = vpop.permute.xlu0 %495
    %v498 = vmul.f32 %v480, %v496
    %v499 = vxor.u32 %v474, 2147483648
    %v500 = vmul.f32 %v499, 1.442695
    %v501 = vpow.pop %v500
    %v502 = vadd.f32 %v501, 1.0
    %v503 = vrcp.pop %v502
    %v504 = vmul.f32 1.0, %v503
    %v505 = vtanh.pop %v474
    %v506 = vmul.f32 %v504, %v375
    %508 = vrot.lane.b32.xlu0 %v505, 64
    %v509 = vpop.permute.xlu0 %508
    %v511 = vmul.f32 %v504, %v509
    %513 = vrot.lane.b32.xlu0 %v511, 32
    %v514 = vpop.permute.xlu0 %513
    %v516 = vadd.f32 %v506, %v514
    %v517 = vtanh.pop %v516
    %519 = vrot.lane.b32.xlu0 %v517, 64
    %v520 = vpop.permute.xlu0 %519
    %v522 = vmul.f32 %v504, %v520
    %524 = vrot.lane.b32.xlu0 %v498, 32
    %v525 = vpop.permute.xlu0 %524
    %527 = vst.msk [vmem:[#allocation4 + $0x2] sm:$0x3] %vm386, %v525
    %529 = vrot.lane.b32.xlu0 %v522, 32
    %v530 = vpop.permute.xlu0 %529
    %532 = vst.msk [vmem:[#allocation5 + $0xc] sm:$0x3] %vm386, %v530
    %533 = vrot.lane.b32.xlu0 %v522, 64
    %v534 = vpop.permute.xlu0 %533
    %v536 = vsel %vm67, %v525, %v534
    %v538 = vsel %vm255, %v536, 0
    %540 = vmatprep.subr.mxu0 %v240
    %541 = vmatpush1.msra.mxu0 %v239
    %542 = vmatprep.subr.mxu0 %v242
    %543 = vmatpush1.msra.mxu0 %v241
    %544 = vmatprep.subr.mxu0 %v244
    %545 = vmatpush1.msra.mxu0 %v243
    %546 = vmatprep.subr.mxu0 %v246
    %547 = vmatpush1.msra.mxu0 %v245
    %548 = vmatprep.subr.mxu0 %v248
    %549 = vmatpush1.msra.mxu0 %v247
    %550 = vmatprep.subr.mxu0 %v250
    %551 = vmatpush1.msra.mxu0 %v249
    %552 = vmatprep.subr.mxu0 %v252
    %553 = vmatpush1.msra.mxu0 %v251
    %554 = vmatprep.subr.mxu0 %v254
    %555 = vmatpush1.msra.mxu0 %v253
    %556 = vmatprep.subr.mxu0 0.0
    %557 = vmatpush1.msra.mxu0 0.0
    %558 = vmatprep.subr.mxu0 0.0
    %559 = vmatpush1.msra.mxu0 0.0
    %560 = vmatprep.subr.mxu0 0.0
    %561 = vmatpush1.msra.mxu0 0.0
    %562 = vmatprep.subr.mxu0 0.0
    %563 = vmatpush1.msra.mxu0 0.0
    %564 = vmatprep.subr.mxu0 0.0
    %565 = vmatpush1.msra.mxu0 0.0
    %566 = vmatprep.subr.mxu0 0.0
    %567 = vmatpush1.msra.mxu0 0.0
    %568 = vmatprep.subr.mxu0 0.0
    %569 = vmatpush1.msra.mxu0 0.0
    %570 = vmatprep.subr.mxu0 0.0
    %571 = vmatpush1.msra.mxu0 0.0
    %572 = vmatprep.subr.mxu0 0.0
    %573 = vmatpush1.msra.mxu0 0.0
    %574 = vmatprep.subr.mxu0 0.0
    %575 = vmatpush1.msra.mxu0 0.0
    %576 = vmatprep.subr.mxu0 0.0
    %577 = vmatpush1.msra.mxu0 0.0
    %578 = vmatprep.subr.mxu0 0.0
    %579 = vmatpush1.msra.mxu0 0.0
    %580 = vmatprep.subr.mxu0 0.0
    %581 = vmatpush1.msra.mxu0 0.0
    %582 = vmatprep.subr.mxu0 0.0
    %583 = vmatpush1.msra.mxu0 0.0
    %584 = vmatprep.subr.mxu0 0.0
    %585 = vmatpush1.msra.mxu0 0.0
    %586 = vmatprep.subr.mxu0 0.0
    %587 = vmatpush1.msra.mxu0 0.0
    %588 = vmatprep.subr.mxu0 0.0
    %589 = vmatpush1.msra.mxu0 0.0
    %590 = vmatprep.subr.mxu0 0.0
    %591 = vmatpush1.msra.mxu0 0.0
    %592 = vmatprep.subr.mxu0 0.0
    %593 = vmatpush1.msra.mxu0 0.0
    %594 = vmatprep.subr.mxu0 0.0
    %595 = vmatpush1.msra.mxu0 0.0
    %596 = vmatprep.subr.mxu0 0.0
    %597 = vmatpush1.msra.mxu0 0.0
    %598 = vmatprep.subr.mxu0 0.0
    %599 = vmatpush1.msra.mxu0 0.0
    %600 = vmatprep.subr.mxu0 0.0
    %601 = vmatpush1.msra.mxu0 0.0
    %602 = vmatprep.subr.mxu0 0.0
    %603 = vmatpush1.msra.mxu0 0.0
    %604 = vmatprep.mubr.f32.mxu0 0.0
    %605 = vmatmul.mubr.f32.gmra.mrb[0].mxu0 %v538
    %v606 = vpop.f32.mrb[0].mxu0
    %v607 = vadd.f32 0.0, %v606
    %v608 = vpop.f32.mrb[0].mxu0
    %v609 = vadd.f32 0.0, %v608
    %610 = vdwg.mxu0
    %v611 = vld [vmem:[#allocation2 + $0x4] sm:$0x3]
    %v612 = vadd.f32 %v611, %v607
    %v613 = vld [vmem:[#allocation3 + $0xa] sm:$0x3]
    %v614 = vadd.f32 %v613, %v609
    %v615 = vxor.u32 %v612, 2147483648
    %v616 = vmul.f32 %v615, 1.442695
    %v617 = vpow.pop %v616
    %v618 = vadd.f32 %v617, 1.0
    %v619 = vrcp.pop %v618
    %v620 = vmul.f32 1.0, %v619
    %v621 = vtanh.pop %v612
    %v622 = vmul.f32 %v620, %v492
    %624 = vrot.lane.b32.xlu0 %v621, 64
    %v625 = vpop.permute.xlu0 %624
    %v627 = vmul.f32 %v620, %v625
    %629 = vrot.lane.b32.xlu0 %v627, 32
    %v630 = vpop.permute.xlu0 %629
    %v632 = vadd.f32 %v622, %v630
    %v633 = vtanh.pop %v632
    %635 = vrot.lane.b32.xlu0 %v633, 64
    %v636 = vpop.permute.xlu0 %635
    %v638 = vmul.f32 %v620, %v636
    %v639 = vxor.u32 %v614, 2147483648
    %v640 = vmul.f32 %v639, 1.442695
    %v641 = vpow.pop %v640
    %v642 = vadd.f32 %v641, 1.0
    %v643 = vrcp.pop %v642
    %v644 = vmul.f32 1.0, %v643
    %v645 = vtanh.pop %v614
    %v646 = vmul.f32 %v644, %v516
    %648 = vrot.lane.b32.xlu0 %v645, 64
    %v649 = vpop.permute.xlu0 %648
    %v651 = vmul.f32 %v644, %v649
    %653 = vrot.lane.b32.xlu0 %v651, 32
    %v654 = vpop.permute.xlu0 %653
    %v656 = vadd.f32 %v646, %v654
    %v657 = vtanh.pop %v656
    %659 = vrot.lane.b32.xlu0 %v657, 64
    %v660 = vpop.permute.xlu0 %659
    %v662 = vmul.f32 %v644, %v660
    %664 = vrot.lane.b32.xlu0 %v638, 32
    %v665 = vpop.permute.xlu0 %664
    %667 = vst.msk [vmem:[#allocation4 + $0x4] sm:$0x3] %vm386, %v665
    %669 = vrot.lane.b32.xlu0 %v662, 32
    %v670 = vpop.permute.xlu0 %669
    %672 = vst.msk [vmem:[#allocation5 + $0xa] sm:$0x3] %vm386, %v670
    %673 = vrot.lane.b32.xlu0 %v662, 64
    %v674 = vpop.permute.xlu0 %673
    %v676 = vsel %vm67, %v665, %v674
    %v678 = vsel %vm255, %v676, 0
    %680 = vmatprep.subr.mxu0 %v240
    %681 = vmatpush1.msra.mxu0 %v239
    %682 = vmatprep.subr.mxu0 %v242
    %683 = vmatpush1.msra.mxu0 %v241
    %684 = vmatprep.subr.mxu0 %v244
    %685 = vmatpush1.msra.mxu0 %v243
    %686 = vmatprep.subr.mxu0 %v246
    %687 = vmatpush1.msra.mxu0 %v245
    %688 = vmatprep.subr.mxu0 %v248
    %689 = vmatpush1.msra.mxu0 %v247
    %690 = vmatprep.subr.mxu0 %v250
    %691 = vmatpush1.msra.mxu0 %v249
    %692 = vmatprep.subr.mxu0 %v252
    %693 = vmatpush1.msra.mxu0 %v251
    %694 = vmatprep.subr.mxu0 %v254
    %695 = vmatpush1.msra.mxu0 %v253
    %696 = vmatprep.subr.mxu0 0.0
    %697 = vmatpush1.msra.mxu0 0.0
    %698 = vmatprep.subr.mxu0 0.0
    %699 = vmatpush1.msra.mxu0 0.0
    %700 = vmatprep.subr.mxu0 0.0
    %701 = vmatpush1.msra.mxu0 0.0
    %702 = vmatprep.subr.mxu0 0.0
    %703 = vmatpush1.msra.mxu0 0.0
    %704 = vmatprep.subr.mxu0 0.0
    %705 = vmatpush1.msra.mxu0 0.0
    %706 = vmatprep.subr.mxu0 0.0
    %707 = vmatpush1.msra.mxu0 0.0
    %708 = vmatprep.subr.mxu0 0.0
    %709 = vmatpush1.msra.mxu0 0.0
    %710 = vmatprep.subr.mxu0 0.0
    %711 = vmatpush1.msra.mxu0 0.0
    %712 = vmatprep.subr.mxu0 0.0
    %713 = vmatpush1.msra.mxu0 0.0
    %714 = vmatprep.subr.mxu0 0.0
    %715 = vmatpush1.msra.mxu0 0.0
    %716 = vmatprep.subr.mxu0 0.0
    %717 = vmatpush1.msra.mxu0 0.0
    %718 = vmatprep.subr.mxu0 0.0
    %719 = vmatpush1.msra.mxu0 0.0
    %720 = vmatprep.subr.mxu0 0.0
    %721 = vmatpush1.msra.mxu0 0.0
    %722 = vmatprep.subr.mxu0 0.0
    %723 = vmatpush1.msra.mxu0 0.0
    %724 = vmatprep.subr.mxu0 0.0
    %725 = vmatpush1.msra.mxu0 0.0
    %726 = vmatprep.subr.mxu0 0.0
    %727 = vmatpush1.msra.mxu0 0.0
    %728 = vmatprep.subr.mxu0 0.0
    %729 = vmatpush1.msra.mxu0 0.0
    %730 = vmatprep.subr.mxu0 0.0
    %731 = vmatpush1.msra.mxu0 0.0
    %732 = vmatprep.subr.mxu0 0.0
    %733 = vmatpush1.msra.mxu0 0.0
    %734 = vmatprep.subr.mxu0 0.0
    %735 = vmatpush1.msra.mxu0 0.0
    %736 = vmatprep.subr.mxu0 0.0
    %737 = vmatpush1.msra.mxu0 0.0
    %738 = vmatprep.subr.mxu0 0.0
    %739 = vmatpush1.msra.mxu0 0.0
    %740 = vmatprep.subr.mxu0 0.0
    %741 = vmatpush1.msra.mxu0 0.0
    %742 = vmatprep.subr.mxu0 0.0
    %743 = vmatpush1.msra.mxu0 0.0
    %744 = vmatprep.mubr.f32.mxu0 0.0
    %745 = vmatmul.mubr.f32.gmra.mrb[0].mxu0 %v678
    %v746 = vpop.f32.mrb[0].mxu0
    %v747 = vadd.f32 0.0, %v746
    %v748 = vpop.f32.mrb[0].mxu0
    %v749 = vadd.f32 0.0, %v748
    %750 = vdwg.mxu0
    %v751 = vld [vmem:[#allocation2 + $0x6] sm:$0x3]
    %v752 = vadd.f32 %v751, %v747
    %v753 = vld [vmem:[#allocation3 + $0x8] sm:$0x3]
    %v754 = vadd.f32 %v753, %v749
    %v755 = vxor.u32 %v752, 2147483648
    %v756 = vmul.f32 %v755, 1.442695
    %v757 = vpow.pop %v756
    %v758 = vadd.f32 %v757, 1.0
    %v759 = vrcp.pop %v758
    %v760 = vmul.f32 1.0, %v759
    %v761 = vtanh.pop %v752
    %v762 = vmul.f32 %v760, %v632
    %764 = vrot.lane.b32.xlu0 %v761, 64
    %v765 = vpop.permute.xlu0 %764
    %v767 = vmul.f32 %v760, %v765
    %769 = vrot.lane.b32.xlu0 %v767, 32
    %v770 = vpop.permute.xlu0 %769
    %v772 = vadd.f32 %v762, %v770
    %v773 = vtanh.pop %v772
    %775 = vrot.lane.b32.xlu0 %v773, 64
    %v776 = vpop.permute.xlu0 %775
    %v778 = vmul.f32 %v760, %v776
    %v779 = vxor.u32 %v754, 2147483648
    %v780 = vmul.f32 %v779, 1.442695
    %v781 = vpow.pop %v780
    %v782 = vadd.f32 %v781, 1.0
    %v783 = vrcp.pop %v782
    %v784 = vmul.f32 1.0, %v783
    %v785 = vtanh.pop %v754
    %v786 = vmul.f32 %v784, %v656
    %788 = vrot.lane.b32.xlu0 %v785, 64
    %v789 = vpop.permute.xlu0 %788
    %v791 = vmul.f32 %v784, %v789
    %793 = vrot.lane.b32.xlu0 %v791, 32
    %v794 = vpop.permute.xlu0 %793
    %v796 = vadd.f32 %v786, %v794
    %v797 = vtanh.pop %v796
    %799 = vrot.lane.b32.xlu0 %v797, 64
    %v800 = vpop.permute.xlu0 %799
    %v802 = vmul.f32 %v784, %v800
    %804 = vrot.lane.b32.xlu0 %v778, 32
    %v805 = vpop.permute.xlu0 %804
    %807 = vst.msk [vmem:[#allocation4 + $0x6] sm:$0x3] %vm386, %v805
    %809 = vrot.lane.b32.xlu0 %v802, 32
    %v810 = vpop.permute.xlu0 %809
    %812 = vst.msk [vmem:[#allocation5 + $0x8] sm:$0x3] %vm386, %v810
    %813 = vrot.lane.b32.xlu0 %v802, 64
    %v814 = vpop.permute.xlu0 %813
    %v816 = vsel %vm67, %v805, %v814
    %v818 = vsel %vm255, %v816, 0
    %820 = vmatprep.subr.mxu0 %v240
    %821 = vmatpush1.msra.mxu0 %v239
    %822 = vmatprep.subr.mxu0 %v242
    %823 = vmatpush1.msra.mxu0 %v241
    %824 = vmatprep.subr.mxu0 %v244
    %825 = vmatpush1.msra.mxu0 %v243
    %826 = vmatprep.subr.mxu0 %v246
    %827 = vmatpush1.msra.mxu0 %v245
    %828 = vmatprep.subr.mxu0 %v248
    %829 = vmatpush1.msra.mxu0 %v247
    %830 = vmatprep.subr.mxu0 %v250
    %831 = vmatpush1.msra.mxu0 %v249
    %832 = vmatprep.subr.mxu0 %v252
    %833 = vmatpush1.msra.mxu0 %v251
    %834 = vmatprep.subr.mxu0 %v254
    %835 = vmatpush1.msra.mxu0 %v253
    %836 = vmatprep.subr.mxu0 0.0
    %837 = vmatpush1.msra.mxu0 0.0
    %838 = vmatprep.subr.mxu0 0.0
    %839 = vmatpush1.msra.mxu0 0.0
    %840 = vmatprep.subr.mxu0 0.0
    %841 = vmatpush1.msra.mxu0 0.0
    %842 = vmatprep.subr.mxu0 0.0
    %843 = vmatpush1.msra.mxu0 0.0
    %844 = vmatprep.subr.mxu0 0.0
    %845 = vmatpush1.msra.mxu0 0.0
    %846 = vmatprep.subr.mxu0 0.0
    %847 = vmatpush1.msra.mxu0 0.0
    %848 = vmatprep.subr.mxu0 0.0
    %849 = vmatpush1.msra.mxu0 0.0
    %850 = vmatprep.subr.mxu0 0.0
    %851 = vmatpush1.msra.mxu0 0.0
    %852 = vmatprep.subr.mxu0 0.0
    %853 = vmatpush1.msra.mxu0 0.0
    %854 = vmatprep.subr.mxu0 0.0
    %855 = vmatpush1.msra.mxu0 0.0
    %856 = vmatprep.subr.mxu0 0.0
    %857 = vmatpush1.msra.mxu0 0.0
    %858 = vmatprep.subr.mxu0 0.0
    %859 = vmatpush1.msra.mxu0 0.0
    %860 = vmatprep.subr.mxu0 0.0
    %861 = vmatpush1.msra.mxu0 0.0
    %862 = vmatprep.subr.mxu0 0.0
    %863 = vmatpush1.msra.mxu0 0.0
    %864 = vmatprep.subr.mxu0 0.0
    %865 = vmatpush1.msra.mxu0 0.0
    %866 = vmatprep.subr.mxu0 0.0
    %867 = vmatpush1.msra.mxu0 0.0
    %868 = vmatprep.subr.mxu0 0.0
    %869 = vmatpush1.msra.mxu0 0.0
    %870 = vmatprep.subr.mxu0 0.0
    %871 = vmatpush1.msra.mxu0 0.0
    %872 = vmatprep.subr.mxu0 0.0
    %873 = vmatpush1.msra.mxu0 0.0
    %874 = vmatprep.subr.mxu0 0.0
    %875 = vmatpush1.msra.mxu0 0.0
    %876 = vmatprep.subr.mxu0 0.0
    %877 = vmatpush1.msra.mxu0 0.0
    %878 = vmatprep.subr.mxu0 0.0
    %879 = vmatpush1.msra.mxu0 0.0
    %880 = vmatprep.subr.mxu0 0.0
    %881 = vmatpush1.msra.mxu0 0.0
    %882 = vmatprep.subr.mxu0 0.0
    %883 = vmatpush1.msra.mxu0 0.0
    %884 = vmatprep.mubr.f32.mxu0 0.0
    %885 = vmatmul.mubr.f32.gmra.mrb[0].mxu0 %v818
    %v886 = vpop.f32.mrb[0].mxu0
    %v887 = vadd.f32 0.0, %v886
    %v888 = vpop.f32.mrb[0].mxu0
    %v889 = vadd.f32 0.0, %v888
    %890 = vdwg.mxu0
    %v891 = vld [vmem:[#allocation2 + $0x8] sm:$0x3]
    %v892 = vadd.f32 %v891, %v887
    %v893 = vld [vmem:[#allocation3 + $0x6] sm:$0x3]
    %v894 = vadd.f32 %v893, %v889
    %v895 = vxor.u32 %v892, 2147483648
    %v896 = vmul.f32 %v895, 1.442695
    %v897 = vpow.pop %v896
    %v898 = vadd.f32 %v897, 1.0
    %v899 = vrcp.pop %v898
    %v900 = vmul.f32 1.0, %v899
    %v901 = vtanh.pop %v892
    %v902 = vmul.f32 %v900, %v772
    %904 = vrot.lane.b32.xlu0 %v901, 64
    %v905 = vpop.permute.xlu0 %904
    %v907 = vmul.f32 %v900, %v905
    %909 = vrot.lane.b32.xlu0 %v907, 32
    %v910 = vpop.permute.xlu0 %909
    %v912 = vadd.f32 %v902, %v910
    %v913 = vtanh.pop %v912
    %915 = vrot.lane.b32.xlu0 %v913, 64
    %v916 = vpop.permute.xlu0 %915
    %v918 = vmul.f32 %v900, %v916
    %v919 = vxor.u32 %v894, 2147483648
    %v920 = vmul.f32 %v919, 1.442695
    %v921 = vpow.pop %v920
    %v922 = vadd.f32 %v921, 1.0
    %v923 = vrcp.pop %v922
    %v924 = vmul.f32 1.0, %v923
    %v925 = vtanh.pop %v894
    %v926 = vmul.f32 %v924, %v796
    %928 = vrot.lane.b32.xlu0 %v925, 64
    %v929 = vpop.permute.xlu0 %928
    %v931 = vmul.f32 %v924, %v929
    %933 = vrot.lane.b32.xlu0 %v931, 32
    %v934 = vpop.permute.xlu0 %933
    %v936 = vadd.f32 %v926, %v934
    %v937 = vtanh.pop %v936
    %939 = vrot.lane.b32.xlu0 %v937, 64
    %v940 = vpop.permute.xlu0 %939
    %v942 = vmul.f32 %v924, %v940
    %944 = vrot.lane.b32.xlu0 %v918, 32
    %v945 = vpop.permute.xlu0 %944
    %947 = vst.msk [vmem:[#allocation4 + $0x8] sm:$0x3] %vm386, %v945
    %949 = vrot.lane.b32.xlu0 %v942, 32
    %v950 = vpop.permute.xlu0 %949
    %952 = vst.msk [vmem:[#allocation5 + $0x6] sm:$0x3] %vm386, %v950
    %953 = vrot.lane.b32.xlu0 %v942, 64
    %v954 = vpop.permute.xlu0 %953
    %v956 = vsel %vm67, %v945, %v954
    %v958 = vsel %vm255, %v956, 0
    %960 = vmatprep.subr.mxu0 %v240
    %961 = vmatpush1.msra.mxu0 %v239
    %962 = vmatprep.subr.mxu0 %v242
    %963 = vmatpush1.msra.mxu0 %v241
    %964 = vmatprep.subr.mxu0 %v244
    %965 = vmatpush1.msra.mxu0 %v243
    %966 = vmatprep.subr.mxu0 %v246
    %967 = vmatpush1.msra.mxu0 %v245
    %968 = vmatprep.subr.mxu0 %v248
    %969 = vmatpush1.msra.mxu0 %v247
    %970 = vmatprep.subr.mxu0 %v250
    %971 = vmatpush1.msra.mxu0 %v249
    %972 = vmatprep.subr.mxu0 %v252
    %973 = vmatpush1.msra.mxu0 %v251
    %974 = vmatprep.subr.mxu0 %v254
    %975 = vmatpush1.msra.mxu0 %v253
    %976 = vmatprep.subr.mxu0 0.0
    %977 = vmatpush1.msra.mxu0 0.0
    %978 = vmatprep.subr.mxu0 0.0
    %979 = vmatpush1.msra.mxu0 0.0
    %980 = vmatprep.subr.mxu0 0.0
    %981 = vmatpush1.msra.mxu0 0.0
    %982 = vmatprep.subr.mxu0 0.0
    %983 = vmatpush1.msra.mxu0 0.0
    %984 = vmatprep.subr.mxu0 0.0
    %985 = vmatpush1.msra.mxu0 0.0
    %986 = vmatprep.subr.mxu0 0.0
    %987 = vmatpush1.msra.mxu0 0.0
    %988 = vmatprep.subr.mxu0 0.0
    %989 = vmatpush1.msra.mxu0 0.0
    %990 = vmatprep.subr.mxu0 0.0
    %991 = vmatpush1.msra.mxu0 0.0
    %992 = vmatprep.subr.mxu0 0.0
    %993 = vmatpush1.msra.mxu0 0.0
    %994 = vmatprep.subr.mxu0 0.0
    %995 = vmatpush1.msra.mxu0 0.0
    %996 = vmatprep.subr.mxu0 0.0
    %997 = vmatpush1.msra.mxu0 0.0
    %998 = vmatprep.subr.mxu0 0.0
    %999 = vmatpush1.msra.mxu0 0.0
    %1000 = vmatprep.subr.mxu0 0.0
    %1001 = vmatpush1.msra.mxu0 0.0
    %1002 = vmatprep.subr.mxu0 0.0
    %1003 = vmatpush1.msra.mxu0 0.0
    %1004 = vmatprep.subr.mxu0 0.0
    %1005 = vmatpush1.msra.mxu0 0.0
    %1006 = vmatprep.subr.mxu0 0.0
    %1007 = vmatpush1.msra.mxu0 0.0
    %1008 = vmatprep.subr.mxu0 0.0
    %1009 = vmatpush1.msra.mxu0 0.0
    %1010 = vmatprep.subr.mxu0 0.0
    %1011 = vmatpush1.msra.mxu0 0.0
    %1012 = vmatprep.subr.mxu0 0.0
    %1013 = vmatpush1.msra.mxu0 0.0
    %1014 = vmatprep.subr.mxu0 0.0
    %1015 = vmatpush1.msra.mxu0 0.0
    %1016 = vmatprep.subr.mxu0 0.0
    %1017 = vmatpush1.msra.mxu0 0.0
    %1018 = vmatprep.subr.mxu0 0.0
    %1019 = vmatpush1.msra.mxu0 0.0
    %1020 = vmatprep.subr.mxu0 0.0
    %1021 = vmatpush1.msra.mxu0 0.0
    %1022 = vmatprep.subr.mxu0 0.0
    %1023 = vmatpush1.msra.mxu0 0.0
    %1024 = vmatprep.mubr.f32.mxu0 0.0
    %1025 = vmatmul.mubr.f32.gmra.mrb[0].mxu0 %v958
    %v1026 = vpop.f32.mrb[0].mxu0
    %v1027 = vadd.f32 0.0, %v1026
    %v1028 = vpop.f32.mrb[0].mxu0
    %v1029 = vadd.f32 0.0, %v1028
    %1030 = vdwg.mxu0
    %v1031 = vld [vmem:[#allocation2 + $0xa] sm:$0x3]
    %v1032 = vadd.f32 %v1031, %v1027
    %v1033 = vld [vmem:[#allocation3 + $0x4] sm:$0x3]
    %v1034 = vadd.f32 %v1033, %v1029
    %v1035 = vxor.u32 %v1032, 2147483648
    %v1036 = vmul.f32 %v1035, 1.442695
    %v1037 = vpow.pop %v1036
    %v1038 = vadd.f32 %v1037, 1.0
    %v1039 = vrcp.pop %v1038
    %v1040 = vmul.f32 1.0, %v1039
    %v1041 = vtanh.pop %v1032
    %v1042 = vmul.f32 %v1040, %v912
    %1044 = vrot.lane.b32.xlu0 %v1041, 64
    %v1045 = vpop.permute.xlu0 %1044
    %v1047 = vmul.f32 %v1040, %v1045
    %1049 = vrot.lane.b32.xlu0 %v1047, 32
    %v1050 = vpop.permute.xlu0 %1049
    %v1052 = vadd.f32 %v1042, %v1050
    %v1053 = vtanh.pop %v1052
    %1055 = vrot.lane.b32.xlu0 %v1053, 64
    %v1056 = vpop.permute.xlu0 %1055
    %v1058 = vmul.f32 %v1040, %v1056
    %v1059 = vxor.u32 %v1034, 2147483648
    %v1060 = vmul.f32 %v1059, 1.442695
    %v1061 = vpow.pop %v1060
    %v1062 = vadd.f32 %v1061, 1.0
    %v1063 = vrcp.pop %v1062
    %v1064 = vmul.f32 1.0, %v1063
    %v1065 = vtanh.pop %v1034
    %v1066 = vmul.f32 %v1064, %v936
    %1068 = vrot.lane.b32.xlu0 %v1065, 64
    %v1069 = vpop.permute.xlu0 %1068
    %v1071 = vmul.f32 %v1064, %v1069
    %1073 = vrot.lane.b32.xlu0 %v1071, 32
    %v1074 = vpop.permute.xlu0 %1073
    %v1076 = vadd.f32 %v1066, %v1074
    %v1077 = vtanh.pop %v1076
    %1079 = vrot.lane.b32.xlu0 %v1077, 64
    %v1080 = vpop.permute.xlu0 %1079
    %v1082 = vmul.f32 %v1064, %v1080
    %1084 = vrot.lane.b32.xlu0 %v1058, 32
    %v1085 = vpop.permute.xlu0 %1084
    %1087 = vst.msk [vmem:[#allocation4 + $0xa] sm:$0x3] %vm386, %v1085
    %1089 = vrot.lane.b32.xlu0 %v1082, 32
    %v1090 = vpop.permute.xlu0 %1089
    %1092 = vst.msk [vmem:[#allocation5 + $0x4] sm:$0x3] %vm386, %v1090
    %1093 = vrot.lane.b32.xlu0 %v1082, 64
    %v1094 = vpop.permute.xlu0 %1093
    %v1096 = vsel %vm67, %v1085, %v1094
    %v1098 = vsel %vm255, %v1096, 0
    %1100 = vmatprep.subr.mxu0 %v240
    %1101 = vmatpush1.msra.mxu0 %v239
    %1102 = vmatprep.subr.mxu0 %v242
    %1103 = vmatpush1.msra.mxu0 %v241
    %1104 = vmatprep.subr.mxu0 %v244
    %1105 = vmatpush1.msra.mxu0 %v243
    %1106 = vmatprep.subr.mxu0 %v246
    %1107 = vmatpush1.msra.mxu0 %v245
    %1108 = vmatprep.subr.mxu0 %v248
    %1109 = vmatpush1.msra.mxu0 %v247
    %1110 = vmatprep.subr.mxu0 %v250
    %1111 = vmatpush1.msra.mxu0 %v249
    %1112 = vmatprep.subr.mxu0 %v252
    %1113 = vmatpush1.msra.mxu0 %v251
    %1114 = vmatprep.subr.mxu0 %v254
    %1115 = vmatpush1.msra.mxu0 %v253
    %1116 = vmatprep.subr.mxu0 0.0
    %1117 = vmatpush1.msra.mxu0 0.0
    %1118 = vmatprep.subr.mxu0 0.0
    %1119 = vmatpush1.msra.mxu0 0.0
    %1120 = vmatprep.subr.mxu0 0.0
    %1121 = vmatpush1.msra.mxu0 0.0
    %1122 = vmatprep.subr.mxu0 0.0
    %1123 = vmatpush1.msra.mxu0 0.0
    %1124 = vmatprep.subr.mxu0 0.0
    %1125 = vmatpush1.msra.mxu0 0.0
    %1126 = vmatprep.subr.mxu0 0.0
    %1127 = vmatpush1.msra.mxu0 0.0
    %1128 = vmatprep.subr.mxu0 0.0
    %1129 = vmatpush1.msra.mxu0 0.0
    %1130 = vmatprep.subr.mxu0 0.0
    %1131 = vmatpush1.msra.mxu0 0.0
    %1132 = vmatprep.subr.mxu0 0.0
    %1133 = vmatpush1.msra.mxu0 0.0
    %1134 = vmatprep.subr.mxu0 0.0
    %1135 = vmatpush1.msra.mxu0 0.0
    %1136 = vmatprep.subr.mxu0 0.0
    %1137 = vmatpush1.msra.mxu0 0.0
    %1138 = vmatprep.subr.mxu0 0.0
    %1139 = vmatpush1.msra.mxu0 0.0
    %1140 = vmatprep.subr.mxu0 0.0
    %1141 = vmatpush1.msra.mxu0 0.0
    %1142 = vmatprep.subr.mxu0 0.0
    %1143 = vmatpush1.msra.mxu0 0.0
    %1144 = vmatprep.subr.mxu0 0.0
    %1145 = vmatpush1.msra.mxu0 0.0
    %1146 = vmatprep.subr.mxu0 0.0
    %1147 = vmatpush1.msra.mxu0 0.0
    %1148 = vmatprep.subr.mxu0 0.0
    %1149 = vmatpush1.msra.mxu0 0.0
    %1150 = vmatprep.subr.mxu0 0.0
    %1151 = vmatpush1.msra.mxu0 0.0
    %1152 = vmatprep.subr.mxu0 0.0
    %1153 = vmatpush1.msra.mxu0 0.0
    %1154 = vmatprep.subr.mxu0 0.0
    %1155 = vmatpush1.msra.mxu0 0.0
    %1156 = vmatprep.subr.mxu0 0.0
    %1157 = vmatpush1.msra.mxu0 0.0
    %1158 = vmatprep.subr.mxu0 0.0
    %1159 = vmatpush1.msra.mxu0 0.0
    %1160 = vmatprep.subr.mxu0 0.0
    %1161 = vmatpush1.msra.mxu0 0.0
    %1162 = vmatprep.subr.mxu0 0.0
    %1163 = vmatpush1.msra.mxu0 0.0
    %1164 = vmatprep.mubr.f32.mxu0 0.0
    %1165 = vmatmul.mubr.f32.gmra.mrb[0].mxu0 %v1098
    %v1166 = vpop.f32.mrb[0].mxu0
    %v1167 = vadd.f32 0.0, %v1166
    %v1168 = vpop.f32.mrb[0].mxu0
    %v1169 = vadd.f32 0.0, %v1168
    %1170 = vdwg.mxu0
    %v1171 = vld [vmem:[#allocation2 + $0xc] sm:$0x3]
    %v1172 = vadd.f32 %v1171, %v1167
    %v1173 = vld [vmem:[#allocation3 + $0x2] sm:$0x3]
    %v1174 = vadd.f32 %v1173, %v1169
    %v1175 = vxor.u32 %v1172, 2147483648
    %v1176 = vmul.f32 %v1175, 1.442695
    %v1177 = vpow.pop %v1176
    %v1178 = vadd.f32 %v1177, 1.0
    %v1179 = vrcp.pop %v1178
    %v1180 = vmul.f32 1.0, %v1179
    %v1181 = vtanh.pop %v1172
    %v1182 = vmul.f32 %v1180, %v1052
    %1184 = vrot.lane.b32.xlu0 %v1181, 64
    %v1185 = vpop.permute.xlu0 %1184
    %v1187 = vmul.f32 %v1180, %v1185
    %1189 = vrot.lane.b32.xlu0 %v1187, 32
    %v1190 = vpop.permute.xlu0 %1189
    %v1192 = vadd.f32 %v1182, %v1190
    %v1193 = vtanh.pop %v1192
    %1195 = vrot.lane.b32.xlu0 %v1193, 64
    %v1196 = vpop.permute.xlu0 %1195
    %v1198 = vmul.f32 %v1180, %v1196
    %v1199 = vxor.u32 %v1174, 2147483648
    %v1200 = vmul.f32 %v1199, 1.442695
    %v1201 = vpow.pop %v1200
    %v1202 = vadd.f32 %v1201, 1.0
    %v1203 = vrcp.pop %v1202
    %v1204 = vmul.f32 1.0, %v1203
    %v1205 = vtanh.pop %v1174
    %v1206 = vmul.f32 %v1204, %v1076
    %1208 = vrot.lane.b32.xlu0 %v1205, 64
    %v1209 = vpop.permute.xlu0 %1208
    %v1211 = vmul.f32 %v1204, %v1209
    %1213 = vrot.lane.b32.xlu0 %v1211, 32
    %v1214 = vpop.permute.xlu0 %1213
    %v1216 = vadd.f32 %v1206, %v1214
    %v1217 = vtanh.pop %v1216
    %1219 = vrot.lane.b32.xlu0 %v1217, 64
    %v1220 = vpop.permute.xlu0 %1219
    %v1222 = vmul.f32 %v1204, %v1220
    %1224 = vrot.lane.b32.xlu0 %v1198, 32
    %v1225 = vpop.permute.xlu0 %1224
    %1227 = vst.msk [vmem:[#allocation4 + $0xc] sm:$0x3] %vm386, %v1225
    %1229 = vrot.lane.b32.xlu0 %v1222, 32
    %v1230 = vpop.permute.xlu0 %1229
    %1232 = vst.msk [vmem:[#allocation5 + $0x2] sm:$0x3] %vm386, %v1230
    %1233 = vrot.lane.b32.xlu0 %v1222, 64
    %v1234 = vpop.permute.xlu0 %1233
    %v1236 = vsel %vm67, %v1225, %v1234
    %v1238 = vsel %vm255, %v1236, 0
    %1240 = vmatprep.subr.mxu0 %v240
    %1241 = vmatpush1.msra.mxu0 %v239
    %1242 = vmatprep.subr.mxu0 %v242
    %1243 = vmatpush1.msra.mxu0 %v241
    %1244 = vmatprep.subr.mxu0 %v244
    %1245 = vmatpush1.msra.mxu0 %v243
    %1246 = vmatprep.subr.mxu0 %v246
    %1247 = vmatpush1.msra.mxu0 %v245
    %1248 = vmatprep.subr.mxu0 %v248
    %1249 = vmatpush1.msra.mxu0 %v247
    %1250 = vmatprep.subr.mxu0 %v250
    %1251 = vmatpush1.msra.mxu0 %v249
    %1252 = vmatprep.subr.mxu0 %v252
    %1253 = vmatpush1.msra.mxu0 %v251
    %1254 = vmatprep.subr.mxu0 %v254
    %1255 = vmatpush1.msra.mxu0 %v253
    %1256 = vmatprep.subr.mxu0 0.0
    %1257 = vmatpush1.msra.mxu0 0.0
    %1258 = vmatprep.subr.mxu0 0.0
    %1259 = vmatpush1.msra.mxu0 0.0
    %1260 = vmatprep.subr.mxu0 0.0
    %1261 = vmatpush1.msra.mxu0 0.0
    %1262 = vmatprep.subr.mxu0 0.0
    %1263 = vmatpush1.msra.mxu0 0.0
    %1264 = vmatprep.subr.mxu0 0.0
    %1265 = vmatpush1.msra.mxu0 0.0
    %1266 = vmatprep.subr.mxu0 0.0
    %1267 = vmatpush1.msra.mxu0 0.0
    %1268 = vmatprep.subr.mxu0 0.0
    %1269 = vmatpush1.msra.mxu0 0.0
    %1270 = vmatprep.subr.mxu0 0.0
    %1271 = vmatpush1.msra.mxu0 0.0
    %1272 = vmatprep.subr.mxu0 0.0
    %1273 = vmatpush1.msra.mxu0 0.0
    %1274 = vmatprep.subr.mxu0 0.0
    %1275 = vmatpush1.msra.mxu0 0.0
    %1276 = vmatprep.subr.mxu0 0.0
    %1277 = vmatpush1.msra.mxu0 0.0
    %1278 = vmatprep.subr.mxu0 0.0
    %1279 = vmatpush1.msra.mxu0 0.0
    %1280 = vmatprep.subr.mxu0 0.0
    %1281 = vmatpush1.msra.mxu0 0.0
    %1282 = vmatprep.subr.mxu0 0.0
    %1283 = vmatpush1.msra.mxu0 0.0
    %1284 = vmatprep.subr.mxu0 0.0
    %1285 = vmatpush1.msra.mxu0 0.0
    %1286 = vmatprep.subr.mxu0 0.0
    %1287 = vmatpush1.msra.mxu0 0.0
    %1288 = vmatprep.subr.mxu0 0.0
    %1289 = vmatpush1.msra.mxu0 0.0
    %1290 = vmatprep.subr.mxu0 0.0
    %1291 = vmatpush1.msra.mxu0 0.0
    %1292 = vmatprep.subr.mxu0 0.0
    %1293 = vmatpush1.msra.mxu0 0.0
    %1294 = vmatprep.subr.mxu0 0.0
    %1295 = vmatpush1.msra.mxu0 0.0
    %1296 = vmatprep.subr.mxu0 0.0
    %1297 = vmatpush1.msra.mxu0 0.0
    %1298 = vmatprep.subr.mxu0 0.0
    %1299 = vmatpush1.msra.mxu0 0.0
    %1300 = vmatprep.subr.mxu0 0.0
    %1301 = vmatpush1.msra.mxu0 0.0
    %1302 = vmatprep.subr.mxu0 0.0
    %1303 = vmatpush1.msra.mxu0 0.0
    %1304 = vmatprep.mubr.f32.mxu0 0.0
    %1305 = vmatmul.mubr.f32.gmra.mrb[0].mxu0 %v1238
    %v1306 = vpop.f32.mrb[0].mxu0
    %v1307 = vadd.f32 0.0, %v1306
    %v1308 = vpop.f32.mrb[0].mxu0
    %v1309 = vadd.f32 0.0, %v1308
    %1310 = vdwg.mxu0
    %v1311 = vld [vmem:[#allocation2 + $0xe] sm:$0x3]
    %v1312 = vadd.f32 %v1311, %v1307
    %v1313 = vld [vmem:[#allocation3] sm:$0x3]
    %v1314 = vadd.f32 %v1313, %v1309
    %v1315 = vxor.u32 %v1312, 2147483648
    %v1316 = vmul.f32 %v1315, 1.442695
    %v1317 = vpow.pop %v1316
    %v1318 = vadd.f32 %v1317, 1.0
    %v1319 = vrcp.pop %v1318
    %v1320 = vmul.f32 1.0, %v1319
    %v1321 = vtanh.pop %v1312
    %v1322 = vmul.f32 %v1320, %v1192
    %1324 = vrot.lane.b32.xlu0 %v1321, 64
    %v1325 = vpop.permute.xlu0 %1324
    %v1327 = vmul.f32 %v1320, %v1325
    %1329 = vrot.lane.b32.xlu0 %v1327, 32
    %v1330 = vpop.permute.xlu0 %1329
    %v1332 = vadd.f32 %v1322, %v1330
    %v1333 = vtanh.pop %v1332
    %1335 = vrot.lane.b32.xlu0 %v1333, 64
    %v1336 = vpop.permute.xlu0 %1335
    %v1338 = vmul.f32 %v1320, %v1336
    %v1339 = vxor.u32 %v1314, 2147483648
    %v1340 = vmul.f32 %v1339, 1.442695
    %v1341 = vpow.pop %v1340
    %v1342 = vadd.f32 %v1341, 1.0
    %v1343 = vrcp.pop %v1342
    %v1344 = vmul.f32 1.0, %v1343
    %v1345 = vtanh.pop %v1314
    %v1346 = vmul.f32 %v1344, %v1216
    %1348 = vrot.lane.b32.xlu0 %v1345, 64
    %v1349 = vpop.permute.xlu0 %1348
    %v1351 = vmul.f32 %v1344, %v1349
    %1353 = vrot.lane.b32.xlu0 %v1351, 32
    %v1354 = vpop.permute.xlu0 %1353
    %v1356 = vadd.f32 %v1346, %v1354
    %v1357 = vtanh.pop %v1356
    %1359 = vrot.lane.b32.xlu0 %v1357, 64
    %v1360 = vpop.permute.xlu0 %1359
    %v1362 = vmul.f32 %v1344, %v1360
    %1364 = vrot.lane.b32.xlu0 %v1338, 32
    %v1365 = vpop.permute.xlu0 %1364
    %1367 = vst.msk [vmem:[#allocation4 + $0xe] sm:$0x3] %vm386, %v1365
    %1369 = vrot.lane.b32.xlu0 %v1362, 32
    %v1370 = vpop.permute.xlu0 %1369
    %1372 = vst.msk [vmem:[#allocation5] sm:$0x3] %vm386, %v1370
    %v1373 = vld [vmem:[#allocation4] sm:$0xff]
    %v1374 = vld [vmem:[#allocation4 + $0x8] sm:$0xff]
    %v1375 = vld [vmem:[#allocation5] sm:$0xff]
    %v1376 = vld [vmem:[#allocation5 + $0x8] sm:$0xff]
    %1379 = vrot.lane.b32.xlu0 %v1375, 32
    %v1380 = vpop.permute.xlu0 %1379
    %1381 = vrot.lane.b32.xlu0 %v1376, 32
    %v1382 = vpop.permute.xlu0 %1381
    %v1385 = vsel %vm67, %v1373, %v1380
    %v1386 = vsel %vm67, %v1374, %v1382
    %v1387 = vld [vmem:[%s6] sm:$0xff]
    %v1388 = vld [vmem:[%s6 + $0x8] sm:$0xff]
    %v1389 = vld [vmem:[%s6 + $0x10] sm:$0xff]
    %v1390 = vld [vmem:[%s6 + $0x18] sm:$0xff]
    %v1391 = vld [vmem:[%s6 + $0x20] sm:$0xff]
    %v1392 = vld [vmem:[%s6 + $0x28] sm:$0xff]
    %v1393 = vld [vmem:[%s6 + $0x30] sm:$0xff]
    %v1394 = vld [vmem:[%s6 + $0x38] sm:$0xff]
    %v1395 = vld [vmem:[%s8] sm:$0x1]
    %v1397 = vlaneseq
    %v1398 = vshrl.u32 %v1397, 7
    %v1399 = vsub.s32 0, %v1398
    %v1400 = vrot.slane %v1395, %v1399
    %v1403 = vsel %vm255, %v1385, 0
    %v1406 = vsel %vm255, %v1386, 0
    %1408 = vmatprep.subr.mxu0 0.0
    %1409 = vmatpush1.msra.mxu0 %v1387
    %1410 = vmatprep.subr.mxu0 0.0
    %1411 = vmatpush1.msra.mxu0 %v1388
    %1412 = vmatprep.subr.mxu0 0.0
    %1413 = vmatpush1.msra.mxu0 %v1389
    %1414 = vmatprep.subr.mxu0 0.0
    %1415 = vmatpush1.msra.mxu0 %v1390
    %1416 = vmatprep.subr.mxu0 0.0
    %1417 = vmatpush1.msra.mxu0 %v1391
    %1418 = vmatprep.subr.mxu0 0.0
    %1419 = vmatpush1.msra.mxu0 %v1392
    %1420 = vmatprep.subr.mxu0 0.0
    %1421 = vmatpush1.msra.mxu0 %v1393
    %1422 = vmatprep.subr.mxu0 0.0
    %1423 = vmatpush1.msra.mxu0 %v1394
    %1424 = vmatprep.subr.mxu0 0.0
    %1425 = vmatpush1.msra.mxu0 0.0
    %1426 = vmatprep.subr.mxu0 0.0
    %1427 = vmatpush1.msra.mxu0 0.0
    %1428 = vmatprep.subr.mxu0 0.0
    %1429 = vmatpush1.msra.mxu0 0.0
    %1430 = vmatprep.subr.mxu0 0.0
    %1431 = vmatpush1.msra.mxu0 0.0
    %1432 = vmatprep.subr.mxu0 0.0
    %1433 = vmatpush1.msra.mxu0 0.0
    %1434 = vmatprep.subr.mxu0 0.0
    %1435 = vmatpush1.msra.mxu0 0.0
    %1436 = vmatprep.subr.mxu0 0.0
    %1437 = vmatpush1.msra.mxu0 0.0
    %1438 = vmatprep.subr.mxu0 0.0
    %1439 = vmatpush1.msra.mxu0 0.0
    %1440 = vmatprep.subr.mxu0 0.0
    %1441 = vmatpush1.msra.mxu0 0.0
    %1442 = vmatprep.subr.mxu0 0.0
    %1443 = vmatpush1.msra.mxu0 0.0
    %1444 = vmatprep.subr.mxu0 0.0
    %1445 = vmatpush1.msra.mxu0 0.0
    %1446 = vmatprep.subr.mxu0 0.0
    %1447 = vmatpush1.msra.mxu0 0.0
    %1448 = vmatprep.subr.mxu0 0.0
    %1449 = vmatpush1.msra.mxu0 0.0
    %1450 = vmatprep.subr.mxu0 0.0
    %1451 = vmatpush1.msra.mxu0 0.0
    %1452 = vmatprep.subr.mxu0 0.0
    %1453 = vmatpush1.msra.mxu0 0.0
    %1454 = vmatprep.subr.mxu0 0.0
    %1455 = vmatpush1.msra.mxu0 0.0
    %1456 = vmatprep.subr.mxu0 0.0
    %1457 = vmatpush1.msra.mxu0 0.0
    %1458 = vmatprep.subr.mxu0 0.0
    %1459 = vmatpush1.msra.mxu0 0.0
    %1460 = vmatprep.subr.mxu0 0.0
    %1461 = vmatpush1.msra.mxu0 0.0
    %1462 = vmatprep.subr.mxu0 0.0
    %1463 = vmatpush1.msra.mxu0 0.0
    %1464 = vmatprep.subr.mxu0 0.0
    %1465 = vmatpush1.msra.mxu0 0.0
    %1466 = vmatprep.subr.mxu0 0.0
    %1467 = vmatpush1.msra.mxu0 0.0
    %1468 = vmatprep.subr.mxu0 0.0
    %1469 = vmatpush1.msra.mxu0 0.0
    %1470 = vmatprep.subr.mxu0 0.0
    %1471 = vmatpush1.msra.mxu0 0.0
    %1472 = vmatprep.mubr.f32.mxu0 0.0
    %1473 = vmatmul.mubr.f32.gmra.mrb[0].mxu0 %v1403
    %v1474 = vpop.f32.mrb[0].mxu0
    %v1475 = vadd.f32 %v1400, %v1474
    %v1476 = vpop.f32.mrb[0].mxu0
    %1477 = vmatprep.mubr.f32.mxu0 0.0
    %1478 = vmatmul.mubr.f32.gmra.mrb[0].mxu0 %v1406
    %v1479 = vpop.f32.mrb[0].mxu0
    %v1480 = vadd.f32 %v1400, %v1479
    %v1481 = vpop.f32.mrb[0].mxu0
    %1482 = vdwg.mxu0
    %vm1483 = vcmask 785408
    %1484 = vst.msk [vmem:[#allocation6] sm:$0xff] %vm1483, %v1475
    %1485 = vst.msk [vmem:[#allocation6 + $0x8] sm:$0xff] %vm1483, %v1480
    %v1486 = vld [vmem:[%s7] sm:$0xff]
    %v1487 = vld [vmem:[%s7 + $0x8] sm:$0xff]
    %v1488 = vld [vmem:[%s7 + $0x10] sm:$0xff]
    %v1489 = vld [vmem:[%s7 + $0x18] sm:$0xff]
    %v1490 = vld [vmem:[%s7 + $0x20] sm:$0xff]
    %v1491 = vld [vmem:[%s7 + $0x28] sm:$0xff]
    %v1492 = vld [vmem:[%s7 + $0x30] sm:$0xff]
    %v1493 = vld [vmem:[%s7 + $0x38] sm:$0xff]
    %v1494 = vld [vmem:[%s9] sm:$0x1]
    %v1496 = vlaneseq
    %v1497 = vshrl.u32 %v1496, 7
    %v1498 = vsub.s32 0, %v1497
    %v1499 = vrot.slane %v1494, %v1498
    %1501 = vmatprep.subr.mxu0 0.0
    %1502 = vmatpush1.msra.mxu0 %v1486
    %1503 = vmatprep.subr.mxu0 0.0
    %1504 = vmatpush1.msra.mxu0 %v1487
    %1505 = vmatprep.subr.mxu0 0.0
    %1506 = vmatpush1.msra.mxu0 %v1488
    %1507 = vmatprep.subr.mxu0 0.0
    %1508 = vmatpush1.msra.mxu0 %v1489
    %1509 = vmatprep.subr.mxu0 0.0
    %1510 = vmatpush1.msra.mxu0 %v1490
    %1511 = vmatprep.subr.mxu0 0.0
    %1512 = vmatpush1.msra.mxu0 %v1491
    %1513 = vmatprep.subr.mxu0 0.0
    %1514 = vmatpush1.msra.mxu0 %v1492
    %1515 = vmatprep.subr.mxu0 0.0
    %1516 = vmatpush1.msra.mxu0 %v1493
    %1517 = vmatprep.subr.mxu0 0.0
    %1518 = vmatpush1.msra.mxu0 0.0
    %1519 = vmatprep.subr.mxu0 0.0
    %1520 = vmatpush1.msra.mxu0 0.0
    %1521 = vmatprep.subr.mxu0 0.0
    %1522 = vmatpush1.msra.mxu0 0.0
    %1523 = vmatprep.subr.mxu0 0.0
    %1524 = vmatpush1.msra.mxu0 0.0
    %1525 = vmatprep.subr.mxu0 0.0
    %1526 = vmatpush1.msra.mxu0 0.0
    %1527 = vmatprep.subr.mxu0 0.0
    %1528 = vmatpush1.msra.mxu0 0.0
    %1529 = vmatprep.subr.mxu0 0.0
    %1530 = vmatpush1.msra.mxu0 0.0
    %1531 = vmatprep.subr.mxu0 0.0
    %1532 = vmatpush1.msra.mxu0 0.0
    %1533 = vmatprep.subr.mxu0 0.0
    %1534 = vmatpush1.msra.mxu0 0.0
    %1535 = vmatprep.subr.mxu0 0.0
    %1536 = vmatpush1.msra.mxu0 0.0
    %1537 = vmatprep.subr.mxu0 0.0
    %1538 = vmatpush1.msra.mxu0 0.0
    %1539 = vmatprep.subr.mxu0 0.0
    %1540 = vmatpush1.msra.mxu0 0.0
    %1541 = vmatprep.subr.mxu0 0.0
    %1542 = vmatpush1.msra.mxu0 0.0
    %1543 = vmatprep.subr.mxu0 0.0
    %1544 = vmatpush1.msra.mxu0 0.0
    %1545 = vmatprep.subr.mxu0 0.0
    %1546 = vmatpush1.msra.mxu0 0.0
    %1547 = vmatprep.subr.mxu0 0.0
    %1548 = vmatpush1.msra.mxu0 0.0
    %1549 = vmatprep.subr.mxu0 0.0
    %1550 = vmatpush1.msra.mxu0 0.0
    %1551 = vmatprep.subr.mxu0 0.0
    %1552 = vmatpush1.msra.mxu0 0.0
    %1553 = vmatprep.subr.mxu0 0.0
    %1554 = vmatpush1.msra.mxu0 0.0
    %1555 = vmatprep.subr.mxu0 0.0
    %1556 = vmatpush1.msra.mxu0 0.0
    %1557 = vmatprep.subr.mxu0 0.0
    %1558 = vmatpush1.msra.mxu0 0.0
    %1559 = vmatprep.subr.mxu0 0.0
    %1560 = vmatpush1.msra.mxu0 0.0
    %1561 = vmatprep.subr.mxu0 0.0
    %1562 = vmatpush1.msra.mxu0 0.0
    %1563 = vmatprep.subr.mxu0 0.0
    %1564 = vmatpush1.msra.mxu0 0.0
    %1565 = vmatprep.mubr.f32.mxu0 0.0
    %1566 = vmatmul.mubr.f32.gmra.mrb[0].mxu0 %v1403
    %v1567 = vpop.f32.mrb[0].mxu0
    %v1568 = vadd.f32 %v1499, %v1567
    %v1569 = vpop.f32.mrb[0].mxu0
    %1570 = vmatprep.mubr.f32.mxu0 0.0
    %1571 = vmatmul.mubr.f32.gmra.mrb[0].mxu0 %v1406
    %v1572 = vpop.f32.mrb[0].mxu0
    %v1573 = vadd.f32 %v1499, %v1572
    %v1574 = vpop.f32.mrb[0].mxu0
    %1575 = vdwg.mxu0
    %1576 = vst.msk [vmem:[#allocation7] sm:$0xff] %vm1483, %v1568
    %1577 = vst.msk [vmem:[#allocation7 + $0x8] sm:$0xff] %vm1483, %v1573
    %v1578 = vld [vmem:[%s10] sm:$0xff]
    %v1579 = vld [vmem:[%s10 + $0x8] sm:$0xff]
    %v1580 = vld [vmem:[%s10 + $0x10] sm:$0xff]
    %v1581 = vld [vmem:[%s10 + $0x18] sm:$0xff]
    %v1582 = vld [vmem:[%s10 + $0x20] sm:$0xff]
    %v1583 = vld [vmem:[%s10 + $0x28] sm:$0xff]
    %v1584 = vld [vmem:[%s10 + $0x30] sm:$0xff]
    %v1585 = vld [vmem:[%s10 + $0x38] sm:$0xff]
    %v1586 = vld [vmem:[%s10 + $0x40] sm:$0xff]
    %v1587 = vld [vmem:[%s10 + $0x48] sm:$0xff]
    %v1588 = vld [vmem:[%s10 + $0x50] sm:$0xff]
    %v1589 = vld [vmem:[%s10 + $0x58] sm:$0xff]
    %v1590 = vld [vmem:[%s10 + $0x60] sm:$0xff]
    %v1591 = vld [vmem:[%s10 + $0x68] sm:$0xff]
    %v1592 = vld [vmem:[%s10 + $0x70] sm:$0xff]
    %v1593 = vld [vmem:[%s10 + $0x78] sm:$0xff]
    %v1594 = vld [vmem:[%s11] sm:$0x3]
    %v1596 = vlaneseq
    %v1597 = vshrl.u32 %v1596, 7
    %v1598 = vsub.s32 0, %v1597
    %v1599 = vrot.slane %v1594, %v1598
    %v1600 = vlaneseq
    %v1601 = vshrl.u32 %v1600, 7
    %v1602 = vsub.s32 1, %v1601
    %v1603 = vrot.slane %v1594, %v1602
    %1606 = vmatprep.subr.mxu0 %v1579
    %1607 = vmatpush1.msra.mxu0 %v1578
    %1608 = vmatprep.subr.mxu0 %v1581
    %1609 = vmatpush1.msra.mxu0 %v1580
    %1610 = vmatprep.subr.mxu0 %v1583
    %1611 = vmatpush1.msra.mxu0 %v1582
    %1612 = vmatprep.subr.mxu0 %v1585
    %1613 = vmatpush1.msra.mxu0 %v1584
    %1614 = vmatprep.subr.mxu0 %v1587
    %1615 = vmatpush1.msra.mxu0 %v1586
    %1616 = vmatprep.subr.mxu0 %v1589
    %1617 = vmatpush1.msra.mxu0 %v1588
    %1618 = vmatprep.subr.mxu0 %v1591
    %1619 = vmatpush1.msra.mxu0 %v1590
    %1620 = vmatprep.subr.mxu0 %v1593
    %1621 = vmatpush1.msra.mxu0 %v1592
    %1622 = vmatprep.subr.mxu0 0.0
    %1623 = vmatpush1.msra.mxu0 0.0
    %1624 = vmatprep.subr.mxu0 0.0
    %1625 = vmatpush1.msra.mxu0 0.0
    %1626 = vmatprep.subr.mxu0 0.0
    %1627 = vmatpush1.msra.mxu0 0.0
    %1628 = vmatprep.subr.mxu0 0.0
    %1629 = vmatpush1.msra.mxu0 0.0
    %1630 = vmatprep.subr.mxu0 0.0
    %1631 = vmatpush1.msra.mxu0 0.0
    %1632 = vmatprep.subr.mxu0 0.0
    %1633 = vmatpush1.msra.mxu0 0.0
    %1634 = vmatprep.subr.mxu0 0.0
    %1635 = vmatpush1.msra.mxu0 0.0
    %1636 = vmatprep.subr.mxu0 0.0
    %1637 = vmatpush1.msra.mxu0 0.0
    %1638 = vmatprep.subr.mxu0 0.0
    %1639 = vmatpush1.msra.mxu0 0.0
    %1640 = vmatprep.subr.mxu0 0.0
    %1641 = vmatpush1.msra.mxu0 0.0
    %1642 = vmatprep.subr.mxu0 0.0
    %1643 = vmatpush1.msra.mxu0 0.0
    %1644 = vmatprep.subr.mxu0 0.0
    %1645 = vmatpush1.msra.mxu0 0.0
    %1646 = vmatprep.subr.mxu0 0.0
    %1647 = vmatpush1.msra.mxu0 0.0
    %1648 = vmatprep.subr.mxu0 0.0
    %1649 = vmatpush1.msra.mxu0 0.0
    %1650 = vmatprep.subr.mxu0 0.0
    %1651 = vmatpush1.msra.mxu0 0.0
    %1652 = vmatprep.subr.mxu0 0.0
    %1653 = vmatpush1.msra.mxu0 0.0
    %1654 = vmatprep.subr.mxu0 0.0
    %1655 = vmatpush1.msra.mxu0 0.0
    %1656 = vmatprep.subr.mxu0 0.0
    %1657 = vmatpush1.msra.mxu0 0.0
    %1658 = vmatprep.subr.mxu0 0.0
    %1659 = vmatpush1.msra.mxu0 0.0
    %1660 = vmatprep.subr.mxu0 0.0
    %1661 = vmatpush1.msra.mxu0 0.0
    %1662 = vmatprep.subr.mxu0 0.0
    %1663 = vmatpush1.msra.mxu0 0.0
    %1664 = vmatprep.subr.mxu0 0.0
    %1665 = vmatpush1.msra.mxu0 0.0
    %1666 = vmatprep.subr.mxu0 0.0
    %1667 = vmatpush1.msra.mxu0 0.0
    %1668 = vmatprep.subr.mxu0 0.0
    %1669 = vmatpush1.msra.mxu0 0.0
    %1670 = vmatprep.mubr.f32.mxu0 0.0
    %1671 = vmatmul.mubr.f32.gmra.mrb[0].mxu0 %v257
    %v1672 = vpop.f32.mrb[0].mxu0
    %v1673 = vadd.f32 %v1599, %v1672
    %v1674 = vpop.f32.mrb[0].mxu0
    %v1675 = vadd.f32 %v1603, %v1674
    %1676 = vdwg.mxu0
    %v1677 = vld [vmem:[#allocation6] sm:$0x3]
    %v1678 = vadd.f32 %v1677, %v1673
    %v1679 = vxor.u32 %v1678, 2147483648
    %v1680 = vmul.f32 %v1679, 1.442695
    %v1681 = vpow.pop %v1680
    %v1682 = vadd.f32 %v1681, 1.0
    %v1683 = vrcp.pop %v1682
    %v1684 = vmul.f32 1.0, %v1683
    %1686 = vrot.lane.b32.xlu0 %v1673, 64
    %v1687 = vpop.permute.xlu0 %1686
    %v1689 = vmul.f32 %v1684, %v1687
    %1691 = vrot.lane.b32.xlu0 %v1689, 64
    %v1692 = vpop.permute.xlu0 %1691
    %v1694 = vadd.f32 %v1677, %v1692
    %v1695 = vtanh.pop %v1694
    %v1696 = vsub.f32 1.0, %v1684
    %1698 = vrot.lane.b32.xlu0 %v1695, 96
    %v1699 = vpop.permute.xlu0 %1698
    %v1701 = vmul.f32 %v1696, %v1699
    %v1702 = vmul.f32 %v1684, 0.0
    %v1703 = vadd.f32 %v1701, %v1702
    %v1704 = vld [vmem:[#allocation7 + $0xe] sm:$0x3]
    %1705 = vrot.lane.b32.xlu0 %v1673, 32
    %v1706 = vpop.permute.xlu0 %1705
    %v1708 = vadd.f32 %v1704, %v1706
    %v1709 = vxor.u32 %v1708, 2147483648
    %v1710 = vmul.f32 %v1709, 1.442695
    %v1711 = vpow.pop %v1710
    %v1712 = vadd.f32 %v1711, 1.0
    %v1713 = vrcp.pop %v1712
    %v1714 = vmul.f32 1.0, %v1713
    %1716 = vrot.lane.b32.xlu0 %v1675, 32
    %v1717 = vpop.permute.xlu0 %1716
    %v1719 = vadd.f32 %v1704, %v1717
    %v1720 = vxor.u32 %v1719, 2147483648
    %v1721 = vmul.f32 %v1720, 1.442695
    %v1722 = vpow.pop %v1721
    %v1723 = vadd.f32 %v1722, 1.0
    %v1724 = vrcp.pop %v1723
    %v1725 = vmul.f32 1.0, %v1724
    %1726 = vrot.lane.b32.xlu0 %v1675, 96
    %v1727 = vpop.permute.xlu0 %1726
    %v1729 = vmul.f32 %v1714, %v1727
    %1731 = vrot.lane.b32.xlu0 %v1729, 64
    %v1732 = vpop.permute.xlu0 %1731
    %v1734 = vadd.f32 %v1704, %v1732
    %v1735 = vtanh.pop %v1734
    %v1736 = vsub.f32 1.0, %v1725
    %1738 = vrot.lane.b32.xlu0 %v1735, 96
    %v1739 = vpop.permute.xlu0 %1738
    %v1741 = vmul.f32 %v1736, %v1739
    %v1742 = vmul.f32 %v1725, 0.0
    %v1743 = vadd.f32 %v1741, %v1742
    %v1744 = vadd.f32 %v1703, 0.0
    %v1745 = vadd.f32 %v1743, 0.0
    %1747 = vrot.lane.b32.xlu0 %v1703, 96
    %v1748 = vpop.permute.xlu0 %1747
    %v1750 = vsel %vm67, %v1748, %v1743
    %v1752 = vsel %vm255, %v1750, 0
    %1754 = vmatprep.subr.mxu0 %v1579
    %1755 = vmatpush1.msra.mxu0 %v1578
    %1756 = vmatprep.subr.mxu0 %v1581
    %1757 = vmatpush1.msra.mxu0 %v1580
    %1758 = vmatprep.subr.mxu0 %v1583
    %1759 = vmatpush1.msra.mxu0 %v1582
    %1760 = vmatprep.subr.mxu0 %v1585
    %1761 = vmatpush1.msra.mxu0 %v1584
    %1762 = vmatprep.subr.mxu0 %v1587
    %1763 = vmatpush1.msra.mxu0 %v1586
    %1764 = vmatprep.subr.mxu0 %v1589
    %1765 = vmatpush1.msra.mxu0 %v1588
    %1766 = vmatprep.subr.mxu0 %v1591
    %1767 = vmatpush1.msra.mxu0 %v1590
    %1768 = vmatprep.subr.mxu0 %v1593
    %1769 = vmatpush1.msra.mxu0 %v1592
    %1770 = vmatprep.subr.mxu0 0.0
    %1771 = vmatpush1.msra.mxu0 0.0
    %1772 = vmatprep.subr.mxu0 0.0
    %1773 = vmatpush1.msra.mxu0 0.0
    %1774 = vmatprep.subr.mxu0 0.0
    %1775 = vmatpush1.msra.mxu0 0.0
    %1776 = vmatprep.subr.mxu0 0.0
    %1777 = vmatpush1.msra.mxu0 0.0
    %1778 = vmatprep.subr.mxu0 0.0
    %1779 = vmatpush1.msra.mxu0 0.0
    %1780 = vmatprep.subr.mxu0 0.0
    %1781 = vmatpush1.msra.mxu0 0.0
    %1782 = vmatprep.subr.mxu0 0.0
    %1783 = vmatpush1.msra.mxu0 0.0
    %1784 = vmatprep.subr.mxu0 0.0
    %1785 = vmatpush1.msra.mxu0 0.0
    %1786 = vmatprep.subr.mxu0 0.0
    %1787 = vmatpush1.msra.mxu0 0.0
    %1788 = vmatprep.subr.mxu0 0.0
    %1789 = vmatpush1.msra.mxu0 0.0
    %1790 = vmatprep.subr.mxu0 0.0
    %1791 = vmatpush1.msra.mxu0 0.0
    %1792 = vmatprep.subr.mxu0 0.0
    %1793 = vmatpush1.msra.mxu0 0.0
    %1794 = vmatprep.subr.mxu0 0.0
    %1795 = vmatpush1.msra.mxu0 0.0
    %1796 = vmatprep.subr.mxu0 0.0
    %1797 = vmatpush1.msra.mxu0 0.0
    %1798 = vmatprep.subr.mxu0 0.0
    %1799 = vmatpush1.msra.mxu0 0.0
    %1800 = vmatprep.subr.mxu0 0.0
    %1801 = vmatpush1.msra.mxu0 0.0
    %1802 = vmatprep.subr.mxu0 0.0
    %1803 = vmatpush1.msra.mxu0 0.0
    %1804 = vmatprep.subr.mxu0 0.0
    %1805 = vmatpush1.msra.mxu0 0.0
    %1806 = vmatprep.subr.mxu0 0.0
    %1807 = vmatpush1.msra.mxu0 0.0
    %1808 = vmatprep.subr.mxu0 0.0
    %1809 = vmatpush1.msra.mxu0 0.0
    %1810 = vmatprep.subr.mxu0 0.0
    %1811 = vmatpush1.msra.mxu0 0.0
    %1812 = vmatprep.subr.mxu0 0.0
    %1813 = vmatpush1.msra.mxu0 0.0
    %1814 = vmatprep.subr.mxu0 0.0
    %1815 = vmatpush1.msra.mxu0 0.0
    %1816 = vmatprep.subr.mxu0 0.0
    %1817 = vmatpush1.msra.mxu0 0.0
    %1818 = vmatprep.mubr.f32.mxu0 0.0
    %1819 = vmatmul.mubr.f32.gmra.mrb[0].mxu0 %v1752
    %v1820 = vpop.f32.mrb[0].mxu0
    %v1821 = vadd.f32 %v1599, %v1820
    %v1822 = vpop.f32.mrb[0].mxu0
    %v1823 = vadd.f32 %v1603, %v1822
    %1824 = vdwg.mxu0
    %v1825 = vld [vmem:[#allocation6 + $0x2] sm:$0x3]
    %v1826 = vadd.f32 %v1825, %v1821
    %v1827 = vxor.u32 %v1826, 2147483648
    %v1828 = vmul.f32 %v1827, 1.442695
    %v1829 = vpow.pop %v1828
    %v1830 = vadd.f32 %v1829, 1.0
    %v1831 = vrcp.pop %v1830
    %v1832 = vmul.f32 1.0, %v1831
    %1834 = vrot.lane.b32.xlu0 %v1821, 64
    %v1835 = vpop.permute.xlu0 %1834
    %v1837 = vmul.f32 %v1832, %v1835
    %1839 = vrot.lane.b32.xlu0 %v1837, 64
    %v1840 = vpop.permute.xlu0 %1839
    %v1842 = vadd.f32 %v1825, %v1840
    %v1843 = vtanh.pop %v1842
    %v1844 = vsub.f32 1.0, %v1832
    %1846 = vrot.lane.b32.xlu0 %v1843, 96
    %v1847 = vpop.permute.xlu0 %1846
    %v1849 = vmul.f32 %v1844, %v1847
    %v1850 = vmul.f32 %v1832, %v1703
    %v1851 = vadd.f32 %v1849, %v1850
    %v1852 = vld [vmem:[#allocation7 + $0xc] sm:$0x3]
    %1853 = vrot.lane.b32.xlu0 %v1821, 32
    %v1854 = vpop.permute.xlu0 %1853
    %v1856 = vadd.f32 %v1852, %v1854
    %v1857 = vxor.u32 %v1856, 2147483648
    %v1858 = vmul.f32 %v1857, 1.442695
    %v1859 = vpow.pop %v1858
    %v1860 = vadd.f32 %v1859, 1.0
    %v1861 = vrcp.pop %v1860
    %v1862 = vmul.f32 1.0, %v1861
    %1864 = vrot.lane.b32.xlu0 %v1823, 32
    %v1865 = vpop.permute.xlu0 %1864
    %v1867 = vadd.f32 %v1852, %v1865
    %v1868 = vxor.u32 %v1867, 2147483648
    %v1869 = vmul.f32 %v1868, 1.442695
    %v1870 = vpow.pop %v1869
    %v1871 = vadd.f32 %v1870, 1.0
    %v1872 = vrcp.pop %v1871
    %v1873 = vmul.f32 1.0, %v1872
    %1874 = vrot.lane.b32.xlu0 %v1823, 96
    %v1875 = vpop.permute.xlu0 %1874
    %v1877 = vmul.f32 %v1862, %v1875
    %1879 = vrot.lane.b32.xlu0 %v1877, 64
    %v1880 = vpop.permute.xlu0 %1879
    %v1882 = vadd.f32 %v1852, %v1880
    %v1883 = vtanh.pop %v1882
    %v1884 = vsub.f32 1.0, %v1873
    %1886 = vrot.lane.b32.xlu0 %v1883, 96
    %v1887 = vpop.permute.xlu0 %1886
    %v1889 = vmul.f32 %v1884, %v1887
    %v1890 = vmul.f32 %v1873, %v1743
    %v1891 = vadd.f32 %v1889, %v1890
    %v1892 = vadd.f32 %v1744, %v1851
    %v1893 = vadd.f32 %v1745, %v1891
    %v1894 = vmax.f32 %v1703, %v1851
    %v1895 = vmax.f32 %v1743, %v1891
    %1897 = vrot.lane.b32.xlu0 %v1851, 96
    %v1898 = vpop.permute.xlu0 %1897
    %v1900 = vsel %vm67, %v1898, %v1891
    %v1902 = vsel %vm255, %v1900, 0
    %1904 = vmatprep.subr.mxu0 %v1579
    %1905 = vmatpush1.msra.mxu0 %v1578
    %1906 = vmatprep.subr.mxu0 %v1581
    %1907 = vmatpush1.msra.mxu0 %v1580
    %1908 = vmatprep.subr.mxu0 %v1583
    %1909 = vmatpush1.msra.mxu0 %v1582
    %1910 = vmatprep.subr.mxu0 %v1585
    %1911 = vmatpush1.msra.mxu0 %v1584
    %1912 = vmatprep.subr.mxu0 %v1587
    %1913 = vmatpush1.msra.mxu0 %v1586
    %1914 = vmatprep.subr.mxu0 %v1589
    %1915 = vmatpush1.msra.mxu0 %v1588
    %1916 = vmatprep.subr.mxu0 %v1591
    %1917 = vmatpush1.msra.mxu0 %v1590
    %1918 = vmatprep.subr.mxu0 %v1593
    %1919 = vmatpush1.msra.mxu0 %v1592
    %1920 = vmatprep.subr.mxu0 0.0
    %1921 = vmatpush1.msra.mxu0 0.0
    %1922 = vmatprep.subr.mxu0 0.0
    %1923 = vmatpush1.msra.mxu0 0.0
    %1924 = vmatprep.subr.mxu0 0.0
    %1925 = vmatpush1.msra.mxu0 0.0
    %1926 = vmatprep.subr.mxu0 0.0
    %1927 = vmatpush1.msra.mxu0 0.0
    %1928 = vmatprep.subr.mxu0 0.0
    %1929 = vmatpush1.msra.mxu0 0.0
    %1930 = vmatprep.subr.mxu0 0.0
    %1931 = vmatpush1.msra.mxu0 0.0
    %1932 = vmatprep.subr.mxu0 0.0
    %1933 = vmatpush1.msra.mxu0 0.0
    %1934 = vmatprep.subr.mxu0 0.0
    %1935 = vmatpush1.msra.mxu0 0.0
    %1936 = vmatprep.subr.mxu0 0.0
    %1937 = vmatpush1.msra.mxu0 0.0
    %1938 = vmatprep.subr.mxu0 0.0
    %1939 = vmatpush1.msra.mxu0 0.0
    %1940 = vmatprep.subr.mxu0 0.0
    %1941 = vmatpush1.msra.mxu0 0.0
    %1942 = vmatprep.subr.mxu0 0.0
    %1943 = vmatpush1.msra.mxu0 0.0
    %1944 = vmatprep.subr.mxu0 0.0
    %1945 = vmatpush1.msra.mxu0 0.0
    %1946 = vmatprep.subr.mxu0 0.0
    %1947 = vmatpush1.msra.mxu0 0.0
    %1948 = vmatprep.subr.mxu0 0.0
    %1949 = vmatpush1.msra.mxu0 0.0
    %1950 = vmatprep.subr.mxu0 0.0
    %1951 = vmatpush1.msra.mxu0 0.0
    %1952 = vmatprep.subr.mxu0 0.0
    %1953 = vmatpush1.msra.mxu0 0.0
    %1954 = vmatprep.subr.mxu0 0.0
    %1955 = vmatpush1.msra.mxu0 0.0
    %1956 = vmatprep.subr.mxu0 0.0
    %1957 = vmatpush1.msra.mxu0 0.0
    %1958 = vmatprep.subr.mxu0 0.0
    %1959 = vmatpush1.msra.mxu0 0.0
    %1960 = vmatprep.subr.mxu0 0.0
    %1961 = vmatpush1.msra.mxu0 0.0
    %1962 = vmatprep.subr.mxu0 0.0
    %1963 = vmatpush1.msra.mxu0 0.0
    %1964 = vmatprep.subr.mxu0 0.0
    %1965 = vmatpush1.msra.mxu0 0.0
    %1966 = vmatprep.subr.mxu0 0.0
    %1967 = vmatpush1.msra.mxu0 0.0
    %1968 = vmatprep.mubr.f32.mxu0 0.0
    %1969 = vmatmul.mubr.f32.gmra.mrb[0].mxu0 %v1902
    %v1970 = vpop.f32.mrb[0].mxu0
    %v1971 = vadd.f32 %v1599, %v1970
    %v1972 = vpop.f32.mrb[0].mxu0
    %v1973 = vadd.f32 %v1603, %v1972
    %1974 = vdwg.mxu0
    %v1975 = vld [vmem:[#allocation6 + $0x4] sm:$0x3]
    %v1976 = vadd.f32 %v1975, %v1971
    %v1977 = vxor.u32 %v1976, 2147483648
    %v1978 = vmul.f32 %v1977, 1.442695
    %v1979 = vpow.pop %v1978
    %v1980 = vadd.f32 %v1979, 1.0
    %v1981 = vrcp.pop %v1980
    %v1982 = vmul.f32 1.0, %v1981
    %1984 = vrot.lane.b32.xlu0 %v1971, 64
    %v1985 = vpop.permute.xlu0 %1984
    %v1987 = vmul.f32 %v1982, %v1985
    %1989 = vrot.lane.b32.xlu0 %v1987, 64
    %v1990 = vpop.permute.xlu0 %1989
    %v1992 = vadd.f32 %v1975, %v1990
    %v1993 = vtanh.pop %v1992
    %v1994 = vsub.f32 1.0, %v1982
    %1996 = vrot.lane.b32.xlu0 %v1993, 96
    %v1997 = vpop.permute.xlu0 %1996
    %v1999 = vmul.f32 %v1994, %v1997
    %v2000 = vmul.f32 %v1982, %v1851
    %v2001 = vadd.f32 %v1999, %v2000
    %v2002 = vld [vmem:[#allocation7 + $0xa] sm:$0x3]
    %2003 = vrot.lane.b32.xlu0 %v1971, 32
    %v2004 = vpop.permute.xlu0 %2003
    %v2006 = vadd.f32 %v2002, %v2004
    %v2007 = vxor.u32 %v2006, 2147483648
    %v2008 = vmul.f32 %v2007, 1.442695
    %v2009 = vpow.pop %v2008
    %v2010 = vadd.f32 %v2009, 1.0
    %v2011 = vrcp.pop %v2010
    %v2012 = vmul.f32 1.0, %v2011
    %2014 = vrot.lane.b32.xlu0 %v1973, 32
    %v2015 = vpop.permute.xlu0 %2014
    %v2017 = vadd.f32 %v2002, %v2015
    %v2018 = vxor.u32 %v2017, 2147483648
    %v2019 = vmul.f32 %v2018, 1.442695
    %v2020 = vpow.pop %v2019
    %v2021 = vadd.f32 %v2020, 1.0
    %v2022 = vrcp.pop %v2021
    %v2023 = vmul.f32 1.0, %v2022
    %2024 = vrot.lane.b32.xlu0 %v1973, 96
    %v2025 = vpop.permute.xlu0 %2024
    %v2027 = vmul.f32 %v2012, %v2025
    %2029 = vrot.lane.b32.xlu0 %v2027, 64
    %v2030 = vpop.permute.xlu0 %2029
    %v2032 = vadd.f32 %v2002, %v2030
    %v2033 = vtanh.pop %v2032
    %v2034 = vsub.f32 1.0, %v2023
    %2036 = vrot.lane.b32.xlu0 %v2033, 96
    %v2037 = vpop.permute.xlu0 %2036
    %v2039 = vmul.f32 %v2034, %v2037
    %v2040 = vmul.f32 %v2023, %v1891
    %v2041 = vadd.f32 %v2039, %v2040
    %v2042 = vadd.f32 %v1892, %v2001
    %v2043 = vadd.f32 %v1893, %v2041
    %v2044 = vmax.f32 %v1894, %v2001
    %v2045 = vmax.f32 %v1895, %v2041
    %2047 = vrot.lane.b32.xlu0 %v2001, 96
    %v2048 = vpop.permute.xlu0 %2047
    %v2050 = vsel %vm67, %v2048, %v2041
    %v2052 = vsel %vm255, %v2050, 0
    %2054 = vmatprep.subr.mxu0 %v1579
    %2055 = vmatpush1.msra.mxu0 %v1578
    %2056 = vmatprep.subr.mxu0 %v1581
    %2057 = vmatpush1.msra.mxu0 %v1580
    %2058 = vmatprep.subr.mxu0 %v1583
    %2059 = vmatpush1.msra.mxu0 %v1582
    %2060 = vmatprep.subr.mxu0 %v1585
    %2061 = vmatpush1.msra.mxu0 %v1584
    %2062 = vmatprep.subr.mxu0 %v1587
    %2063 = vmatpush1.msra.mxu0 %v1586
    %2064 = vmatprep.subr.mxu0 %v1589
    %2065 = vmatpush1.msra.mxu0 %v1588
    %2066 = vmatprep.subr.mxu0 %v1591
    %2067 = vmatpush1.msra.mxu0 %v1590
    %2068 = vmatprep.subr.mxu0 %v1593
    %2069 = vmatpush1.msra.mxu0 %v1592
    %2070 = vmatprep.subr.mxu0 0.0
    %2071 = vmatpush1.msra.mxu0 0.0
    %2072 = vmatprep.subr.mxu0 0.0
    %2073 = vmatpush1.msra.mxu0 0.0
    %2074 = vmatprep.subr.mxu0 0.0
    %2075 = vmatpush1.msra.mxu0 0.0
    %2076 = vmatprep.subr.mxu0 0.0
    %2077 = vmatpush1.msra.mxu0 0.0
    %2078 = vmatprep.subr.mxu0 0.0
    %2079 = vmatpush1.msra.mxu0 0.0
    %2080 = vmatprep.subr.mxu0 0.0
    %2081 = vmatpush1.msra.mxu0 0.0
    %2082 = vmatprep.subr.mxu0 0.0
    %2083 = vmatpush1.msra.mxu0 0.0
    %2084 = vmatprep.subr.mxu0 0.0
    %2085 = vmatpush1.msra.mxu0 0.0
    %2086 = vmatprep.subr.mxu0 0.0
    %2087 = vmatpush1.msra.mxu0 0.0
    %2088 = vmatprep.subr.mxu0 0.0
    %2089 = vmatpush1.msra.mxu0 0.0
    %2090 = vmatprep.subr.mxu0 0.0
    %2091 = vmatpush1.msra.mxu0 0.0
    %2092 = vmatprep.subr.mxu0 0.0
    %2093 = vmatpush1.msra.mxu0 0.0
    %2094 = vmatprep.subr.mxu0 0.0
    %2095 = vmatpush1.msra.mxu0 0.0
    %2096 = vmatprep.subr.mxu0 0.0
    %2097 = vmatpush1.msra.mxu0 0.0
    %2098 = vmatprep.subr.mxu0 0.0
    %2099 = vmatpush1.msra.mxu0 0.0
    %2100 = vmatprep.subr.mxu0 0.0
    %2101 = vmatpush1.msra.mxu0 0.0
    %2102 = vmatprep.subr.mxu0 0.0
    %2103 = vmatpush1.msra.mxu0 0.0
    %2104 = vmatprep.subr.mxu0 0.0
    %2105 = vmatpush1.msra.mxu0 0.0
    %2106 = vmatprep.subr.mxu0 0.0
    %2107 = vmatpush1.msra.mxu0 0.0
    %2108 = vmatprep.subr.mxu0 0.0
    %2109 = vmatpush1.msra.mxu0 0.0
    %2110 = vmatprep.subr.mxu0 0.0
    %2111 = vmatpush1.msra.mxu0 0.0
    %2112 = vmatprep.subr.mxu0 0.0
    %2113 = vmatpush1.msra.mxu0 0.0
    %2114 = vmatprep.subr.mxu0 0.0
    %2115 = vmatpush1.msra.mxu0 0.0
    %2116 = vmatprep.subr.mxu0 0.0
    %2117 = vmatpush1.msra.mxu0 0.0
    %2118 = vmatprep.mubr.f32.mxu0 0.0
    %2119 = vmatmul.mubr.f32.gmra.mrb[0].mxu0 %v2052
    %v2120 = vpop.f32.mrb[0].mxu0
    %v2121 = vadd.f32 %v1599, %v2120
    %v2122 = vpop.f32.mrb[0].mxu0
    %v2123 = vadd.f32 %v1603, %v2122
    %2124 = vdwg.mxu0
    %v2125 = vld [vmem:[#allocation6 + $0x6] sm:$0x3]
    %v2126 = vadd.f32 %v2125, %v2121
    %v2127 = vxor.u32 %v2126, 2147483648
    %v2128 = vmul.f32 %v2127, 1.442695
    %v2129 = vpow.pop %v2128
    %v2130 = vadd.f32 %v2129, 1.0
    %v2131 = vrcp.pop %v2130
    %v2132 = vmul.f32 1.0, %v2131
    %2134 = vrot.lane.b32.xlu0 %v2121, 64
    %v2135 = vpop.permute.xlu0 %2134
    %v2137 = vmul.f32 %v2132, %v2135
    %2139 = vrot.lane.b32.xlu0 %v2137, 64
    %v2140 = vpop.permute.xlu0 %2139
    %v2142 = vadd.f32 %v2125, %v2140
    %v2143 = vtanh.pop %v2142
    %v2144 = vsub.f32 1.0, %v2132
    %2146 = vrot.lane.b32.xlu0 %v2143, 96
    %v2147 = vpop.permute.xlu0 %2146
    %v2149 = vmul.f32 %v2144, %v2147
    %v2150 = vmul.f32 %v2132, %v2001
    %v2151 = vadd.f32 %v2149, %v2150
    %v2152 = vld [vmem:[#allocation7 + $0x8] sm:$0x3]
    %2153 = vrot.lane.b32.xlu0 %v2121, 32
    %v2154 = vpop.permute.xlu0 %2153
    %v2156 = vadd.f32 %v2152, %v2154
    %v2157 = vxor.u32 %v2156, 2147483648
    %v2158 = vmul.f32 %v2157, 1.442695
    %v2159 = vpow.pop %v2158
    %v2160 = vadd.f32 %v2159, 1.0
    %v2161 = vrcp.pop %v2160
    %v2162 = vmul.f32 1.0, %v2161
    %2164 = vrot.lane.b32.xlu0 %v2123, 32
    %v2165 = vpop.permute.xlu0 %2164
    %v2167 = vadd.f32 %v2152, %v2165
    %v2168 = vxor.u32 %v2167, 2147483648
    %v2169 = vmul.f32 %v2168, 1.442695
    %v2170 = vpow.pop %v2169
    %v2171 = vadd.f32 %v2170, 1.0
    %v2172 = vrcp.pop %v2171
    %v2173 = vmul.f32 1.0, %v2172
    %2174 = vrot.lane.b32.xlu0 %v2123, 96
    %v2175 = vpop.permute.xlu0 %2174
    %v2177 = vmul.f32 %v2162, %v2175
    %2179 = vrot.lane.b32.xlu0 %v2177, 64
    %v2180 = vpop.permute.xlu0 %2179
    %v2182 = vadd.f32 %v2152, %v2180
    %v2183 = vtanh.pop %v2182
    %v2184 = vsub.f32 1.0, %v2173
    %2186 = vrot.lane.b32.xlu0 %v2183, 96
    %v2187 = vpop.permute.xlu0 %2186
    %v2189 = vmul.f32 %v2184, %v2187
    %v2190 = vmul.f32 %v2173, %v2041
    %v2191 = vadd.f32 %v2189, %v2190
    %v2192 = vadd.f32 %v2042, %v2151
    %v2193 = vadd.f32 %v2043, %v2191
    %v2194 = vmax.f32 %v2044, %v2151
    %v2195 = vmax.f32 %v2045, %v2191
    %2197 = vrot.lane.b32.xlu0 %v2151, 96
    %v2198 = vpop.permute.xlu0 %2197
    %v2200 = vsel %vm67, %v2198, %v2191
    %v2202 = vsel %vm255, %v2200, 0
    %2204 = vmatprep.subr.mxu0 %v1579
    %2205 = vmatpush1.msra.mxu0 %v1578
    %2206 = vmatprep.subr.mxu0 %v1581
    %2207 = vmatpush1.msra.mxu0 %v1580
    %2208 = vmatprep.subr.mxu0 %v1583
    %2209 = vmatpush1.msra.mxu0 %v1582
    %2210 = vmatprep.subr.mxu0 %v1585
    %2211 = vmatpush1.msra.mxu0 %v1584
    %2212 = vmatprep.subr.mxu0 %v1587
    %2213 = vmatpush1.msra.mxu0 %v1586
    %2214 = vmatprep.subr.mxu0 %v1589
    %2215 = vmatpush1.msra.mxu0 %v1588
    %2216 = vmatprep.subr.mxu0 %v1591
    %2217 = vmatpush1.msra.mxu0 %v1590
    %2218 = vmatprep.subr.mxu0 %v1593
    %2219 = vmatpush1.msra.mxu0 %v1592
    %2220 = vmatprep.subr.mxu0 0.0
    %2221 = vmatpush1.msra.mxu0 0.0
    %2222 = vmatprep.subr.mxu0 0.0
    %2223 = vmatpush1.msra.mxu0 0.0
    %2224 = vmatprep.subr.mxu0 0.0
    %2225 = vmatpush1.msra.mxu0 0.0
    %2226 = vmatprep.subr.mxu0 0.0
    %2227 = vmatpush1.msra.mxu0 0.0
    %2228 = vmatprep.subr.mxu0 0.0
    %2229 = vmatpush1.msra.mxu0 0.0
    %2230 = vmatprep.subr.mxu0 0.0
    %2231 = vmatpush1.msra.mxu0 0.0
    %2232 = vmatprep.subr.mxu0 0.0
    %2233 = vmatpush1.msra.mxu0 0.0
    %2234 = vmatprep.subr.mxu0 0.0
    %2235 = vmatpush1.msra.mxu0 0.0
    %2236 = vmatprep.subr.mxu0 0.0
    %2237 = vmatpush1.msra.mxu0 0.0
    %2238 = vmatprep.subr.mxu0 0.0
    %2239 = vmatpush1.msra.mxu0 0.0
    %2240 = vmatprep.subr.mxu0 0.0
    %2241 = vmatpush1.msra.mxu0 0.0
    %2242 = vmatprep.subr.mxu0 0.0
    %2243 = vmatpush1.msra.mxu0 0.0
    %2244 = vmatprep.subr.mxu0 0.0
    %2245 = vmatpush1.msra.mxu0 0.0
    %2246 = vmatprep.subr.mxu0 0.0
    %2247 = vmatpush1.msra.mxu0 0.0
    %2248 = vmatprep.subr.mxu0 0.0
    %2249 = vmatpush1.msra.mxu0 0.0
    %2250 = vmatprep.subr.mxu0 0.0
    %2251 = vmatpush1.msra.mxu0 0.0
    %2252 = vmatprep.subr.mxu0 0.0
    %2253 = vmatpush1.msra.mxu0 0.0
    %2254 = vmatprep.subr.mxu0 0.0
    %2255 = vmatpush1.msra.mxu0 0.0
    %2256 = vmatprep.subr.mxu0 0.0
    %2257 = vmatpush1.msra.mxu0 0.0
    %2258 = vmatprep.subr.mxu0 0.0
    %2259 = vmatpush1.msra.mxu0 0.0
    %2260 = vmatprep.subr.mxu0 0.0
    %2261 = vmatpush1.msra.mxu0 0.0
    %2262 = vmatprep.subr.mxu0 0.0
    %2263 = vmatpush1.msra.mxu0 0.0
    %2264 = vmatprep.subr.mxu0 0.0
    %2265 = vmatpush1.msra.mxu0 0.0
    %2266 = vmatprep.subr.mxu0 0.0
    %2267 = vmatpush1.msra.mxu0 0.0
    %2268 = vmatprep.mubr.f32.mxu0 0.0
    %2269 = vmatmul.mubr.f32.gmra.mrb[0].mxu0 %v2202
    %v2270 = vpop.f32.mrb[0].mxu0
    %v2271 = vadd.f32 %v1599, %v2270
    %v2272 = vpop.f32.mrb[0].mxu0
    %v2273 = vadd.f32 %v1603, %v2272
    %2274 = vdwg.mxu0
    %v2275 = vld [vmem:[#allocation6 + $0x8] sm:$0x3]
    %v2276 = vadd.f32 %v2275, %v2271
    %v2277 = vxor.u32 %v2276, 2147483648
    %v2278 = vmul.f32 %v2277, 1.442695
    %v2279 = vpow.pop %v2278
    %v2280 = vadd.f32 %v2279, 1.0
    %v2281 = vrcp.pop %v2280
    %v2282 = vmul.f32 1.0, %v2281
    %2284 = vrot.lane.b32.xlu0 %v2271, 64
    %v2285 = vpop.permute.xlu0 %2284
    %v2287 = vmul.f32 %v2282, %v2285
    %2289 = vrot.lane.b32.xlu0 %v2287, 64
    %v2290 = vpop.permute.xlu0 %2289
    %v2292 = vadd.f32 %v2275, %v2290
    %v2293 = vtanh.pop %v2292
    %v2294 = vsub.f32 1.0, %v2282
    %2296 = vrot.lane.b32.xlu0 %v2293, 96
    %v2297 = vpop.permute.xlu0 %2296
    %v2299 = vmul.f32 %v2294, %v2297
    %v2300 = vmul.f32 %v2282, %v2151
    %v2301 = vadd.f32 %v2299, %v2300
    %v2302 = vld [vmem:[#allocation7 + $0x6] sm:$0x3]
    %2303 = vrot.lane.b32.xlu0 %v2271, 32
    %v2304 = vpop.permute.xlu0 %2303
    %v2306 = vadd.f32 %v2302, %v2304
    %v2307 = vxor.u32 %v2306, 2147483648
    %v2308 = vmul.f32 %v2307, 1.442695
    %v2309 = vpow.pop %v2308
    %v2310 = vadd.f32 %v2309, 1.0
    %v2311 = vrcp.pop %v2310
    %v2312 = vmul.f32 1.0, %v2311
    %2314 = vrot.lane.b32.xlu0 %v2273, 32
    %v2315 = vpop.permute.xlu0 %2314
    %v2317 = vadd.f32 %v2302, %v2315
    %v2318 = vxor.u32 %v2317, 2147483648
    %v2319 = vmul.f32 %v2318, 1.442695
    %v2320 = vpow.pop %v2319
    %v2321 = vadd.f32 %v2320, 1.0
    %v2322 = vrcp.pop %v2321
    %v2323 = vmul.f32 1.0, %v2322
    %2324 = vrot.lane.b32.xlu0 %v2273, 96
    %v2325 = vpop.permute.xlu0 %2324
    %v2327 = vmul.f32 %v2312, %v2325
    %2329 = vrot.lane.b32.xlu0 %v2327, 64
    %v2330 = vpop.permute.xlu0 %2329
    %v2332 = vadd.f32 %v2302, %v2330
    %v2333 = vtanh.pop %v2332
    %v2334 = vsub.f32 1.0, %v2323
    %2336 = vrot.lane.b32.xlu0 %v2333, 96
    %v2337 = vpop.permute.xlu0 %2336
    %v2339 = vmul.f32 %v2334, %v2337
    %v2340 = vmul.f32 %v2323, %v2191
    %v2341 = vadd.f32 %v2339, %v2340
    %v2342 = vadd.f32 %v2192, %v2301
    %v2343 = vadd.f32 %v2193, %v2341
    %v2344 = vmax.f32 %v2194, %v2301
    %v2345 = vmax.f32 %v2195, %v2341
    %2347 = vrot.lane.b32.xlu0 %v2301, 96
    %v2348 = vpop.permute.xlu0 %2347
    %v2350 = vsel %vm67, %v2348, %v2341
    %v2352 = vsel %vm255, %v2350, 0
    %2354 = vmatprep.subr.mxu0 %v1579
    %2355 = vmatpush1.msra.mxu0 %v1578
    %2356 = vmatprep.subr.mxu0 %v1581
    %2357 = vmatpush1.msra.mxu0 %v1580
    %2358 = vmatprep.subr.mxu0 %v1583
    %2359 = vmatpush1.msra.mxu0 %v1582
    %2360 = vmatprep.subr.mxu0 %v1585
    %2361 = vmatpush1.msra.mxu0 %v1584
    %2362 = vmatprep.subr.mxu0 %v1587
    %2363 = vmatpush1.msra.mxu0 %v1586
    %2364 = vmatprep.subr.mxu0 %v1589
    %2365 = vmatpush1.msra.mxu0 %v1588
    %2366 = vmatprep.subr.mxu0 %v1591
    %2367 = vmatpush1.msra.mxu0 %v1590
    %2368 = vmatprep.subr.mxu0 %v1593
    %2369 = vmatpush1.msra.mxu0 %v1592
    %2370 = vmatprep.subr.mxu0 0.0
    %2371 = vmatpush1.msra.mxu0 0.0
    %2372 = vmatprep.subr.mxu0 0.0
    %2373 = vmatpush1.msra.mxu0 0.0
    %2374 = vmatprep.subr.mxu0 0.0
    %2375 = vmatpush1.msra.mxu0 0.0
    %2376 = vmatprep.subr.mxu0 0.0
    %2377 = vmatpush1.msra.mxu0 0.0
    %2378 = vmatprep.subr.mxu0 0.0
    %2379 = vmatpush1.msra.mxu0 0.0
    %2380 = vmatprep.subr.mxu0 0.0
    %2381 = vmatpush1.msra.mxu0 0.0
    %2382 = vmatprep.subr.mxu0 0.0
    %2383 = vmatpush1.msra.mxu0 0.0
    %2384 = vmatprep.subr.mxu0 0.0
    %2385 = vmatpush1.msra.mxu0 0.0
    %2386 = vmatprep.subr.mxu0 0.0
    %2387 = vmatpush1.msra.mxu0 0.0
    %2388 = vmatprep.subr.mxu0 0.0
    %2389 = vmatpush1.msra.mxu0 0.0
    %2390 = vmatprep.subr.mxu0 0.0
    %2391 = vmatpush1.msra.mxu0 0.0
    %2392 = vmatprep.subr.mxu0 0.0
    %2393 = vmatpush1.msra.mxu0 0.0
    %2394 = vmatprep.subr.mxu0 0.0
    %2395 = vmatpush1.msra.mxu0 0.0
    %2396 = vmatprep.subr.mxu0 0.0
    %2397 = vmatpush1.msra.mxu0 0.0
    %2398 = vmatprep.subr.mxu0 0.0
    %2399 = vmatpush1.msra.mxu0 0.0
    %2400 = vmatprep.subr.mxu0 0.0
    %2401 = vmatpush1.msra.mxu0 0.0
    %2402 = vmatprep.subr.mxu0 0.0
    %2403 = vmatpush1.msra.mxu0 0.0
    %2404 = vmatprep.subr.mxu0 0.0
    %2405 = vmatpush1.msra.mxu0 0.0
    %2406 = vmatprep.subr.mxu0 0.0
    %2407 = vmatpush1.msra.mxu0 0.0
    %2408 = vmatprep.subr.mxu0 0.0
    %2409 = vmatpush1.msra.mxu0 0.0
    %2410 = vmatprep.subr.mxu0 0.0
    %2411 = vmatpush1.msra.mxu0 0.0
    %2412 = vmatprep.subr.mxu0 0.0
    %2413 = vmatpush1.msra.mxu0 0.0
    %2414 = vmatprep.subr.mxu0 0.0
    %2415 = vmatpush1.msra.mxu0 0.0
    %2416 = vmatprep.subr.mxu0 0.0
    %2417 = vmatpush1.msra.mxu0 0.0
    %2418 = vmatprep.mubr.f32.mxu0 0.0
    %2419 = vmatmul.mubr.f32.gmra.mrb[0].mxu0 %v2352
    %v2420 = vpop.f32.mrb[0].mxu0
    %v2421 = vadd.f32 %v1599, %v2420
    %v2422 = vpop.f32.mrb[0].mxu0
    %v2423 = vadd.f32 %v1603, %v2422
    %2424 = vdwg.mxu0
    %v2425 = vld [vmem:[#allocation6 + $0xa] sm:$0x3]
    %v2426 = vadd.f32 %v2425, %v2421
    %v2427 = vxor.u32 %v2426, 2147483648
    %v2428 = vmul.f32 %v2427, 1.442695
    %v2429 = vpow.pop %v2428
    %v2430 = vadd.f32 %v2429, 1.0
    %v2431 = vrcp.pop %v2430
    %v2432 = vmul.f32 1.0, %v2431
    %2434 = vrot.lane.b32.xlu0 %v2421, 64
    %v2435 = vpop.permute.xlu0 %2434
    %v2437 = vmul.f32 %v2432, %v2435
    %2439 = vrot.lane.b32.xlu0 %v2437, 64
    %v2440 = vpop.permute.xlu0 %2439
    %v2442 = vadd.f32 %v2425, %v2440
    %v2443 = vtanh.pop %v2442
    %v2444 = vsub.f32 1.0, %v2432
    %2446 = vrot.lane.b32.xlu0 %v2443, 96
    %v2447 = vpop.permute.xlu0 %2446
    %v2449 = vmul.f32 %v2444, %v2447
    %v2450 = vmul.f32 %v2432, %v2301
    %v2451 = vadd.f32 %v2449, %v2450
    %v2452 = vld [vmem:[#allocation7 + $0x4] sm:$0x3]
    %2453 = vrot.lane.b32.xlu0 %v2421, 32
    %v2454 = vpop.permute.xlu0 %2453
    %v2456 = vadd.f32 %v2452, %v2454
    %v2457 = vxor.u32 %v2456, 2147483648
    %v2458 = vmul.f32 %v2457, 1.442695
    %v2459 = vpow.pop %v2458
    %v2460 = vadd.f32 %v2459, 1.0
    %v2461 = vrcp.pop %v2460
    %v2462 = vmul.f32 1.0, %v2461
    %2464 = vrot.lane.b32.xlu0 %v2423, 32
    %v2465 = vpop.permute.xlu0 %2464
    %v2467 = vadd.f32 %v2452, %v2465
    %v2468 = vxor.u32 %v2467, 2147483648
    %v2469 = vmul.f32 %v2468, 1.442695
    %v2470 = vpow.pop %v2469
    %v2471 = vadd.f32 %v2470, 1.0
    %v2472 = vrcp.pop %v2471
    %v2473 = vmul.f32 1.0, %v2472
    %2474 = vrot.lane.b32.xlu0 %v2423, 96
    %v2475 = vpop.permute.xlu0 %2474
    %v2477 = vmul.f32 %v2462, %v2475
    %2479 = vrot.lane.b32.xlu0 %v2477, 64
    %v2480 = vpop.permute.xlu0 %2479
    %v2482 = vadd.f32 %v2452, %v2480
    %v2483 = vtanh.pop %v2482
    %v2484 = vsub.f32 1.0, %v2473
    %2486 = vrot.lane.b32.xlu0 %v2483, 96
    %v2487 = vpop.permute.xlu0 %2486
    %v2489 = vmul.f32 %v2484, %v2487
    %v2490 = vmul.f32 %v2473, %v2341
    %v2491 = vadd.f32 %v2489, %v2490
    %v2492 = vadd.f32 %v2342, %v2451
    %v2493 = vadd.f32 %v2343, %v2491
    %v2494 = vmax.f32 %v2344, %v2451
    %v2495 = vmax.f32 %v2345, %v2491
    %2497 = vrot.lane.b32.xlu0 %v2451, 96
    %v2498 = vpop.permute.xlu0 %2497
    %v2500 = vsel %vm67, %v2498, %v2491
    %v2502 = vsel %vm255, %v2500, 0
    %2504 = vmatprep.subr.mxu0 %v1579
    %2505 = vmatpush1.msra.mxu0 %v1578
    %2506 = vmatprep.subr.mxu0 %v1581
    %2507 = vmatpush1.msra.mxu0 %v1580
    %2508 = vmatprep.subr.mxu0 %v1583
    %2509 = vmatpush1.msra.mxu0 %v1582
    %2510 = vmatprep.subr.mxu0 %v1585
    %2511 = vmatpush1.msra.mxu0 %v1584
    %2512 = vmatprep.subr.mxu0 %v1587
    %2513 = vmatpush1.msra.mxu0 %v1586
    %2514 = vmatprep.subr.mxu0 %v1589
    %2515 = vmatpush1.msra.mxu0 %v1588
    %2516 = vmatprep.subr.mxu0 %v1591
    %2517 = vmatpush1.msra.mxu0 %v1590
    %2518 = vmatprep.subr.mxu0 %v1593
    %2519 = vmatpush1.msra.mxu0 %v1592
    %2520 = vmatprep.subr.mxu0 0.0
    %2521 = vmatpush1.msra.mxu0 0.0
    %2522 = vmatprep.subr.mxu0 0.0
    %2523 = vmatpush1.msra.mxu0 0.0
    %2524 = vmatprep.subr.mxu0 0.0
    %2525 = vmatpush1.msra.mxu0 0.0
    %2526 = vmatprep.subr.mxu0 0.0
    %2527 = vmatpush1.msra.mxu0 0.0
    %2528 = vmatprep.subr.mxu0 0.0
    %2529 = vmatpush1.msra.mxu0 0.0
    %2530 = vmatprep.subr.mxu0 0.0
    %2531 = vmatpush1.msra.mxu0 0.0
    %2532 = vmatprep.subr.mxu0 0.0
    %2533 = vmatpush1.msra.mxu0 0.0
    %2534 = vmatprep.subr.mxu0 0.0
    %2535 = vmatpush1.msra.mxu0 0.0
    %2536 = vmatprep.subr.mxu0 0.0
    %2537 = vmatpush1.msra.mxu0 0.0
    %2538 = vmatprep.subr.mxu0 0.0
    %2539 = vmatpush1.msra.mxu0 0.0
    %2540 = vmatprep.subr.mxu0 0.0
    %2541 = vmatpush1.msra.mxu0 0.0
    %2542 = vmatprep.subr.mxu0 0.0
    %2543 = vmatpush1.msra.mxu0 0.0
    %2544 = vmatprep.subr.mxu0 0.0
    %2545 = vmatpush1.msra.mxu0 0.0
    %2546 = vmatprep.subr.mxu0 0.0
    %2547 = vmatpush1.msra.mxu0 0.0
    %2548 = vmatprep.subr.mxu0 0.0
    %2549 = vmatpush1.msra.mxu0 0.0
    %2550 = vmatprep.subr.mxu0 0.0
    %2551 = vmatpush1.msra.mxu0 0.0
    %2552 = vmatprep.subr.mxu0 0.0
    %2553 = vmatpush1.msra.mxu0 0.0
    %2554 = vmatprep.subr.mxu0 0.0
    %2555 = vmatpush1.msra.mxu0 0.0
    %2556 = vmatprep.subr.mxu0 0.0
    %2557 = vmatpush1.msra.mxu0 0.0
    %2558 = vmatprep.subr.mxu0 0.0
    %2559 = vmatpush1.msra.mxu0 0.0
    %2560 = vmatprep.subr.mxu0 0.0
    %2561 = vmatpush1.msra.mxu0 0.0
    %2562 = vmatprep.subr.mxu0 0.0
    %2563 = vmatpush1.msra.mxu0 0.0
    %2564 = vmatprep.subr.mxu0 0.0
    %2565 = vmatpush1.msra.mxu0 0.0
    %2566 = vmatprep.subr.mxu0 0.0
    %2567 = vmatpush1.msra.mxu0 0.0
    %2568 = vmatprep.mubr.f32.mxu0 0.0
    %2569 = vmatmul.mubr.f32.gmra.mrb[0].mxu0 %v2502
    %v2570 = vpop.f32.mrb[0].mxu0
    %v2571 = vadd.f32 %v1599, %v2570
    %v2572 = vpop.f32.mrb[0].mxu0
    %v2573 = vadd.f32 %v1603, %v2572
    %2574 = vdwg.mxu0
    %v2575 = vld [vmem:[#allocation6 + $0xc] sm:$0x3]
    %v2576 = vadd.f32 %v2575, %v2571
    %v2577 = vxor.u32 %v2576, 2147483648
    %v2578 = vmul.f32 %v2577, 1.442695
    %v2579 = vpow.pop %v2578
    %v2580 = vadd.f32 %v2579, 1.0
    %v2581 = vrcp.pop %v2580
    %v2582 = vmul.f32 1.0, %v2581
    %2584 = vrot.lane.b32.xlu0 %v2571, 64
    %v2585 = vpop.permute.xlu0 %2584
    %v2587 = vmul.f32 %v2582, %v2585
    %2589 = vrot.lane.b32.xlu0 %v2587, 64
    %v2590 = vpop.permute.xlu0 %2589
    %v2592 = vadd.f32 %v2575, %v2590
    %v2593 = vtanh.pop %v2592
    %v2594 = vsub.f32 1.0, %v2582
    %2596 = vrot.lane.b32.xlu0 %v2593, 96
    %v2597 = vpop.permute.xlu0 %2596
    %v2599 = vmul.f32 %v2594, %v2597
    %v2600 = vmul.f32 %v2582, %v2451
    %v2601 = vadd.f32 %v2599, %v2600
    %v2602 = vld [vmem:[#allocation7 + $0x2] sm:$0x3]
    %2603 = vrot.lane.b32.xlu0 %v2571, 32
    %v2604 = vpop.permute.xlu0 %2603
    %v2606 = vadd.f32 %v2602, %v2604
    %v2607 = vxor.u32 %v2606, 2147483648
    %v2608 = vmul.f32 %v2607, 1.442695
    %v2609 = vpow.pop %v2608
    %v2610 = vadd.f32 %v2609, 1.0
    %v2611 = vrcp.pop %v2610
    %v2612 = vmul.f32 1.0, %v2611
    %2614 = vrot.lane.b32.xlu0 %v2573, 32
    %v2615 = vpop.permute.xlu0 %2614
    %v2617 = vadd.f32 %v2602, %v2615
    %v2618 = vxor.u32 %v2617, 2147483648
    %v2619 = vmul.f32 %v2618, 1.442695
    %v2620 = vpow.pop %v2619
    %v2621 = vadd.f32 %v2620, 1.0
    %v2622 = vrcp.pop %v2621
    %v2623 = vmul.f32 1.0, %v2622
    %2624 = vrot.lane.b32.xlu0 %v2573, 96
    %v2625 = vpop.permute.xlu0 %2624
    %v2627 = vmul.f32 %v2612, %v2625
    %2629 = vrot.lane.b32.xlu0 %v2627, 64
    %v2630 = vpop.permute.xlu0 %2629
    %v2632 = vadd.f32 %v2602, %v2630
    %v2633 = vtanh.pop %v2632
    %v2634 = vsub.f32 1.0, %v2623
    %2636 = vrot.lane.b32.xlu0 %v2633, 96
    %v2637 = vpop.permute.xlu0 %2636
    %v2639 = vmul.f32 %v2634, %v2637
    %v2640 = vmul.f32 %v2623, %v2491
    %v2641 = vadd.f32 %v2639, %v2640
    %v2642 = vadd.f32 %v2492, %v2601
    %v2643 = vadd.f32 %v2493, %v2641
    %v2644 = vmax.f32 %v2494, %v2601
    %v2645 = vmax.f32 %v2495, %v2641
    %2647 = vrot.lane.b32.xlu0 %v2601, 96
    %v2648 = vpop.permute.xlu0 %2647
    %v2650 = vsel %vm67, %v2648, %v2641
    %v2652 = vsel %vm255, %v2650, 0
    %2654 = vmatprep.subr.mxu0 %v1579
    %2655 = vmatpush1.msra.mxu0 %v1578
    %2656 = vmatprep.subr.mxu0 %v1581
    %2657 = vmatpush1.msra.mxu0 %v1580
    %2658 = vmatprep.subr.mxu0 %v1583
    %2659 = vmatpush1.msra.mxu0 %v1582
    %2660 = vmatprep.subr.mxu0 %v1585
    %2661 = vmatpush1.msra.mxu0 %v1584
    %2662 = vmatprep.subr.mxu0 %v1587
    %2663 = vmatpush1.msra.mxu0 %v1586
    %2664 = vmatprep.subr.mxu0 %v1589
    %2665 = vmatpush1.msra.mxu0 %v1588
    %2666 = vmatprep.subr.mxu0 %v1591
    %2667 = vmatpush1.msra.mxu0 %v1590
    %2668 = vmatprep.subr.mxu0 %v1593
    %2669 = vmatpush1.msra.mxu0 %v1592
    %2670 = vmatprep.subr.mxu0 0.0
    %2671 = vmatpush1.msra.mxu0 0.0
    %2672 = vmatprep.subr.mxu0 0.0
    %2673 = vmatpush1.msra.mxu0 0.0
    %2674 = vmatprep.subr.mxu0 0.0
    %2675 = vmatpush1.msra.mxu0 0.0
    %2676 = vmatprep.subr.mxu0 0.0
    %2677 = vmatpush1.msra.mxu0 0.0
    %2678 = vmatprep.subr.mxu0 0.0
    %2679 = vmatpush1.msra.mxu0 0.0
    %2680 = vmatprep.subr.mxu0 0.0
    %2681 = vmatpush1.msra.mxu0 0.0
    %2682 = vmatprep.subr.mxu0 0.0
    %2683 = vmatpush1.msra.mxu0 0.0
    %2684 = vmatprep.subr.mxu0 0.0
    %2685 = vmatpush1.msra.mxu0 0.0
    %2686 = vmatprep.subr.mxu0 0.0
    %2687 = vmatpush1.msra.mxu0 0.0
    %2688 = vmatprep.subr.mxu0 0.0
    %2689 = vmatpush1.msra.mxu0 0.0
    %2690 = vmatprep.subr.mxu0 0.0
    %2691 = vmatpush1.msra.mxu0 0.0
    %2692 = vmatprep.subr.mxu0 0.0
    %2693 = vmatpush1.msra.mxu0 0.0
    %2694 = vmatprep.subr.mxu0 0.0
    %2695 = vmatpush1.msra.mxu0 0.0
    %2696 = vmatprep.subr.mxu0 0.0
    %2697 = vmatpush1.msra.mxu0 0.0
    %2698 = vmatprep.subr.mxu0 0.0
    %2699 = vmatpush1.msra.mxu0 0.0
    %2700 = vmatprep.subr.mxu0 0.0
    %2701 = vmatpush1.msra.mxu0 0.0
    %2702 = vmatprep.subr.mxu0 0.0
    %2703 = vmatpush1.msra.mxu0 0.0
    %2704 = vmatprep.subr.mxu0 0.0
    %2705 = vmatpush1.msra.mxu0 0.0
    %2706 = vmatprep.subr.mxu0 0.0
    %2707 = vmatpush1.msra.mxu0 0.0
    %2708 = vmatprep.subr.mxu0 0.0
    %2709 = vmatpush1.msra.mxu0 0.0
    %2710 = vmatprep.subr.mxu0 0.0
    %2711 = vmatpush1.msra.mxu0 0.0
    %2712 = vmatprep.subr.mxu0 0.0
    %2713 = vmatpush1.msra.mxu0 0.0
    %2714 = vmatprep.subr.mxu0 0.0
    %2715 = vmatpush1.msra.mxu0 0.0
    %2716 = vmatprep.subr.mxu0 0.0
    %2717 = vmatpush1.msra.mxu0 0.0
    %2718 = vmatprep.mubr.f32.mxu0 0.0
    %2719 = vmatmul.mubr.f32.gmra.mrb[0].mxu0 %v2652
    %v2720 = vpop.f32.mrb[0].mxu0
    %v2721 = vadd.f32 %v1599, %v2720
    %v2722 = vpop.f32.mrb[0].mxu0
    %v2723 = vadd.f32 %v1603, %v2722
    %2724 = vdwg.mxu0
    %v2725 = vld [vmem:[#allocation6 + $0xe] sm:$0x3]
    %v2726 = vadd.f32 %v2725, %v2721
    %v2727 = vxor.u32 %v2726, 2147483648
    %v2728 = vmul.f32 %v2727, 1.442695
    %v2729 = vpow.pop %v2728
    %v2730 = vadd.f32 %v2729, 1.0
    %v2731 = vrcp.pop %v2730
    %v2732 = vmul.f32 1.0, %v2731
    %2734 = vrot.lane.b32.xlu0 %v2721, 64
    %v2735 = vpop.permute.xlu0 %2734
    %v2737 = vmul.f32 %v2732, %v2735
    %2739 = vrot.lane.b32.xlu0 %v2737, 64
    %v2740 = vpop.permute.xlu0 %2739
    %v2742 = vadd.f32 %v2725, %v2740
    %v2743 = vtanh.pop %v2742
    %v2744 = vsub.f32 1.0, %v2732
    %2746 = vrot.lane.b32.xlu0 %v2743, 96
    %v2747 = vpop.permute.xlu0 %2746
    %v2749 = vmul.f32 %v2744, %v2747
    %v2750 = vmul.f32 %v2732, %v2601
    %v2751 = vadd.f32 %v2749, %v2750
    %v2752 = vld [vmem:[#allocation7] sm:$0x3]
    %2753 = vrot.lane.b32.xlu0 %v2721, 32
    %v2754 = vpop.permute.xlu0 %2753
    %v2756 = vadd.f32 %v2752, %v2754
    %v2757 = vxor.u32 %v2756, 2147483648
    %v2758 = vmul.f32 %v2757, 1.442695
    %v2759 = vpow.pop %v2758
    %v2760 = vadd.f32 %v2759, 1.0
    %v2761 = vrcp.pop %v2760
    %v2762 = vmul.f32 1.0, %v2761
    %2764 = vrot.lane.b32.xlu0 %v2723, 32
    %v2765 = vpop.permute.xlu0 %2764
    %v2767 = vadd.f32 %v2752, %v2765
    %v2768 = vxor.u32 %v2767, 2147483648
    %v2769 = vmul.f32 %v2768, 1.442695
    %v2770 = vpow.pop %v2769
    %v2771 = vadd.f32 %v2770, 1.0
    %v2772 = vrcp.pop %v2771
    %v2773 = vmul.f32 1.0, %v2772
    %2774 = vrot.lane.b32.xlu0 %v2723, 96
    %v2775 = vpop.permute.xlu0 %2774
    %v2777 = vmul.f32 %v2762, %v2775
    %2779 = vrot.lane.b32.xlu0 %v2777, 64
    %v2780 = vpop.permute.xlu0 %2779
    %v2782 = vadd.f32 %v2752, %v2780
    %v2783 = vtanh.pop %v2782
    %v2784 = vsub.f32 1.0, %v2773
    %2786 = vrot.lane.b32.xlu0 %v2783, 96
    %v2787 = vpop.permute.xlu0 %2786
    %v2789 = vmul.f32 %v2784, %v2787
    %v2790 = vmul.f32 %v2773, %v2641
    %v2791 = vadd.f32 %v2789, %v2790
    %v2792 = vadd.f32 %v2642, %v2751
    %v2793 = vadd.f32 %v2643, %v2791
    %v2794 = vmax.f32 %v2644, %v2751
    %v2795 = vmax.f32 %v2645, %v2791
    %v2796 = vmul.f32 %v2792, 0.125
    %v2797 = vmul.f32 %v2793, 0.125
    %2799 = vrot.lane.b32.xlu0 %v2796, 96
    %v2800 = vpop.permute.xlu0 %2799
    %2803 = vrot.lane.b32.xlu0 %v2794, 32
    %v2804 = vpop.permute.xlu0 %2803
    %2807 = vrot.lane.b32.xlu0 %v2795, 64
    %v2808 = vpop.permute.xlu0 %2807
    %v2810 = vsel %vm67, %v2800, %v2797
    %v2811 = vsel %vm255, %v2810, %v2804
    %v2812 = vsel %vm1483, %v2811, %v2808
    %v2813 = vld [vmem:[%s12] sm:$0xff]
    %v2814 = vld [vmem:[%s12 + $0x8] sm:$0xff]
    %v2815 = vld [vmem:[%s12 + $0x10] sm:$0xff]
    %v2816 = vld [vmem:[%s12 + $0x18] sm:$0xff]
    %v2817 = vld [vmem:[%s12 + $0x20] sm:$0xff]
    %v2818 = vld [vmem:[%s12 + $0x28] sm:$0xff]
    %v2819 = vld [vmem:[%s12 + $0x30] sm:$0xff]
    %v2820 = vld [vmem:[%s12 + $0x38] sm:$0xff]
    %v2821 = vld [vmem:[%s12 + $0x40] sm:$0xff]
    %v2822 = vld [vmem:[%s12 + $0x48] sm:$0xff]
    %v2823 = vld [vmem:[%s12 + $0x50] sm:$0xff]
    %v2824 = vld [vmem:[%s12 + $0x58] sm:$0xff]
    %v2825 = vld [vmem:[%s12 + $0x60] sm:$0xff]
    %v2826 = vld [vmem:[%s12 + $0x68] sm:$0xff]
    %v2827 = vld [vmem:[%s12 + $0x70] sm:$0xff]
    %v2828 = vld [vmem:[%s12 + $0x78] sm:$0xff]
    %v2829 = vld [vmem:[%s15] sm:$0x1]
    %v2831 = vlaneseq
    %v2832 = vshrl.u32 %v2831, 7
    %v2833 = vsub.s32 0, %v2832
    %v2834 = vrot.slane %v2829, %v2833
    %2836 = vmatprep.subr.mxu0 0.0
    %2837 = vmatpush1.msra.mxu0 %v2813
    %2838 = vmatprep.subr.mxu0 0.0
    %2839 = vmatpush1.msra.mxu0 %v2814
    %2840 = vmatprep.subr.mxu0 0.0
    %2841 = vmatpush1.msra.mxu0 %v2815
    %2842 = vmatprep.subr.mxu0 0.0
    %2843 = vmatpush1.msra.mxu0 %v2816
    %2844 = vmatprep.subr.mxu0 0.0
    %2845 = vmatpush1.msra.mxu0 %v2817
    %2846 = vmatprep.subr.mxu0 0.0
    %2847 = vmatpush1.msra.mxu0 %v2818
    %2848 = vmatprep.subr.mxu0 0.0
    %2849 = vmatpush1.msra.mxu0 %v2819
    %2850 = vmatprep.subr.mxu0 0.0
    %2851 = vmatpush1.msra.mxu0 %v2820
    %2852 = vmatprep.subr.mxu0 0.0
    %2853 = vmatpush1.msra.mxu0 %v2821
    %2854 = vmatprep.subr.mxu0 0.0
    %2855 = vmatpush1.msra.mxu0 %v2822
    %2856 = vmatprep.subr.mxu0 0.0
    %2857 = vmatpush1.msra.mxu0 %v2823
    %2858 = vmatprep.subr.mxu0 0.0
    %2859 = vmatpush1.msra.mxu0 %v2824
    %2860 = vmatprep.subr.mxu0 0.0
    %2861 = vmatpush1.msra.mxu0 %v2825
    %2862 = vmatprep.subr.mxu0 0.0
    %2863 = vmatpush1.msra.mxu0 %v2826
    %2864 = vmatprep.subr.mxu0 0.0
    %2865 = vmatpush1.msra.mxu0 %v2827
    %2866 = vmatprep.subr.mxu0 0.0
    %2867 = vmatpush1.msra.mxu0 %v2828
    %2868 = vmatprep.subr.mxu0 0.0
    %2869 = vmatpush1.msra.mxu0 0.0
    %2870 = vmatprep.subr.mxu0 0.0
    %2871 = vmatpush1.msra.mxu0 0.0
    %2872 = vmatprep.subr.mxu0 0.0
    %2873 = vmatpush1.msra.mxu0 0.0
    %2874 = vmatprep.subr.mxu0 0.0
    %2875 = vmatpush1.msra.mxu0 0.0
    %2876 = vmatprep.subr.mxu0 0.0
    %2877 = vmatpush1.msra.mxu0 0.0
    %2878 = vmatprep.subr.mxu0 0.0
    %2879 = vmatpush1.msra.mxu0 0.0
    %2880 = vmatprep.subr.mxu0 0.0
    %2881 = vmatpush1.msra.mxu0 0.0
    %2882 = vmatprep.subr.mxu0 0.0
    %2883 = vmatpush1.msra.mxu0 0.0
    %2884 = vmatprep.subr.mxu0 0.0
    %2885 = vmatpush1.msra.mxu0 0.0
    %2886 = vmatprep.subr.mxu0 0.0
    %2887 = vmatpush1.msra.mxu0 0.0
    %2888 = vmatprep.subr.mxu0 0.0
    %2889 = vmatpush1.msra.mxu0 0.0
    %2890 = vmatprep.subr.mxu0 0.0
    %2891 = vmatpush1.msra.mxu0 0.0
    %2892 = vmatprep.subr.mxu0 0.0
    %2893 = vmatpush1.msra.mxu0 0.0
    %2894 = vmatprep.subr.mxu0 0.0
    %2895 = vmatpush1.msra.mxu0 0.0
    %2896 = vmatprep.subr.mxu0 0.0
    %2897 = vmatpush1.msra.mxu0 0.0
    %2898 = vmatprep.subr.mxu0 0.0
    %2899 = vmatpush1.msra.mxu0 0.0
    %2900 = vmatprep.mubr.f32.mxu0 0.0
    %2901 = vmatmul.mubr.f32.gmra.mrb[0].mxu0 %v2812
    %v2902 = vpop.f32.mrb[0].mxu0
    %v2903 = vadd.f32 %v2834, %v2902
    %v2904 = vpop.f32.mrb[0].mxu0
    %2905 = vdwg.mxu0
    %v2907 = vrot.slane %v2791, 6
    %vm2909 = vcmask 1041408
    %v2910 = vsel %vm2909, %v2751, %v2907
    %v2911 = vld [vmem:[%s13] sm:$0xff]
    %v2912 = vld [vmem:[%s13 + $0x8] sm:$0xff]
    %v2913 = vld [vmem:[%s13 + $0x10] sm:$0xff]
    %v2914 = vld [vmem:[%s13 + $0x18] sm:$0xff]
    %2916 = vrot.lane.b32.xlu0 %v2910, 96
    %v2917 = vpop.permute.xlu0 %2916
    %v2918 = vsel %vm67, %v2917, 0
    %2920 = vmatprep.subr.mxu0 0.0
    %2921 = vmatpush1.msra.mxu0 %v2911
    %2922 = vmatprep.subr.mxu0 0.0
    %2923 = vmatpush1.msra.mxu0 %v2912
    %2924 = vmatprep.subr.mxu0 0.0
    %2925 = vmatpush1.msra.mxu0 %v2913
    %2926 = vmatprep.subr.mxu0 0.0
    %2927 = vmatpush1.msra.mxu0 %v2914
    %2928 = vmatprep.subr.mxu0 0.0
    %2929 = vmatpush1.msra.mxu0 0.0
    %2930 = vmatprep.subr.mxu0 0.0
    %2931 = vmatpush1.msra.mxu0 0.0
    %2932 = vmatprep.subr.mxu0 0.0
    %2933 = vmatpush1.msra.mxu0 0.0
    %2934 = vmatprep.subr.mxu0 0.0
    %2935 = vmatpush1.msra.mxu0 0.0
    %2936 = vmatprep.subr.mxu0 0.0
    %2937 = vmatpush1.msra.mxu0 0.0
    %2938 = vmatprep.subr.mxu0 0.0
    %2939 = vmatpush1.msra.mxu0 0.0
    %2940 = vmatprep.subr.mxu0 0.0
    %2941 = vmatpush1.msra.mxu0 0.0
    %2942 = vmatprep.subr.mxu0 0.0
    %2943 = vmatpush1.msra.mxu0 0.0
    %2944 = vmatprep.subr.mxu0 0.0
    %2945 = vmatpush1.msra.mxu0 0.0
    %2946 = vmatprep.subr.mxu0 0.0
    %2947 = vmatpush1.msra.mxu0 0.0
    %2948 = vmatprep.subr.mxu0 0.0
    %2949 = vmatpush1.msra.mxu0 0.0
    %2950 = vmatprep.subr.mxu0 0.0
    %2951 = vmatpush1.msra.mxu0 0.0
    %2952 = vmatprep.subr.mxu0 0.0
    %2953 = vmatpush1.msra.mxu0 0.0
    %2954 = vmatprep.subr.mxu0 0.0
    %2955 = vmatpush1.msra.mxu0 0.0
    %2956 = vmatprep.subr.mxu0 0.0
    %2957 = vmatpush1.msra.mxu0 0.0
    %2958 = vmatprep.subr.mxu0 0.0
    %2959 = vmatpush1.msra.mxu0 0.0
    %2960 = vmatprep.subr.mxu0 0.0
    %2961 = vmatpush1.msra.mxu0 0.0
    %2962 = vmatprep.subr.mxu0 0.0
    %2963 = vmatpush1.msra.mxu0 0.0
    %2964 = vmatprep.subr.mxu0 0.0
    %2965 = vmatpush1.msra.mxu0 0.0
    %2966 = vmatprep.subr.mxu0 0.0
    %2967 = vmatpush1.msra.mxu0 0.0
    %2968 = vmatprep.subr.mxu0 0.0
    %2969 = vmatpush1.msra.mxu0 0.0
    %2970 = vmatprep.subr.mxu0 0.0
    %2971 = vmatpush1.msra.mxu0 0.0
    %2972 = vmatprep.subr.mxu0 0.0
    %2973 = vmatpush1.msra.mxu0 0.0
    %2974 = vmatprep.subr.mxu0 0.0
    %2975 = vmatpush1.msra.mxu0 0.0
    %2976 = vmatprep.subr.mxu0 0.0
    %2977 = vmatpush1.msra.mxu0 0.0
    %2978 = vmatprep.subr.mxu0 0.0
    %2979 = vmatpush1.msra.mxu0 0.0
    %2980 = vmatprep.subr.mxu0 0.0
    %2981 = vmatpush1.msra.mxu0 0.0
    %2982 = vmatprep.subr.mxu0 0.0
    %2983 = vmatpush1.msra.mxu0 0.0
    %2984 = vmatprep.mubr.f32.mxu0 0.0
    %2985 = vmatmul.mubr.f32.gmra.mrb[0].mxu0 %v2918
    %v2986 = vpop.f32.mrb[0].mxu0
    %v2987 = vadd.f32 0.0, %v2986
    %v2988 = vpop.f32.mrb[0].mxu0
    %2989 = vdwg.mxu0
    %v2990 = vld [vmem:[%s14] sm:$0xff]
    %v2991 = vld [vmem:[%s14 + $0x8] sm:$0xff]
    %v2992 = vld [vmem:[%s14 + $0x10] sm:$0xff]
    %v2993 = vld [vmem:[%s14 + $0x18] sm:$0xff]
    %2994 = vmatprep.subr.mxu0 0.0
    %2995 = vmatpush1.msra.mxu0 %v2990
    %2996 = vmatprep.subr.mxu0 0.0
    %2997 = vmatpush1.msra.mxu0 %v2991
    %2998 = vmatprep.subr.mxu0 0.0
    %2999 = vmatpush1.msra.mxu0 %v2992
    %3000 = vmatprep.subr.mxu0 0.0
    %3001 = vmatpush1.msra.mxu0 %v2993
    %3002 = vmatprep.subr.mxu0 0.0
    %3003 = vmatpush1.msra.mxu0 0.0
    %3004 = vmatprep.subr.mxu0 0.0
    %3005 = vmatpush1.msra.mxu0 0.0
    %3006 = vmatprep.subr.mxu0 0.0
    %3007 = vmatpush1.msra.mxu0 0.0
    %3008 = vmatprep.subr.mxu0 0.0
    %3009 = vmatpush1.msra.mxu0 0.0
    %3010 = vmatprep.subr.mxu0 0.0
    %3011 = vmatpush1.msra.mxu0 0.0
    %3012 = vmatprep.subr.mxu0 0.0
    %3013 = vmatpush1.msra.mxu0 0.0
    %3014 = vmatprep.subr.mxu0 0.0
    %3015 = vmatpush1.msra.mxu0 0.0
    %3016 = vmatprep.subr.mxu0 0.0
    %3017 = vmatpush1.msra.mxu0 0.0
    %3018 = vmatprep.subr.mxu0 0.0
    %3019 = vmatpush1.msra.mxu0 0.0
    %3020 = vmatprep.subr.mxu0 0.0
    %3021 = vmatpush1.msra.mxu0 0.0
    %3022 = vmatprep.subr.mxu0 0.0
    %3023 = vmatpush1.msra.mxu0 0.0
    %3024 = vmatprep.subr.mxu0 0.0
    %3025 = vmatpush1.msra.mxu0 0.0
    %3026 = vmatprep.subr.mxu0 0.0
    %3027 = vmatpush1.msra.mxu0 0.0
    %3028 = vmatprep.subr.mxu0 0.0
    %3029 = vmatpush1.msra.mxu0 0.0
    %3030 = vmatprep.subr.mxu0 0.0
    %3031 = vmatpush1.msra.mxu0 0.0
    %3032 = vmatprep.subr.mxu0 0.0
    %3033 = vmatpush1.msra.mxu0 0.0
    %3034 = vmatprep.subr.mxu0 0.0
    %3035 = vmatpush1.msra.mxu0 0.0
    %3036 = vmatprep.subr.mxu0 0.0
    %3037 = vmatpush1.msra.mxu0 0.0
    %3038 = vmatprep.subr.mxu0 0.0
    %3039 = vmatpush1.msra.mxu0 0.0
    %3040 = vmatprep.subr.mxu0 0.0
    %3041 = vmatpush1.msra.mxu0 0.0
    %3042 = vmatprep.subr.mxu0 0.0
    %3043 = vmatpush1.msra.mxu0 0.0
    %3044 = vmatprep.subr.mxu0 0.0
    %3045 = vmatpush1.msra.mxu0 0.0
    %3046 = vmatprep.subr.mxu0 0.0
    %3047 = vmatpush1.msra.mxu0 0.0
    %3048 = vmatprep.subr.mxu0 0.0
    %3049 = vmatpush1.msra.mxu0 0.0
    %3050 = vmatprep.subr.mxu0 0.0
    %3051 = vmatpush1.msra.mxu0 0.0
    %3052 = vmatprep.subr.mxu0 0.0
    %3053 = vmatpush1.msra.mxu0 0.0
    %3054 = vmatprep.subr.mxu0 0.0
    %3055 = vmatpush1.msra.mxu0 0.0
    %3056 = vmatprep.subr.mxu0 0.0
    %3057 = vmatpush1.msra.mxu0 0.0
    %3058 = vmatprep.mubr.f32.mxu0 0.0
    %3059 = vmatmul.mubr.f32.gmra.mrb[0].mxu0 %v2918
    %v3060 = vpop.f32.mrb[0].mxu0
    %v3061 = vadd.f32 0.0, %v3060
    %v3062 = vpop.f32.mrb[0].mxu0
    %3063 = vdwg.mxu0
    %v3064 = vlaneseq
    %v3065 = vshrl.u32 %v3064, 7
    %v3066 = vlaneseq
    %v3067 = vand.u32 %v3066, 127
    %v3068 = vmul.u32 %v3065, 2
    %vm3069 = vcmp.eq.s32.totalorder %v3067, %v3068
    %v3070 = vsel %vm3069, 1.0, 0.0
    %v3071 = vadd.s32 %v3068, 1
    %vm3072 = vcmp.eq.s32.totalorder %v3067, %v3071
    %v3073 = vsel %vm3072, 1.0, 0.0
    %vm3074 = vcmask 31744
    %v3076 = vsel %vm3074, %v3070, 0
    %vm3078 = vcmask 1043456
    %v3080 = vsel %vm3078, %v2987, 0
    %3082 = vmatprep.subr.mxu0 0.0
    %3083 = vmatpush1.msra.mxu0 %v3080
    %3084 = vmatprep.subr.mxu0 0.0
    %3085 = vmatpush1.msra.mxu0 0.0
    %3086 = vmatprep.subr.mxu0 0.0
    %3087 = vmatpush1.msra.mxu0 0.0
    %3088 = vmatprep.subr.mxu0 0.0
    %3089 = vmatpush1.msra.mxu0 0.0
    %3090 = vmatprep.subr.mxu0 0.0
    %3091 = vmatpush1.msra.mxu0 0.0
    %3092 = vmatprep.subr.mxu0 0.0
    %3093 = vmatpush1.msra.mxu0 0.0
    %3094 = vmatprep.subr.mxu0 0.0
    %3095 = vmatpush1.msra.mxu0 0.0
    %3096 = vmatprep.subr.mxu0 0.0
    %3097 = vmatpush1.msra.mxu0 0.0
    %3098 = vmatprep.subr.mxu0 0.0
    %3099 = vmatpush1.msra.mxu0 0.0
    %3100 = vmatprep.subr.mxu0 0.0
    %3101 = vmatpush1.msra.mxu0 0.0
    %3102 = vmatprep.subr.mxu0 0.0
    %3103 = vmatpush1.msra.mxu0 0.0
    %3104 = vmatprep.subr.mxu0 0.0
    %3105 = vmatpush1.msra.mxu0 0.0
    %3106 = vmatprep.subr.mxu0 0.0
    %3107 = vmatpush1.msra.mxu0 0.0
    %3108 = vmatprep.subr.mxu0 0.0
    %3109 = vmatpush1.msra.mxu0 0.0
    %3110 = vmatprep.subr.mxu0 0.0
    %3111 = vmatpush1.msra.mxu0 0.0
    %3112 = vmatprep.subr.mxu0 0.0
    %3113 = vmatpush1.msra.mxu0 0.0
    %3114 = vmatprep.subr.mxu0 0.0
    %3115 = vmatpush1.msra.mxu0 0.0
    %3116 = vmatprep.subr.mxu0 0.0
    %3117 = vmatpush1.msra.mxu0 0.0
    %3118 = vmatprep.subr.mxu0 0.0
    %3119 = vmatpush1.msra.mxu0 0.0
    %3120 = vmatprep.subr.mxu0 0.0
    %3121 = vmatpush1.msra.mxu0 0.0
    %3122 = vmatprep.subr.mxu0 0.0
    %3123 = vmatpush1.msra.mxu0 0.0
    %3124 = vmatprep.subr.mxu0 0.0
    %3125 = vmatpush1.msra.mxu0 0.0
    %3126 = vmatprep.subr.mxu0 0.0
    %3127 = vmatpush1.msra.mxu0 0.0
    %3128 = vmatprep.subr.mxu0 0.0
    %3129 = vmatpush1.msra.mxu0 0.0
    %3130 = vmatprep.subr.mxu0 0.0
    %3131 = vmatpush1.msra.mxu0 0.0
    %3132 = vmatprep.subr.mxu0 0.0
    %3133 = vmatpush1.msra.mxu0 0.0
    %3134 = vmatprep.subr.mxu0 0.0
    %3135 = vmatpush1.msra.mxu0 0.0
    %3136 = vmatprep.subr.mxu0 0.0
    %3137 = vmatpush1.msra.mxu0 0.0
    %3138 = vmatprep.subr.mxu0 0.0
    %3139 = vmatpush1.msra.mxu0 0.0
    %3140 = vmatprep.subr.mxu0 0.0
    %3141 = vmatpush1.msra.mxu0 0.0
    %3142 = vmatprep.subr.mxu0 0.0
    %3143 = vmatpush1.msra.mxu0 0.0
    %3144 = vmatprep.subr.mxu0 0.0
    %3145 = vmatpush1.msra.mxu0 0.0
    %3146 = vmatprep.mubr.f32.mxu0 0.0
    %3147 = vmatmul.mubr.f32.gmra.mrb[0].mxu0 %v3076
    %v3148 = vpop.f32.mrb[0].mxu0
    %v3149 = vadd.f32 0.0, %v3148
    %v3150 = vpop.f32.mrb[0].mxu0
    %3151 = vdwg.mxu0
    %v3152 = vadd.f32 %v2903, %v3149
    %v3154 = vsel %vm3074, %v3073, 0
    %v3157 = vsel %vm3078, %v3061, 0
    %3159 = vmatprep.subr.mxu0 0.0
    %3160 = vmatpush1.msra.mxu0 %v3157
    %3161 = vmatprep.subr.mxu0 0.0
    %3162 = vmatpush1.msra.mxu0 0.0
    %3163 = vmatprep.subr.mxu0 0.0
    %3164 = vmatpush1.msra.mxu0 0.0
    %3165 = vmatprep.subr.mxu0 0.0
    %3166 = vmatpush1.msra.mxu0 0.0
    %3167 = vmatprep.subr.mxu0 0.0
    %3168 = vmatpush1.msra.mxu0 0.0
    %3169 = vmatprep.subr.mxu0 0.0
    %3170 = vmatpush1.msra.mxu0 0.0
    %3171 = vmatprep.subr.mxu0 0.0
    %3172 = vmatpush1.msra.mxu0 0.0
    %3173 = vmatprep.subr.mxu0 0.0
    %3174 = vmatpush1.msra.mxu0 0.0
    %3175 = vmatprep.subr.mxu0 0.0
    %3176 = vmatpush1.msra.mxu0 0.0
    %3177 = vmatprep.subr.mxu0 0.0
    %3178 = vmatpush1.msra.mxu0 0.0
    %3179 = vmatprep.subr.mxu0 0.0
    %3180 = vmatpush1.msra.mxu0 0.0
    %3181 = vmatprep.subr.mxu0 0.0
    %3182 = vmatpush1.msra.mxu0 0.0
    %3183 = vmatprep.subr.mxu0 0.0
    %3184 = vmatpush1.msra.mxu0 0.0
    %3185 = vmatprep.subr.mxu0 0.0
    %3186 = vmatpush1.msra.mxu0 0.0
    %3187 = vmatprep.subr.mxu0 0.0
    %3188 = vmatpush1.msra.mxu0 0.0
    %3189 = vmatprep.subr.mxu0 0.0
    %3190 = vmatpush1.msra.mxu0 0.0
    %3191 = vmatprep.subr.mxu0 0.0
    %3192 = vmatpush1.msra.mxu0 0.0
    %3193 = vmatprep.subr.mxu0 0.0
    %3194 = vmatpush1.msra.mxu0 0.0
    %3195 = vmatprep.subr.mxu0 0.0
    %3196 = vmatpush1.msra.mxu0 0.0
    %3197 = vmatprep.subr.mxu0 0.0
    %3198 = vmatpush1.msra.mxu0 0.0
    %3199 = vmatprep.subr.mxu0 0.0
    %3200 = vmatpush1.msra.mxu0 0.0
    %3201 = vmatprep.subr.mxu0 0.0
    %3202 = vmatpush1.msra.mxu0 0.0
    %3203 = vmatprep.subr.mxu0 0.0
    %3204 = vmatpush1.msra.mxu0 0.0
    %3205 = vmatprep.subr.mxu0 0.0
    %3206 = vmatpush1.msra.mxu0 0.0
    %3207 = vmatprep.subr.mxu0 0.0
    %3208 = vmatpush1.msra.mxu0 0.0
    %3209 = vmatprep.subr.mxu0 0.0
    %3210 = vmatpush1.msra.mxu0 0.0
    %3211 = vmatprep.subr.mxu0 0.0
    %3212 = vmatpush1.msra.mxu0 0.0
    %3213 = vmatprep.subr.mxu0 0.0
    %3214 = vmatpush1.msra.mxu0 0.0
    %3215 = vmatprep.subr.mxu0 0.0
    %3216 = vmatpush1.msra.mxu0 0.0
    %3217 = vmatprep.subr.mxu0 0.0
    %3218 = vmatpush1.msra.mxu0 0.0
    %3219 = vmatprep.subr.mxu0 0.0
    %3220 = vmatpush1.msra.mxu0 0.0
    %3221 = vmatprep.subr.mxu0 0.0
    %3222 = vmatpush1.msra.mxu0 0.0
    %3223 = vmatprep.mubr.f32.mxu0 0.0
    %3224 = vmatmul.mubr.f32.gmra.mrb[0].mxu0 %v3154
    %v3225 = vpop.f32.mrb[0].mxu0
    %v3226 = vadd.f32 0.0, %v3225
    %v3227 = vpop.f32.mrb[0].mxu0
    %3228 = vdwg.mxu0
    %v3229 = vadd.f32 %v3152, %v3226
    %vm3230 = vcmask 50176
    %3231 = vst.msk [vmem:[#allocation8] sm:$0x3] %vm3230, %v3229
    // Predicated region
    $region66: #{lstm_gru_forward.1} parent=1 // pred_check
      _
    $region67: #{lstm_gru_forward.1} parent=1 // pred_check_branch
      %3233 = sbr.rel (0) target = $region69
    $region68: #{lstm_gru_forward.1} parent=1 // pred_region
      %s3235 = ssub.s32 32, 32
      %3236 = vsyncadd [#allocation9], %s3235
      %s3238 = sshll.u32 [#allocation8], 4
      %s3239 = int_to_ptr.vmem [resolvable:$true] %s3238
      %3241 = dma.vmem_to_hbm [thread:$0]  %s3239, 32, %s16, [#allocation9]
    $region69: #{lstm_gru_forward.1} parent=1 // pred_fallthru
      _
    // Predicated region
    $region70: #{lstm_gru_forward.1} parent=1 // pred_check
      _
    $region71: #{lstm_gru_forward.1} parent=1 // pred_check_branch
      %3243 = sbr.rel (0) target = $region73
    $region72: #{lstm_gru_forward.1} parent=1 // pred_region
      %3244 = dma.done [#allocation9], 32
    $region73: #{lstm_gru_forward.1} parent=1 // pred_fallthru
      _
    %3245 = vsyncpa [#allocation9], 1

</llo_original>
